<compile_context>
chip_gen: v6e
topology: v6e:2x2x1
jax: 0.10.0
libtpu: 0.0.40
codegen_flags: <defaults>
</compile_context>

<pallas_src>
import jax
import jax.numpy as jnp
from jax.experimental import pallas as pl
from jax.experimental.pallas import tpu as pltpu

C_IN = 8      # channels of q and of each element of s
C_CAT = 16    # channels after cat([q, s_k], dim=channel)
PAD = 3       # spatial zero ring (covers both 3x3/pad=1 and 7x7/pad=3 convs)
NEG = -1e30   # "masked bias": ReLU(acc + NEG) == 0 at pad-ring columns


def _make_kernel(H, W, K):
    Wp = W + 2 * PAD
    LQ = C_IN * Wp          # lane width of q / s rows
    LX = C_CAT * Wp         # lane width of the concatenated feature rows
    LA = 2 * Wp             # lane width of the (avg | max) map
    WD = C_IN * W           # lane width of the dense outputs (128 for W=16)
    inv_k = 1.0 / K

    def kernel(q_ref, s_ref, w1a_ref, b1a_ref, w1b_ref, b1b_ref, w2_ref,
               fused_ref, am_ref, y1_ref, am2_ref):
        k = pl.program_id(1)

        # ---- conv1(a): 3 row-banded MXU matmuls on cat([q, s_k]) ----
        # (weight split by input channel -> no q/s concat is ever materialized)
        acc = jnp.zeros((H, LX), jnp.float32)
        for dh in range(3):
            r0 = PAD - 1 + dh
            acc += jnp.dot(q_ref[r0:r0 + H, :], w1a_ref[dh, 0:LQ, :],
                           preferred_element_type=jnp.float32)
            acc += jnp.dot(s_ref[r0:r0 + H, :], w1a_ref[dh, LQ:LX, :],
                           preferred_element_type=jnp.float32)
        # BN scale folded into weights; bias holds -1e30 at ring columns so the
        # ReLU restores exact zero-padding for the next conv.
        y1 = jnp.maximum(acc + b1a_ref[...], 0.0)                    # (H, 16*Wp)

        y1_ref[0:1, :] = jnp.zeros((1, LX), jnp.float32)             # row guards
        y1_ref[H + 1:H + 2, :] = jnp.zeros((1, LX), jnp.float32)
        y1_ref[1:H + 1, :] = y1

        # ---- conv1(b): second Conv(16,16,3)+BN+ReLU ----
        acc2 = jnp.zeros((H, LX), jnp.float32)
        for dh in range(3):
            acc2 += jnp.dot(y1_ref[dh:dh + H, :], w1b_ref[dh],
                            preferred_element_type=jnp.float32)
        fm = jnp.maximum(acc2 + b1b_ref[...], 0.0)                   # (H, 16*Wp)

        # ---- channel mean / max over the 16 channel-major lane groups ----
        a = fm[:, 0:Wp]
        m = fm[:, 0:Wp]
        for c in range(1, C_CAT):
            sl = fm[:, c * Wp:(c + 1) * Wp]
            a = a + sl
            m = jnp.maximum(m, sl)
        a = a * (1.0 / C_CAT)

        # ---- spatial attention: 7x7 (2->1) conv as 7 row-banded matmuls ----
        am2_ref[0:PAD, :] = jnp.zeros((PAD, LA), jnp.float32)            # row guards
        am2_ref[PAD + H:2 * PAD + H, :] = jnp.zeros((PAD, LA), jnp.float32)
        am2_ref[PAD:PAD + H, :] = jnp.concatenate([a, m], axis=1)        # (H, 2*Wp)

        att = jnp.zeros((H, Wp), jnp.float32)
        for dh in range(7):
            att += jnp.dot(am2_ref[dh:dh + H, :], w2_ref[dh],
                           preferred_element_type=jnp.float32)
        amv = jax.nn.sigmoid(att)[:, PAD:PAD + W]                    # (H, W) valid cols

        am8 = jnp.concatenate([amv] * C_IN, axis=1)                  # (H, 8*W) lane-dense
        am_ref[...] = am8                                            # repeat(1,8,1,1)

        # ---- fused_s = mean_k (s_k * am_k): accumulate over the k grid axis ----
        s_val = jnp.concatenate(
            [s_ref[PAD:PAD + H, c * Wp + PAD:c * Wp + PAD + W] for c in range(C_IN)],
            axis=1)                                                  # (H, 8*W)

        @pl.when(k == 0)
        def _():
            fused_ref[...] = jnp.zeros_like(fused_ref)

        fused_ref[...] += s_val * am8

        @pl.when(k == K - 1)
        def _():
            fused_ref[...] = fused_ref[...] * inv_k                  # defer 1/K to last k

    return kernel, Wp, LQ, LX, LA, WD


def _band_matrices(w_hwio, Wp):
    """(kh,kw,Ci,Co) conv weight -> per-kh banded matrices (kh, Ci*Wp, Co*Wp).

    M[dh][ci*Wp + (w + dw - kw//2), co*Wp + w] = w_hwio[dh, dw, ci, co]
    so  out_row(h) = sum_dh in_row(h + dh - kh//2) @ M[dh]  reproduces the conv.
    """
    kh, kw, ci, co = w_hwio.shape
    c0 = kw // 2
    shifts = jnp.stack(
        [jnp.eye(Wp, k=c0 - dw, dtype=w_hwio.dtype) for dw in range(kw)], axis=0)
    band = jnp.einsum('dab,hdio->hiaob', shifts, w_hwio)
    return band.reshape(kh, ci * Wp, co * Wp)


def q2s_attention(q, s, w1a, sb1a, w1b, sb1b, w2):
    K, N, _, H, W = s.shape
    Hp = H + 2 * PAD
    kernel, Wp, LQ, LX, LA, WD = _make_kernel(H, W, K)

    # ---- fold BN(eval) scale into conv weights; build banded weights & masked biases ----
    colmask = (jnp.arange(Wp) >= PAD) & (jnp.arange(Wp) < PAD + W)

    def prep(w, sb):
        scale, bias = sb[0], sb[1]
        band = _band_matrices(w * scale[None, None, None, :], Wp)       # (3,16Wp,16Wp)
        blane = jnp.where(colmask[None, :], bias[:, None], NEG).reshape(1, C_CAT * Wp)
        return band, blane

    w1a_b, b1a_l = prep(w1a, sb1a)
    w1b_b, b1b_l = prep(w1b, sb1b)
    w2_b = _band_matrices(w2.reshape(7, 7, 2, 1), Wp).reshape(7, LA, Wp)

    # ---- inputs: zero-pad spatially by 3, rows x (channel-major * width) lanes ----
    q_p = jnp.pad(q, ((0, 0), (0, 0), (PAD, PAD), (PAD, PAD)))
    q_rows = q_p.transpose(0, 2, 1, 3).reshape(N, Hp, LQ)               # (N,Hp,8*Wp)
    s_p = jnp.pad(s, ((0, 0), (0, 0), (0, 0), (PAD, PAD), (PAD, PAD)))
    s_rows = s_p.transpose(0, 1, 3, 2, 4).reshape(K, N, Hp, LQ)         # (K,N,Hp,8*Wp)

    fused_rows, am_rows = pl.pallas_call(
        kernel,
        out_shape=(jax.ShapeDtypeStruct((N, H, WD), jnp.float32),
                   jax.ShapeDtypeStruct((K, N, H, WD), jnp.float32)),
        grid_spec=pltpu.PrefetchScalarGridSpec(
            num_scalar_prefetch=0,
            grid=(N, K),
            in_specs=[
                pl.BlockSpec((None, Hp, LQ), lambda n, k: (n, 0, 0)),        # q (k-invariant)
                pl.BlockSpec((None, None, Hp, LQ), lambda n, k: (k, n, 0, 0)),
                pl.BlockSpec((3, LX, LX), lambda n, k: (0, 0, 0)),           # conv1a bands
                pl.BlockSpec((1, LX), lambda n, k: (0, 0)),
                pl.BlockSpec((3, LX, LX), lambda n, k: (0, 0, 0)),           # conv1b bands
                pl.BlockSpec((1, LX), lambda n, k: (0, 0)),
                pl.BlockSpec((7, LA, Wp), lambda n, k: (0, 0, 0)),           # 7x7 bands
            ],
            out_specs=[
                pl.BlockSpec((None, H, WD), lambda n, k: (n, 0, 0)),         # fused acc
                pl.BlockSpec((None, None, H, WD), lambda n, k: (k, n, 0, 0)),
            ],
            scratch_shapes=[
                pltpu.VMEM((H + 2, LX), jnp.float32),        # y1 with 1-row guards
                pltpu.VMEM((H + 2 * PAD, LA), jnp.float32),  # (avg|max) with 3-row guards
            ],
        ),
        compiler_params=pltpu.CompilerParams(
            dimension_semantics=("parallel", "arbitrary")),
    )(q_rows, s_rows, w1a_b, b1a_l, w1b_b, b1b_l, w2_b)

    # ---- back to NCHW ----
    fused = fused_rows.reshape(N, H, C_IN, W).transpose(0, 2, 1, 3)
    am = am_rows.reshape(K, N, H, C_IN, W).transpose(0, 1, 3, 2, 4)
    return fused, am


# ---------------- deterministic parameter init (synthetic) ----------------
def init_params(key):
    ks = jax.random.split(key, 13)

    def uconv(k, shape, fan_in):
        b = float(fan_in) ** -0.5
        return jax.random.uniform(k, shape, jnp.float32, -b, b)

    w1a = uconv(ks[0], (3, 3, C_CAT, C_CAT), 9 * C_CAT)   # HWIO
    b1a = uconv(ks[1], (C_CAT,), 9 * C_CAT)
    w1b = uconv(ks[2], (3, 3, C_CAT, C_CAT), 9 * C_CAT)
    b1b = uconv(ks[3], (C_CAT,), 9 * C_CAT)
    w2 = uconv(ks[4], (7, 7, 2), 49 * 2)                  # (kh, kw, cin), cout=1

    eps = 1e-5

    def bn(kg, kb, km, kv):
        gamma = 1.0 + 0.1 * jax.random.normal(kg, (C_CAT,), jnp.float32)
        beta = 0.1 * jax.random.normal(kb, (C_CAT,), jnp.float32)
        mean = 0.1 * jax.random.normal(km, (C_CAT,), jnp.float32)
        var = jax.random.uniform(kv, (C_CAT,), jnp.float32, 0.5, 1.5)
        return gamma, beta, mean, var

    def fold(gamma, beta, mean, var, conv_bias):
        scale = gamma * jax.lax.rsqrt(var + eps)
        bias = beta + (conv_bias - mean) * scale
        return jnp.stack([scale, bias], axis=0)            # (2, 16)

    sb1a = fold(*bn(ks[5], ks[6], ks[7], ks[8]), b1a)
    sb1b = fold(*bn(ks[9], ks[10], ks[11], ks[12]), b1b)
    return w1a, sb1a, w1b, sb1b, w2


# ---------------- pure-JAX reference (for a sanity check) ----------------
def _conv2d_nchw(x, w_hwio, pad):
    return jax.lax.conv_general_dilated(
        x, w_hwio, window_strides=(1, 1), padding=[(pad, pad), (pad, pad)],
        dimension_numbers=('NCHW', 'HWIO', 'NCHW'))


def reference(q, s, w1a, sb1a, w1b, sb1b, w2):
    K = s.shape[0]

    def block(x):
        y = _conv2d_nchw(x, w1a, 1)
        y = jnp.maximum(y * sb1a[0][None, :, None, None] + sb1a[1][None, :, None, None], 0.0)
        y = _conv2d_nchw(y, w1b, 1)
        return jnp.maximum(y * sb1b[0][None, :, None, None] + sb1b[1][None, :, None, None], 0.0)

    fms = [block(jnp.concatenate([q, s[i]], axis=1)) for i in range(K)]
    ams = []
    for f in fms:
        avg = jnp.mean(f, axis=1, keepdims=True)
        mx = jnp.max(f, axis=1, keepdims=True)
        att = _conv2d_nchw(jnp.concatenate([avg, mx], axis=1), w2.reshape(7, 7, 2, 1), 3)
        a = jax.nn.sigmoid(att)
        ams.append(jnp.broadcast_to(a, (a.shape[0], C_IN, a.shape[2], a.shape[3])))
    am_stack = jnp.stack(ams, 0)
    fused = (s * am_stack).mean(0)
    return fused, am_stack


if __name__ == "__main__":
    key = jax.random.PRNGKey(0)
    kq, ks_, kp = jax.random.split(key, 3)
    N, H, W, K = 2, 16, 16, 3

    q = jax.random.normal(kq, (N, C_IN, H, W), jnp.float32)
    s = jax.random.normal(ks_, (K, N, C_IN, H, W), jnp.float32)
    w1a, sb1a, w1b, sb1b, w2 = init_params(kp)

    fused, am = jax.jit(q2s_attention)(q, s, w1a, sb1a, w1b, sb1b, w2)
    jax.block_until_ready((fused, am))

    fused_ref, am_ref = reference(q, s, w1a, sb1a, w1b, sb1b, w2)
    err_f = float(jnp.max(jnp.abs(fused - fused_ref)))
    err_a = float(jnp.max(jnp.abs(am - am_ref)))
    assert err_f < 1e-3 and err_a < 1e-3, (err_f, err_a)

    print("KERNEL_OK")
</pallas_src>

<mosaic_0001>
module attributes {stable_mosaic.version = 11 : i64} {
  func.func @kernel(%arg0: i32, %arg1: i32, %arg2: memref<1x22x176xf32, #tpu.memory_space<vmem>>, %arg3: memref<1x1x22x176xf32, #tpu.memory_space<vmem>>, %arg4: memref<3x352x352xf32, #tpu.memory_space<vmem>>, %arg5: memref<1x352xf32, #tpu.memory_space<vmem>>, %arg6: memref<3x352x352xf32, #tpu.memory_space<vmem>>, %arg7: memref<1x352xf32, #tpu.memory_space<vmem>>, %arg8: memref<7x44x22xf32, #tpu.memory_space<vmem>>, %arg9: memref<1x16x128xf32, #tpu.memory_space<vmem>>, %arg10: memref<1x1x16x128xf32, #tpu.memory_space<vmem>>, %arg11: memref<18x352xf32, #tpu.memory_space<vmem>>, %arg12: memref<22x44xf32, #tpu.memory_space<vmem>>) attributes {dimension_semantics = [#tpu.dimension_semantics<parallel>, #tpu.dimension_semantics<arbitrary>], iteration_bounds = array<i64: 2, 3>, scalar_prefetch = 0 : i64, scratch_operands = 2 : i64, tpu.core_type = #tpu.core_type<tc>, window_params = [{transform_indices = @transform_0, window_bounds = array<i64: 1, 22, 176>}, {transform_indices = @transform_1, window_bounds = array<i64: 1, 1, 22, 176>}, {pipeline_mode = #tpu.pipeline_mode<synchronous>, transform_indices = @transform_2, window_bounds = array<i64: 3, 352, 352>}, {pipeline_mode = #tpu.pipeline_mode<synchronous>, transform_indices = @transform_3, window_bounds = array<i64: 1, 352>}, {pipeline_mode = #tpu.pipeline_mode<synchronous>, transform_indices = @transform_4, window_bounds = array<i64: 3, 352, 352>}, {pipeline_mode = #tpu.pipeline_mode<synchronous>, transform_indices = @transform_5, window_bounds = array<i64: 1, 352>}, {pipeline_mode = #tpu.pipeline_mode<synchronous>, transform_indices = @transform_6, window_bounds = array<i64: 7, 44, 22>}, {transform_indices = @transform_7, window_bounds = array<i64: 1, 16, 128>}, {transform_indices = @transform_8, window_bounds = array<i64: 1, 1, 16, 128>}]} {
    %cst = arith.constant 0.000000e+00 : f32
    %0 = vector.broadcast %cst : f32 to vector<16x352xf32>
    %c0 = arith.constant 0 : index
    %c2 = arith.constant 2 : index
    %c0_0 = arith.constant 0 : index
    %1 = vector.load %arg2[%c0, %c2, %c0_0] : memref<1x22x176xf32, #tpu.memory_space<vmem>>, vector<1x16x176xf32>
    %2 = vector.shape_cast %1 : vector<1x16x176xf32> to vector<16x176xf32>
    %c0_1 = arith.constant 0 : index
    %c0_2 = arith.constant 0 : index
    %c0_3 = arith.constant 0 : index
    %3 = vector.load %arg4[%c0_1, %c0_2, %c0_3] : memref<3x352x352xf32, #tpu.memory_space<vmem>>, vector<1x176x352xf32>
    %4 = vector.shape_cast %3 : vector<1x176x352xf32> to vector<176x352xf32>
    %cst_4 = arith.constant dense<0.000000e+00> : vector<16x352xf32>
    %5 = tpu.matmul %2, %4, %cst_4 {dimension_numbers = #tpu.dot_dimension_numbers<[1], [0], [0], [1], [0, 0, 1, 1], [], []>} : vector<16x176xf32>, vector<176x352xf32>, vector<16x352xf32> -> vector<16x352xf32>
    %6 = arith.addf %0, %5 : vector<16x352xf32>
    %c0_5 = arith.constant 0 : index
    %c0_6 = arith.constant 0 : index
    %c2_7 = arith.constant 2 : index
    %c0_8 = arith.constant 0 : index
    %7 = vector.load %arg3[%c0_5, %c0_6, %c2_7, %c0_8] : memref<1x1x22x176xf32, #tpu.memory_space<vmem>>, vector<1x1x16x176xf32>
    %8 = vector.shape_cast %7 : vector<1x1x16x176xf32> to vector<16x176xf32>
    %c0_9 = arith.constant 0 : index
    %c176 = arith.constant 176 : index
    %c0_10 = arith.constant 0 : index
    %9 = vector.load %arg4[%c0_9, %c176, %c0_10] : memref<3x352x352xf32, #tpu.memory_space<vmem>>, vector<1x176x352xf32>
    %10 = vector.shape_cast %9 : vector<1x176x352xf32> to vector<176x352xf32>
    %cst_11 = arith.constant dense<0.000000e+00> : vector<16x352xf32>
    %11 = tpu.matmul %8, %10, %cst_11 {dimension_numbers = #tpu.dot_dimension_numbers<[1], [0], [0], [1], [0, 0, 1, 1], [], []>} : vector<16x176xf32>, vector<176x352xf32>, vector<16x352xf32> -> vector<16x352xf32>
    %12 = arith.addf %6, %11 : vector<16x352xf32>
    %c0_12 = arith.constant 0 : index
    %c3 = arith.constant 3 : index
    %c0_13 = arith.constant 0 : index
    %13 = vector.load %arg2[%c0_12, %c3, %c0_13] : memref<1x22x176xf32, #tpu.memory_space<vmem>>, vector<1x16x176xf32>
    %14 = vector.shape_cast %13 : vector<1x16x176xf32> to vector<16x176xf32>
    %c1 = arith.constant 1 : index
    %c0_14 = arith.constant 0 : index
    %c0_15 = arith.constant 0 : index
    %15 = vector.load %arg4[%c1, %c0_14, %c0_15] : memref<3x352x352xf32, #tpu.memory_space<vmem>>, vector<1x176x352xf32>
    %16 = vector.shape_cast %15 : vector<1x176x352xf32> to vector<176x352xf32>
    %cst_16 = arith.constant dense<0.000000e+00> : vector<16x352xf32>
    %17 = tpu.matmul %14, %16, %cst_16 {dimension_numbers = #tpu.dot_dimension_numbers<[1], [0], [0], [1], [0, 0, 1, 1], [], []>} : vector<16x176xf32>, vector<176x352xf32>, vector<16x352xf32> -> vector<16x352xf32>
    %18 = arith.addf %12, %17 : vector<16x352xf32>
    %c0_17 = arith.constant 0 : index
    %c0_18 = arith.constant 0 : index
    %c3_19 = arith.constant 3 : index
    %c0_20 = arith.constant 0 : index
    %19 = vector.load %arg3[%c0_17, %c0_18, %c3_19, %c0_20] : memref<1x1x22x176xf32, #tpu.memory_space<vmem>>, vector<1x1x16x176xf32>
    %20 = vector.shape_cast %19 : vector<1x1x16x176xf32> to vector<16x176xf32>
    %c1_21 = arith.constant 1 : index
    %c176_22 = arith.constant 176 : index
    %c0_23 = arith.constant 0 : index
    %21 = vector.load %arg4[%c1_21, %c176_22, %c0_23] : memref<3x352x352xf32, #tpu.memory_space<vmem>>, vector<1x176x352xf32>
    %22 = vector.shape_cast %21 : vector<1x176x352xf32> to vector<176x352xf32>
    %cst_24 = arith.constant dense<0.000000e+00> : vector<16x352xf32>
    %23 = tpu.matmul %20, %22, %cst_24 {dimension_numbers = #tpu.dot_dimension_numbers<[1], [0], [0], [1], [0, 0, 1, 1], [], []>} : vector<16x176xf32>, vector<176x352xf32>, vector<16x352xf32> -> vector<16x352xf32>
    %24 = arith.addf %18, %23 : vector<16x352xf32>
    %c0_25 = arith.constant 0 : index
    %c4 = arith.constant 4 : index
    %c0_26 = arith.constant 0 : index
    %25 = vector.load %arg2[%c0_25, %c4, %c0_26] : memref<1x22x176xf32, #tpu.memory_space<vmem>>, vector<1x16x176xf32>
    %26 = vector.shape_cast %25 : vector<1x16x176xf32> to vector<16x176xf32>
    %c2_27 = arith.constant 2 : index
    %c0_28 = arith.constant 0 : index
    %c0_29 = arith.constant 0 : index
    %27 = vector.load %arg4[%c2_27, %c0_28, %c0_29] : memref<3x352x352xf32, #tpu.memory_space<vmem>>, vector<1x176x352xf32>
    %28 = vector.shape_cast %27 : vector<1x176x352xf32> to vector<176x352xf32>
    %cst_30 = arith.constant dense<0.000000e+00> : vector<16x352xf32>
    %29 = tpu.matmul %26, %28, %cst_30 {dimension_numbers = #tpu.dot_dimension_numbers<[1], [0], [0], [1], [0, 0, 1, 1], [], []>} : vector<16x176xf32>, vector<176x352xf32>, vector<16x352xf32> -> vector<16x352xf32>
    %30 = arith.addf %24, %29 : vector<16x352xf32>
    %c0_31 = arith.constant 0 : index
    %c0_32 = arith.constant 0 : index
    %c4_33 = arith.constant 4 : index
    %c0_34 = arith.constant 0 : index
    %31 = vector.load %arg3[%c0_31, %c0_32, %c4_33, %c0_34] : memref<1x1x22x176xf32, #tpu.memory_space<vmem>>, vector<1x1x16x176xf32>
    %32 = vector.shape_cast %31 : vector<1x1x16x176xf32> to vector<16x176xf32>
    %c2_35 = arith.constant 2 : index
    %c176_36 = arith.constant 176 : index
    %c0_37 = arith.constant 0 : index
    %33 = vector.load %arg4[%c2_35, %c176_36, %c0_37] : memref<3x352x352xf32, #tpu.memory_space<vmem>>, vector<1x176x352xf32>
    %34 = vector.shape_cast %33 : vector<1x176x352xf32> to vector<176x352xf32>
    %cst_38 = arith.constant dense<0.000000e+00> : vector<16x352xf32>
    %35 = tpu.matmul %32, %34, %cst_38 {dimension_numbers = #tpu.dot_dimension_numbers<[1], [0], [0], [1], [0, 0, 1, 1], [], []>} : vector<16x176xf32>, vector<176x352xf32>, vector<16x352xf32> -> vector<16x352xf32>
    %36 = arith.addf %30, %35 : vector<16x352xf32>
    %c0_39 = arith.constant 0 : index
    %c0_40 = arith.constant 0 : index
    %37 = vector.load %arg5[%c0_39, %c0_40] : memref<1x352xf32, #tpu.memory_space<vmem>>, vector<1x352xf32>
    %38 = vector.broadcast %37 : vector<1x352xf32> to vector<16x352xf32>
    %39 = arith.addf %36, %38 : vector<16x352xf32>
    %cst_41 = arith.constant 0.000000e+00 : f32
    %40 = vector.broadcast %cst_41 : f32 to vector<16x352xf32>
    %41 = arith.maximumf %39, %40 : vector<16x352xf32>
    %cst_42 = arith.constant 0.000000e+00 : f32
    %42 = vector.broadcast %cst_42 : f32 to vector<1x352xf32>
    %c0_43 = arith.constant 0 : index
    %c0_44 = arith.constant 0 : index
    %43 = vector.load %arg11[%c0_43, %c0_44] : memref<18x352xf32, #tpu.memory_space<vmem>>, vector<1x352xf32>
    tpu.vector_store %arg11[%c0_43, %c0_44], %42 {strides = array<i32>} : memref<18x352xf32, #tpu.memory_space<vmem>>, vector<1x352xf32>,
    %cst_45 = arith.constant 0.000000e+00 : f32
    %44 = vector.broadcast %cst_45 : f32 to vector<1x352xf32>
    %c17 = arith.constant 17 : index
    %c0_46 = arith.constant 0 : index
    %45 = vector.load %arg11[%c17, %c0_46] : memref<18x352xf32, #tpu.memory_space<vmem>>, vector<1x352xf32>
    tpu.vector_store %arg11[%c17, %c0_46], %44 {strides = array<i32>} : memref<18x352xf32, #tpu.memory_space<vmem>>, vector<1x352xf32>,
    %c1_47 = arith.constant 1 : index
    %c0_48 = arith.constant 0 : index
    %46 = vector.load %arg11[%c1_47, %c0_48] : memref<18x352xf32, #tpu.memory_space<vmem>>, vector<16x352xf32>
    tpu.vector_store %arg11[%c1_47, %c0_48], %41 {strides = array<i32>} : memref<18x352xf32, #tpu.memory_space<vmem>>, vector<16x352xf32>,
    %cst_49 = arith.constant 0.000000e+00 : f32
    %47 = vector.broadcast %cst_49 : f32 to vector<16x352xf32>
    %c0_50 = arith.constant 0 : index
    %c0_51 = arith.constant 0 : index
    %48 = vector.load %arg11[%c0_50, %c0_51] : memref<18x352xf32, #tpu.memory_space<vmem>>, vector<16x352xf32>
    %c0_52 = arith.constant 0 : index
    %c0_53 = arith.constant 0 : index
    %c0_54 = arith.constant 0 : index
    %49 = vector.load %arg6[%c0_52, %c0_53, %c0_54] : memref<3x352x352xf32, #tpu.memory_space<vmem>>, vector<1x352x352xf32>
    %50 = vector.shape_cast %49 : vector<1x352x352xf32> to vector<352x352xf32>
    %cst_55 = arith.constant dense<0.000000e+00> : vector<16x352xf32>
    %51 = tpu.matmul %48, %50, %cst_55 {dimension_numbers = #tpu.dot_dimension_numbers<[1], [0], [0], [1], [0, 0, 1, 1], [], []>} : vector<16x352xf32>, vector<352x352xf32>, vector<16x352xf32> -> vector<16x352xf32>
    %52 = arith.addf %47, %51 : vector<16x352xf32>
    %c1_56 = arith.constant 1 : index
    %c0_57 = arith.constant 0 : index
    %53 = vector.load %arg11[%c1_56, %c0_57] : memref<18x352xf32, #tpu.memory_space<vmem>>, vector<16x352xf32>
    %c1_58 = arith.constant 1 : index
    %c0_59 = arith.constant 0 : index
    %c0_60 = arith.constant 0 : index
    %54 = vector.load %arg6[%c1_58, %c0_59, %c0_60] : memref<3x352x352xf32, #tpu.memory_space<vmem>>, vector<1x352x352xf32>
    %55 = vector.shape_cast %54 : vector<1x352x352xf32> to vector<352x352xf32>
    %cst_61 = arith.constant dense<0.000000e+00> : vector<16x352xf32>
    %56 = tpu.matmul %53, %55, %cst_61 {dimension_numbers = #tpu.dot_dimension_numbers<[1], [0], [0], [1], [0, 0, 1, 1], [], []>} : vector<16x352xf32>, vector<352x352xf32>, vector<16x352xf32> -> vector<16x352xf32>
    %57 = arith.addf %52, %56 : vector<16x352xf32>
    %c2_62 = arith.constant 2 : index
    %c0_63 = arith.constant 0 : index
    %58 = vector.load %arg11[%c2_62, %c0_63] : memref<18x352xf32, #tpu.memory_space<vmem>>, vector<16x352xf32>
    %c2_64 = arith.constant 2 : index
    %c0_65 = arith.constant 0 : index
    %c0_66 = arith.constant 0 : index
    %59 = vector.load %arg6[%c2_64, %c0_65, %c0_66] : memref<3x352x352xf32, #tpu.memory_space<vmem>>, vector<1x352x352xf32>
    %60 = vector.shape_cast %59 : vector<1x352x352xf32> to vector<352x352xf32>
    %cst_67 = arith.constant dense<0.000000e+00> : vector<16x352xf32>
    %61 = tpu.matmul %58, %60, %cst_67 {dimension_numbers = #tpu.dot_dimension_numbers<[1], [0], [0], [1], [0, 0, 1, 1], [], []>} : vector<16x352xf32>, vector<352x352xf32>, vector<16x352xf32> -> vector<16x352xf32>
    %62 = arith.addf %57, %61 : vector<16x352xf32>
    %c0_68 = arith.constant 0 : index
    %c0_69 = arith.constant 0 : index
    %63 = vector.load %arg7[%c0_68, %c0_69] : memref<1x352xf32, #tpu.memory_space<vmem>>, vector<1x352xf32>
    %64 = vector.broadcast %63 : vector<1x352xf32> to vector<16x352xf32>
    %65 = arith.addf %62, %64 : vector<16x352xf32>
    %cst_70 = arith.constant 0.000000e+00 : f32
    %66 = vector.broadcast %cst_70 : f32 to vector<16x352xf32>
    %67 = arith.maximumf %65, %66 : vector<16x352xf32>
    %68 = vector.extract_strided_slice %67 {offsets = [0, 0], sizes = [16, 22], strides = [1, 1]} : vector<16x352xf32> to vector<16x22xf32>
    %69 = vector.extract_strided_slice %67 {offsets = [0, 0], sizes = [16, 22], strides = [1, 1]} : vector<16x352xf32> to vector<16x22xf32>
    %70 = vector.extract_strided_slice %67 {offsets = [0, 22], sizes = [16, 22], strides = [1, 1]} : vector<16x352xf32> to vector<16x22xf32>
    %71 = arith.addf %68, %70 : vector<16x22xf32>
    %72 = arith.maximumf %69, %70 : vector<16x22xf32>
    %73 = vector.extract_strided_slice %67 {offsets = [0, 44], sizes = [16, 22], strides = [1, 1]} : vector<16x352xf32> to vector<16x22xf32>
    %74 = arith.addf %71, %73 : vector<16x22xf32>
    %75 = arith.maximumf %72, %73 : vector<16x22xf32>
    %76 = vector.extract_strided_slice %67 {offsets = [0, 66], sizes = [16, 22], strides = [1, 1]} : vector<16x352xf32> to vector<16x22xf32>
    %77 = arith.addf %74, %76 : vector<16x22xf32>
    %78 = arith.maximumf %75, %76 : vector<16x22xf32>
    %79 = vector.extract_strided_slice %67 {offsets = [0, 88], sizes = [16, 22], strides = [1, 1]} : vector<16x352xf32> to vector<16x22xf32>
    %80 = arith.addf %77, %79 : vector<16x22xf32>
    %81 = arith.maximumf %78, %79 : vector<16x22xf32>
    %82 = vector.extract_strided_slice %67 {offsets = [0, 110], sizes = [16, 22], strides = [1, 1]} : vector<16x352xf32> to vector<16x22xf32>
    %83 = arith.addf %80, %82 : vector<16x22xf32>
    %84 = arith.maximumf %81, %82 : vector<16x22xf32>
    %85 = vector.extract_strided_slice %67 {offsets = [0, 132], sizes = [16, 22], strides = [1, 1]} : vector<16x352xf32> to vector<16x22xf32>
    %86 = arith.addf %83, %85 : vector<16x22xf32>
    %87 = arith.maximumf %84, %85 : vector<16x22xf32>
    %88 = vector.extract_strided_slice %67 {offsets = [0, 154], sizes = [16, 22], strides = [1, 1]} : vector<16x352xf32> to vector<16x22xf32>
    %89 = arith.addf %86, %88 : vector<16x22xf32>
    %90 = arith.maximumf %87, %88 : vector<16x22xf32>
    %91 = vector.extract_strided_slice %67 {offsets = [0, 176], sizes = [16, 22], strides = [1, 1]} : vector<16x352xf32> to vector<16x22xf32>
    %92 = arith.addf %89, %91 : vector<16x22xf32>
    %93 = arith.maximumf %90, %91 : vector<16x22xf32>
    %94 = vector.extract_strided_slice %67 {offsets = [0, 198], sizes = [16, 22], strides = [1, 1]} : vector<16x352xf32> to vector<16x22xf32>
    %95 = arith.addf %92, %94 : vector<16x22xf32>
    %96 = arith.maximumf %93, %94 : vector<16x22xf32>
    %97 = vector.extract_strided_slice %67 {offsets = [0, 220], sizes = [16, 22], strides = [1, 1]} : vector<16x352xf32> to vector<16x22xf32>
    %98 = arith.addf %95, %97 : vector<16x22xf32>
    %99 = arith.maximumf %96, %97 : vector<16x22xf32>
    %100 = vector.extract_strided_slice %67 {offsets = [0, 242], sizes = [16, 22], strides = [1, 1]} : vector<16x352xf32> to vector<16x22xf32>
    %101 = arith.addf %98, %100 : vector<16x22xf32>
    %102 = arith.maximumf %99, %100 : vector<16x22xf32>
    %103 = vector.extract_strided_slice %67 {offsets = [0, 264], sizes = [16, 22], strides = [1, 1]} : vector<16x352xf32> to vector<16x22xf32>
    %104 = arith.addf %101, %103 : vector<16x22xf32>
    %105 = arith.maximumf %102, %103 : vector<16x22xf32>
    %106 = vector.extract_strided_slice %67 {offsets = [0, 286], sizes = [16, 22], strides = [1, 1]} : vector<16x352xf32> to vector<16x22xf32>
    %107 = arith.addf %104, %106 : vector<16x22xf32>
    %108 = arith.maximumf %105, %106 : vector<16x22xf32>
    %109 = vector.extract_strided_slice %67 {offsets = [0, 308], sizes = [16, 22], strides = [1, 1]} : vector<16x352xf32> to vector<16x22xf32>
    %110 = arith.addf %107, %109 : vector<16x22xf32>
    %111 = arith.maximumf %108, %109 : vector<16x22xf32>
    %112 = vector.extract_strided_slice %67 {offsets = [0, 330], sizes = [16, 22], strides = [1, 1]} : vector<16x352xf32> to vector<16x22xf32>
    %113 = arith.addf %110, %112 : vector<16x22xf32>
    %114 = arith.maximumf %111, %112 : vector<16x22xf32>
    %cst_71 = arith.constant 6.250000e-02 : f32
    %115 = vector.broadcast %cst_71 : f32 to vector<16x22xf32>
    %116 = arith.mulf %113, %115 : vector<16x22xf32>
    %cst_72 = arith.constant 0.000000e+00 : f32
    %117 = vector.broadcast %cst_72 : f32 to vector<3x44xf32>
    %c0_73 = arith.constant 0 : index
    %c0_74 = arith.constant 0 : index
    %118 = vector.load %arg12[%c0_73, %c0_74] : memref<22x44xf32, #tpu.memory_space<vmem>>, vector<3x44xf32>
    tpu.vector_store %arg12[%c0_73, %c0_74], %117 {strides = array<i32>} : memref<22x44xf32, #tpu.memory_space<vmem>>, vector<3x44xf32>,
    %cst_75 = arith.constant 0.000000e+00 : f32
    %119 = vector.broadcast %cst_75 : f32 to vector<3x44xf32>
    %c19 = arith.constant 19 : index
    %c0_76 = arith.constant 0 : index
    %120 = vector.load %arg12[%c19, %c0_76] : memref<22x44xf32, #tpu.memory_space<vmem>>, vector<3x44xf32>
    tpu.vector_store %arg12[%c19, %c0_76], %119 {strides = array<i32>} : memref<22x44xf32, #tpu.memory_space<vmem>>, vector<3x44xf32>,
    %121 = tpu.concatenate %116, %114 in 1 : vector<16x22xf32>, vector<16x22xf32> -> vector<16x44xf32>
    %c3_77 = arith.constant 3 : index
    %c0_78 = arith.constant 0 : index
    %122 = vector.load %arg12[%c3_77, %c0_78] : memref<22x44xf32, #tpu.memory_space<vmem>>, vector<16x44xf32>
    tpu.vector_store %arg12[%c3_77, %c0_78], %121 {strides = array<i32>} : memref<22x44xf32, #tpu.memory_space<vmem>>, vector<16x44xf32>,
    %cst_79 = arith.constant 0.000000e+00 : f32
    %123 = vector.broadcast %cst_79 : f32 to vector<16x22xf32>
    %c0_80 = arith.constant 0 : index
    %c0_81 = arith.constant 0 : index
    %124 = vector.load %arg12[%c0_80, %c0_81] : memref<22x44xf32, #tpu.memory_space<vmem>>, vector<16x44xf32>
    %c0_82 = arith.constant 0 : index
    %c0_83 = arith.constant 0 : index
    %c0_84 = arith.constant 0 : index
    %125 = vector.load %arg8[%c0_82, %c0_83, %c0_84] : memref<7x44x22xf32, #tpu.memory_space<vmem>>, vector<1x44x22xf32>
    %126 = vector.shape_cast %125 : vector<1x44x22xf32> to vector<44x22xf32>
    %cst_85 = arith.constant dense<0.000000e+00> : vector<16x22xf32>
    %127 = tpu.matmul %124, %126, %cst_85 {dimension_numbers = #tpu.dot_dimension_numbers<[1], [0], [0], [1], [0, 0, 1, 1], [], []>} : vector<16x44xf32>, vector<44x22xf32>, vector<16x22xf32> -> vector<16x22xf32>
    %128 = arith.addf %123, %127 : vector<16x22xf32>
    %c1_86 = arith.constant 1 : index
    %c0_87 = arith.constant 0 : index
    %129 = vector.load %arg12[%c1_86, %c0_87] : memref<22x44xf32, #tpu.memory_space<vmem>>, vector<16x44xf32>
    %c1_88 = arith.constant 1 : index
    %c0_89 = arith.constant 0 : index
    %c0_90 = arith.constant 0 : index
    %130 = vector.load %arg8[%c1_88, %c0_89, %c0_90] : memref<7x44x22xf32, #tpu.memory_space<vmem>>, vector<1x44x22xf32>
    %131 = vector.shape_cast %130 : vector<1x44x22xf32> to vector<44x22xf32>
    %cst_91 = arith.constant dense<0.000000e+00> : vector<16x22xf32>
    %132 = tpu.matmul %129, %131, %cst_91 {dimension_numbers = #tpu.dot_dimension_numbers<[1], [0], [0], [1], [0, 0, 1, 1], [], []>} : vector<16x44xf32>, vector<44x22xf32>, vector<16x22xf32> -> vector<16x22xf32>
    %133 = arith.addf %128, %132 : vector<16x22xf32>
    %c2_92 = arith.constant 2 : index
    %c0_93 = arith.constant 0 : index
    %134 = vector.load %arg12[%c2_92, %c0_93] : memref<22x44xf32, #tpu.memory_space<vmem>>, vector<16x44xf32>
    %c2_94 = arith.constant 2 : index
    %c0_95 = arith.constant 0 : index
    %c0_96 = arith.constant 0 : index
    %135 = vector.load %arg8[%c2_94, %c0_95, %c0_96] : memref<7x44x22xf32, #tpu.memory_space<vmem>>, vector<1x44x22xf32>
    %136 = vector.shape_cast %135 : vector<1x44x22xf32> to vector<44x22xf32>
    %cst_97 = arith.constant dense<0.000000e+00> : vector<16x22xf32>
    %137 = tpu.matmul %134, %136, %cst_97 {dimension_numbers = #tpu.dot_dimension_numbers<[1], [0], [0], [1], [0, 0, 1, 1], [], []>} : vector<16x44xf32>, vector<44x22xf32>, vector<16x22xf32> -> vector<16x22xf32>
    %138 = arith.addf %133, %137 : vector<16x22xf32>
    %c3_98 = arith.constant 3 : index
    %c0_99 = arith.constant 0 : index
    %139 = vector.load %arg12[%c3_98, %c0_99] : memref<22x44xf32, #tpu.memory_space<vmem>>, vector<16x44xf32>
    %c3_100 = arith.constant 3 : index
    %c0_101 = arith.constant 0 : index
    %c0_102 = arith.constant 0 : index
    %140 = vector.load %arg8[%c3_100, %c0_101, %c0_102] : memref<7x44x22xf32, #tpu.memory_space<vmem>>, vector<1x44x22xf32>
    %141 = vector.shape_cast %140 : vector<1x44x22xf32> to vector<44x22xf32>
    %cst_103 = arith.constant dense<0.000000e+00> : vector<16x22xf32>
    %142 = tpu.matmul %139, %141, %cst_103 {dimension_numbers = #tpu.dot_dimension_numbers<[1], [0], [0], [1], [0, 0, 1, 1], [], []>} : vector<16x44xf32>, vector<44x22xf32>, vector<16x22xf32> -> vector<16x22xf32>
    %143 = arith.addf %138, %142 : vector<16x22xf32>
    %c4_104 = arith.constant 4 : index
    %c0_105 = arith.constant 0 : index
    %144 = vector.load %arg12[%c4_104, %c0_105] : memref<22x44xf32, #tpu.memory_space<vmem>>, vector<16x44xf32>
    %c4_106 = arith.constant 4 : index
    %c0_107 = arith.constant 0 : index
    %c0_108 = arith.constant 0 : index
    %145 = vector.load %arg8[%c4_106, %c0_107, %c0_108] : memref<7x44x22xf32, #tpu.memory_space<vmem>>, vector<1x44x22xf32>
    %146 = vector.shape_cast %145 : vector<1x44x22xf32> to vector<44x22xf32>
    %cst_109 = arith.constant dense<0.000000e+00> : vector<16x22xf32>
    %147 = tpu.matmul %144, %146, %cst_109 {dimension_numbers = #tpu.dot_dimension_numbers<[1], [0], [0], [1], [0, 0, 1, 1], [], []>} : vector<16x44xf32>, vector<44x22xf32>, vector<16x22xf32> -> vector<16x22xf32>
    %148 = arith.addf %143, %147 : vector<16x22xf32>
    %c5 = arith.constant 5 : index
    %c0_110 = arith.constant 0 : index
    %149 = vector.load %arg12[%c5, %c0_110] : memref<22x44xf32, #tpu.memory_space<vmem>>, vector<16x44xf32>
    %c5_111 = arith.constant 5 : index
    %c0_112 = arith.constant 0 : index
    %c0_113 = arith.constant 0 : index
    %150 = vector.load %arg8[%c5_111, %c0_112, %c0_113] : memref<7x44x22xf32, #tpu.memory_space<vmem>>, vector<1x44x22xf32>
    %151 = vector.shape_cast %150 : vector<1x44x22xf32> to vector<44x22xf32>
    %cst_114 = arith.constant dense<0.000000e+00> : vector<16x22xf32>
    %152 = tpu.matmul %149, %151, %cst_114 {dimension_numbers = #tpu.dot_dimension_numbers<[1], [0], [0], [1], [0, 0, 1, 1], [], []>} : vector<16x44xf32>, vector<44x22xf32>, vector<16x22xf32> -> vector<16x22xf32>
    %153 = arith.addf %148, %152 : vector<16x22xf32>
    %c6 = arith.constant 6 : index
    %c0_115 = arith.constant 0 : index
    %154 = vector.load %arg12[%c6, %c0_115] : memref<22x44xf32, #tpu.memory_space<vmem>>, vector<16x44xf32>
    %c6_116 = arith.constant 6 : index
    %c0_117 = arith.constant 0 : index
    %c0_118 = arith.constant 0 : index
    %155 = vector.load %arg8[%c6_116, %c0_117, %c0_118] : memref<7x44x22xf32, #tpu.memory_space<vmem>>, vector<1x44x22xf32>
    %156 = vector.shape_cast %155 : vector<1x44x22xf32> to vector<44x22xf32>
    %cst_119 = arith.constant dense<0.000000e+00> : vector<16x22xf32>
    %157 = tpu.matmul %154, %156, %cst_119 {dimension_numbers = #tpu.dot_dimension_numbers<[1], [0], [0], [1], [0, 0, 1, 1], [], []>} : vector<16x44xf32>, vector<44x22xf32>, vector<16x22xf32> -> vector<16x22xf32>
    %158 = arith.addf %153, %157 : vector<16x22xf32>
    %159 = arith.negf %158 : vector<16x22xf32>
    %160 = math.exp %159 : vector<16x22xf32>
    %cst_120 = arith.constant 1.000000e+00 : f32
    %161 = vector.broadcast %cst_120 : f32 to vector<16x22xf32>
    %162 = arith.addf %161, %160 : vector<16x22xf32>
    %163 = arith.divf %161, %162 : vector<16x22xf32>
    %164 = vector.extract_strided_slice %163 {offsets = [0, 3], sizes = [16, 16], strides = [1, 1]} : vector<16x22xf32> to vector<16x16xf32>
    %165 = tpu.concatenate %164, %164, %164, %164, %164, %164, %164, %164 in 1 : vector<16x16xf32>, vector<16x16xf32>, vector<16x16xf32>, vector<16x16xf32>, vector<16x16xf32>, vector<16x16xf32>, vector<16x16xf32>, vector<16x16xf32> -> vector<16x128xf32>
    %c0_121 = arith.constant 0 : index
    %c0_122 = arith.constant 0 : index
    %c0_123 = arith.constant 0 : index
    %c0_124 = arith.constant 0 : index
    %166 = vector.load %arg10[%c0_121, %c0_122, %c0_123, %c0_124] : memref<1x1x16x128xf32, #tpu.memory_space<vmem>>, vector<1x1x16x128xf32>
    %167 = vector.shape_cast %166 : vector<1x1x16x128xf32> to vector<16x128xf32>
    %168 = vector.shape_cast %165 : vector<16x128xf32> to vector<1x1x16x128xf32>
    tpu.vector_store %arg10[%c0_121, %c0_122, %c0_123, %c0_124], %168 {strides = array<i32>} : memref<1x1x16x128xf32, #tpu.memory_space<vmem>>, vector<1x1x16x128xf32>,
    %c0_125 = arith.constant 0 : index
    %c0_126 = arith.constant 0 : index
    %c3_127 = arith.constant 3 : index
    %c3_128 = arith.constant 3 : index
    %169 = vector.load %arg3[%c0_125, %c0_126, %c3_127, %c3_128] : memref<1x1x22x176xf32, #tpu.memory_space<vmem>>, vector<1x1x16x16xf32>
    %170 = vector.shape_cast %169 : vector<1x1x16x16xf32> to vector<16x16xf32>
    %c0_129 = arith.constant 0 : index
    %c0_130 = arith.constant 0 : index
    %c3_131 = arith.constant 3 : index
    %c25 = arith.constant 25 : index
    %171 = vector.load %arg3[%c0_129, %c0_130, %c3_131, %c25] : memref<1x1x22x176xf32, #tpu.memory_space<vmem>>, vector<1x1x16x16xf32>
    %172 = vector.shape_cast %171 : vector<1x1x16x16xf32> to vector<16x16xf32>
    %c0_132 = arith.constant 0 : index
    %c0_133 = arith.constant 0 : index
    %c3_134 = arith.constant 3 : index
    %c47 = arith.constant 47 : index
    %173 = vector.load %arg3[%c0_132, %c0_133, %c3_134, %c47] : memref<1x1x22x176xf32, #tpu.memory_space<vmem>>, vector<1x1x16x16xf32>
    %174 = vector.shape_cast %173 : vector<1x1x16x16xf32> to vector<16x16xf32>
    %c0_135 = arith.constant 0 : index
    %c0_136 = arith.constant 0 : index
    %c3_137 = arith.constant 3 : index
    %c69 = arith.constant 69 : index
    %175 = vector.load %arg3[%c0_135, %c0_136, %c3_137, %c69] : memref<1x1x22x176xf32, #tpu.memory_space<vmem>>, vector<1x1x16x16xf32>
    %176 = vector.shape_cast %175 : vector<1x1x16x16xf32> to vector<16x16xf32>
    %c0_138 = arith.constant 0 : index
    %c0_139 = arith.constant 0 : index
    %c3_140 = arith.constant 3 : index
    %c91 = arith.constant 91 : index
    %177 = vector.load %arg3[%c0_138, %c0_139, %c3_140, %c91] : memref<1x1x22x176xf32, #tpu.memory_space<vmem>>, vector<1x1x16x16xf32>
    %178 = vector.shape_cast %177 : vector<1x1x16x16xf32> to vector<16x16xf32>
    %c0_141 = arith.constant 0 : index
    %c0_142 = arith.constant 0 : index
    %c3_143 = arith.constant 3 : index
    %c113 = arith.constant 113 : index
    %179 = vector.load %arg3[%c0_141, %c0_142, %c3_143, %c113] : memref<1x1x22x176xf32, #tpu.memory_space<vmem>>, vector<1x1x16x16xf32>
    %180 = vector.shape_cast %179 : vector<1x1x16x16xf32> to vector<16x16xf32>
    %c0_144 = arith.constant 0 : index
    %c0_145 = arith.constant 0 : index
    %c3_146 = arith.constant 3 : index
    %c135 = arith.constant 135 : index
    %181 = vector.load %arg3[%c0_144, %c0_145, %c3_146, %c135] : memref<1x1x22x176xf32, #tpu.memory_space<vmem>>, vector<1x1x16x16xf32>
    %182 = vector.shape_cast %181 : vector<1x1x16x16xf32> to vector<16x16xf32>
    %c0_147 = arith.constant 0 : index
    %c0_148 = arith.constant 0 : index
    %c3_149 = arith.constant 3 : index
    %c157 = arith.constant 157 : index
    %183 = vector.load %arg3[%c0_147, %c0_148, %c3_149, %c157] : memref<1x1x22x176xf32, #tpu.memory_space<vmem>>, vector<1x1x16x16xf32>
    %184 = vector.shape_cast %183 : vector<1x1x16x16xf32> to vector<16x16xf32>
    %185 = tpu.concatenate %170, %172, %174, %176, %178, %180, %182, %184 in 1 : vector<16x16xf32>, vector<16x16xf32>, vector<16x16xf32>, vector<16x16xf32>, vector<16x16xf32>, vector<16x16xf32>, vector<16x16xf32>, vector<16x16xf32> -> vector<16x128xf32>
    %c0_i32 = arith.constant 0 : i32
    %186 = arith.cmpi eq, %arg1, %c0_i32 : i32
    %187 = arith.extui %186 : i1 to i32
    %c0_i32_150 = arith.constant 0 : i32
    %188 = arith.cmpi ne, %187, %c0_i32_150 : i32
    scf.if %188 {
      %cst_158 = arith.constant 0.000000e+00 : f32
      %199 = vector.broadcast %cst_158 : f32 to vector<16x128xf32>
      %c0_159 = arith.constant 0 : index
      %c0_160 = arith.constant 0 : index
      %c0_161 = arith.constant 0 : index
      %200 = vector.load %arg9[%c0_159, %c0_160, %c0_161] : memref<1x16x128xf32, #tpu.memory_space<vmem>>, vector<1x16x128xf32>
      %201 = vector.shape_cast %200 : vector<1x16x128xf32> to vector<16x128xf32>
      %202 = vector.shape_cast %199 : vector<16x128xf32> to vector<1x16x128xf32>
      tpu.vector_store %arg9[%c0_159, %c0_160, %c0_161], %202 {strides = array<i32>} : memref<1x16x128xf32, #tpu.memory_space<vmem>>, vector<1x16x128xf32>,
    } else {
    }
    %c0_151 = arith.constant 0 : index
    %c0_152 = arith.constant 0 : index
    %c0_153 = arith.constant 0 : index
    %189 = vector.load %arg9[%c0_151, %c0_152, %c0_153] : memref<1x16x128xf32, #tpu.memory_space<vmem>>, vector<1x16x128xf32>
    %190 = vector.shape_cast %189 : vector<1x16x128xf32> to vector<16x128xf32>
    %191 = arith.mulf %185, %165 : vector<16x128xf32>
    %192 = arith.addf %190, %191 : vector<16x128xf32>
    %c0_154 = arith.constant 0 : index
    %c0_155 = arith.constant 0 : index
    %c0_156 = arith.constant 0 : index
    %193 = vector.load %arg9[%c0_154, %c0_155, %c0_156] : memref<1x16x128xf32, #tpu.memory_space<vmem>>, vector<1x16x128xf32>
    %194 = vector.shape_cast %193 : vector<1x16x128xf32> to vector<16x128xf32>
    %195 = vector.shape_cast %192 : vector<16x128xf32> to vector<1x16x128xf32>
    tpu.vector_store %arg9[%c0_154, %c0_155, %c0_156], %195 {strides = array<i32>} : memref<1x16x128xf32, #tpu.memory_space<vmem>>, vector<1x16x128xf32>,
    %c2_i32 = arith.constant 2 : i32
    %196 = arith.cmpi eq, %arg1, %c2_i32 : i32
    %197 = arith.extui %196 : i1 to i32
    %c0_i32_157 = arith.constant 0 : i32
    %198 = arith.cmpi ne, %197, %c0_i32_157 : i32
    scf.if %198 {
      %c0_158 = arith.constant 0 : index
      %c0_159 = arith.constant 0 : index
      %c0_160 = arith.constant 0 : index
      %199 = vector.load %arg9[%c0_158, %c0_159, %c0_160] : memref<1x16x128xf32, #tpu.memory_space<vmem>>, vector<1x16x128xf32>
      %200 = vector.shape_cast %199 : vector<1x16x128xf32> to vector<16x128xf32>
      %cst_161 = arith.constant 0.333333343 : f32
      %201 = vector.broadcast %cst_161 : f32 to vector<16x128xf32>
      %202 = arith.mulf %200, %201 : vector<16x128xf32>
      %c0_162 = arith.constant 0 : index
      %c0_163 = arith.constant 0 : index
      %c0_164 = arith.constant 0 : index
      %203 = vector.load %arg9[%c0_162, %c0_163, %c0_164] : memref<1x16x128xf32, #tpu.memory_space<vmem>>, vector<1x16x128xf32>
      %204 = vector.shape_cast %203 : vector<1x16x128xf32> to vector<16x128xf32>
      %205 = vector.shape_cast %202 : vector<16x128xf32> to vector<1x16x128xf32>
      tpu.vector_store %arg9[%c0_162, %c0_163, %c0_164], %205 {strides = array<i32>} : memref<1x16x128xf32, #tpu.memory_space<vmem>>, vector<1x16x128xf32>,
    } else {
    }
    return
  }
  func.func @transform_0(%arg0: i32, %arg1: i32) -> (i32, i32, i32) {
    %c0_i32 = arith.constant 0 : i32
    %c0_i32_0 = arith.constant 0 : i32
    %c0_i32_1 = arith.constant 0 : i32
    return %arg0, %c0_i32, %c0_i32_0 : i32, i32, i32
  }
  func.func @transform_1(%arg0: i32, %arg1: i32) -> (i32, i32, i32, i32) {
    %c0_i32 = arith.constant 0 : i32
    %c0_i32_0 = arith.constant 0 : i32
    %c0_i32_1 = arith.constant 0 : i32
    return %arg1, %arg0, %c0_i32, %c0_i32_0 : i32, i32, i32, i32
  }
  func.func @transform_2(%arg0: i32, %arg1: i32) -> (i32, i32, i32) {
    %c0_i32 = arith.constant 0 : i32
    %c0_i32_0 = arith.constant 0 : i32
    %c0_i32_1 = arith.constant 0 : i32
    %c0_i32_2 = arith.constant 0 : i32
    return %c0_i32, %c0_i32_0, %c0_i32_1 : i32, i32, i32
  }
  func.func @transform_3(%arg0: i32, %arg1: i32) -> (i32, i32) {
    %c0_i32 = arith.constant 0 : i32
    %c0_i32_0 = arith.constant 0 : i32
    %c0_i32_1 = arith.constant 0 : i32
    return %c0_i32, %c0_i32_0 : i32, i32
  }
  func.func @transform_4(%arg0: i32, %arg1: i32) -> (i32, i32, i32) {
    %c0_i32 = arith.constant 0 : i32
    %c0_i32_0 = arith.constant 0 : i32
    %c0_i32_1 = arith.constant 0 : i32
    %c0_i32_2 = arith.constant 0 : i32
    return %c0_i32, %c0_i32_0, %c0_i32_1 : i32, i32, i32
  }
  func.func @transform_5(%arg0: i32, %arg1: i32) -> (i32, i32) {
    %c0_i32 = arith.constant 0 : i32
    %c0_i32_0 = arith.constant 0 : i32
    %c0_i32_1 = arith.constant 0 : i32
    return %c0_i32, %c0_i32_0 : i32, i32
  }
  func.func @transform_6(%arg0: i32, %arg1: i32) -> (i32, i32, i32) {
    %c0_i32 = arith.constant 0 : i32
    %c0_i32_0 = arith.constant 0 : i32
    %c0_i32_1 = arith.constant 0 : i32
    %c0_i32_2 = arith.constant 0 : i32
    return %c0_i32, %c0_i32_0, %c0_i32_1 : i32, i32, i32
  }
  func.func @transform_7(%arg0: i32, %arg1: i32) -> (i32, i32, i32) {
    %c0_i32 = arith.constant 0 : i32
    %c0_i32_0 = arith.constant 0 : i32
    %c0_i32_1 = arith.constant 0 : i32
    return %arg0, %c0_i32, %c0_i32_0 : i32, i32, i32
  }
  func.func @transform_8(%arg0: i32, %arg1: i32) -> (i32, i32, i32, i32) {
    %c0_i32 = arith.constant 0 : i32
    %c0_i32_0 = arith.constant 0 : i32
    %c0_i32_1 = arith.constant 0 : i32
    return %arg1, %arg0, %c0_i32, %c0_i32_0 : i32, i32, i32, i32
  }
}

</mosaic_0001>

<llo_original>
// kernel: q2s_attention.1
$region0: #{q2s_attention.1}
  #allocation0 [shape = 'u32[]', space=smem, size = 0x4, offset = 0x4, fixed_abs, tag = 'smem constant byte address 0x4 - core index']
  #allocation1 [shape = 'u32[144,128]{1,0:T(1,128)}', space=vmem, size = 0x12000, scoped, tag = 'internal scratch']
  #allocation2 [shape = 'f32[18,352]{1,0:T(8,128)}', space=vmem, size = 0x9000, scoped, tag = 'scratch operand']
  #allocation3 [shape = 'f32[22,44]{1,0:T(8,128)}', space=vmem, size = 0x3000, scoped, tag = 'scratch operand']
  %s0 = inlined_call_operand.vmem [shape: f32[2,22,176], index: 0, kind: input, shape index: {}]
  %s1 = inlined_call_operand.vmem [shape: f32[3,2,22,176], index: 1, kind: input, shape index: {}]
  %s2 = inlined_call_operand.vmem [shape: f32[3,352,352], index: 2, kind: input, shape index: {}]
  %s3 = inlined_call_operand.vmem [shape: f32[1,352], index: 3, kind: input, shape index: {}]
  %s4 = inlined_call_operand.vmem [shape: f32[3,352,352], index: 4, kind: input, shape index: {}]
  %s5 = inlined_call_operand.vmem [shape: f32[1,352], index: 5, kind: input, shape index: {}]
  %s6 = inlined_call_operand.vmem [shape: f32[7,44,22], index: 6, kind: input, shape index: {}]
  %s7 = inlined_call_operand.vmem [shape: f32[2,16,128], index: 7, kind: output, shape index: {0}]
  %s8 = inlined_call_operand.vmem [shape: f32[3,2,16,128], index: 8, kind: output, shape index: {1}]
  %9 = xla_tuple %s7, %s8
  %s10 = sld [smem:[#allocation0]]
  $region77: #{q2s_attention.1} parent=0
    _
  %s12 = ssub.s32 1, %s10
  %s13 = scalar_select 0, %s12, %s10
  loop: start=0, step=1, limit=8
  $region2: #{q2s_attention.1} parent=0 // loop_pre_header
    _
  $region3: #{q2s_attention.1} parent=0 // loop_header
    %s15 = sphi 0, %s19
    %p16 = scmp.ge.s32.totalorder %s15, 8
    %s22 = sphi 0, %s34
    %s23 = sphi 0, %s30
    %s24 = sphi 0, %s22
    %s25 = sphi 0, %s23
    %s26 = sphi 0, %s24
    %s27 = sphi 0, %s25
    %s37 = sphi 0, %s39
    %s40 = sphi 0, %s37
    %s41 = sphi 0, %s40
    %s57 = sphi 0, %s41
    %s65 = sphi 0, %s67
    %s68 = sphi 0, %s65
    %s69 = sphi 0, %s68
    %s85 = sphi 0, %s69
    %s89 = sphi 0, %s89
    %s91 = sphi 0, %s89
    %s92 = sphi 0, %s91
    %s106 = sphi 0, %s92
    %s110 = sphi 0, %s110
    %s112 = sphi 0, %s110
    %s113 = sphi 0, %s112
    %s127 = sphi 0, %s113
    %s131 = sphi 0, %s131
    %s133 = sphi 0, %s131
    %s134 = sphi 0, %s133
    %s148 = sphi 0, %s134
    %s152 = sphi 0, %s152
    %s154 = sphi 0, %s152
    %s155 = sphi 0, %s154
    %s169 = sphi 0, %s155
    %s173 = sphi 0, %s173
    %s175 = sphi 0, %s173
    %s176 = sphi 0, %s175
    %s190 = sphi 0, %s176
    %s196 = sphi 0, %s198
    %s199 = sphi 0, %s196
    %s200 = sphi 0, %s199
    %s216 = sphi 0, %s200
    %s224 = sphi 0, %s226
    %s227 = sphi 0, %s224
    %s228 = sphi 0, %s227
    %s244 = sphi 0, %s228
  $region4: #{q2s_attention.1} parent=0 // loop_header_branch
    %18 = sbr.rel (%p16) target = $region8
  $region5: #{q2s_attention.1} parent=0 // loop_body
    %s20 = ssub.s32 %s15, 1
    %s21 = ssub.s32 %s15, 2
    %s28 = sadd.s32 1, %s23
    %p29 = scmp.ge.s32.totalorder %s28, 3
    %s30 = scalar_select %p29, 0, %s28
    %s31 = sadd.s32 1, %s22
    %s32 = scalar_select %p29, %s31, %s22
    %p33 = scmp.ge.s32.totalorder %s32, 2
    %s34 = scalar_select %p33, 0, %s32
    %s35 = ssub.s32 %s22, %s34
    %p36 = scmp.eq.s32.totalorder %s35, 0
    %s38 = sadd.s32 %s37, 1
    %s39 = scalar_select %p36, %s37, %s38
    %p42 = pneg %p36
    %p43 = scmp.eq.s32.totalorder %s15, 5
    %p44 = por %p42, %p43
    %p45 = scmp.ne.s32.totalorder %s37, %s40
    %p46 = scmp.eq.s32.totalorder %s15, 0
    %p47 = por %p45, %p46
    %p48 = scmp.ne.s32.totalorder %s37, %s40
    %p49 = scmp.eq.s32.totalorder %s20, 5
    %p50 = por %p48, %p49
    %p51 = scmp.ne.s32.totalorder %s40, %s41
    %p52 = scmp.eq.s32.totalorder %s20, 0
    %p53 = por %p51, %p52
    %p54 = scmp.ne.s32.totalorder %s40, %s41
    %p55 = scmp.eq.s32.totalorder %s21, 5
    %p56 = por %p54, %p55
    %p58 = scmp.ne.s32.totalorder %s41, %s57
    %p59 = scmp.eq.s32.totalorder %s21, 0
    %p60 = por %p58, %p59
    %s61 = ssub.s32 %s23, %s30
    %s62 = ssub.s32 %s22, %s34
    %s63 = sor.u32 %s61, %s62
    %p64 = scmp.eq.s32.totalorder %s63, 0
    %s66 = sadd.s32 %s65, 1
    %s67 = scalar_select %p64, %s65, %s66
    %p70 = pneg %p64
    %p71 = scmp.eq.s32.totalorder %s15, 5
    %p72 = por %p70, %p71
    %p73 = scmp.ne.s32.totalorder %s65, %s68
    %p74 = scmp.eq.s32.totalorder %s15, 0
    %p75 = por %p73, %p74
    %p76 = scmp.ne.s32.totalorder %s65, %s68
    %p77 = scmp.eq.s32.totalorder %s20, 5
    %p78 = por %p76, %p77
    %p79 = scmp.ne.s32.totalorder %s68, %s69
    %p80 = scmp.eq.s32.totalorder %s20, 0
    %p81 = por %p79, %p80
    %p82 = scmp.ne.s32.totalorder %s68, %s69
    %p83 = scmp.eq.s32.totalorder %s21, 5
    %p84 = por %p82, %p83
    %p86 = scmp.ne.s32.totalorder %s69, %s85
    %p87 = scmp.eq.s32.totalorder %s21, 0
    %p88 = por %p86, %p87
    %s90 = sadd.s32 %s89, 1
    %p93 = scmp.eq.s32.totalorder %s15, 5
    %p94 = scmp.ne.s32.totalorder %s89, %s91
    %p95 = scmp.eq.s32.totalorder %s15, 0
    %p96 = por %p94, %p95
    %p97 = scmp.ne.s32.totalorder %s89, %s91
    %p98 = scmp.eq.s32.totalorder %s20, 5
    %p99 = por %p97, %p98
    %p100 = scmp.ne.s32.totalorder %s91, %s92
    %p101 = scmp.eq.s32.totalorder %s20, 0
    %p102 = por %p100, %p101
    %p103 = scmp.ne.s32.totalorder %s91, %s92
    %p104 = scmp.eq.s32.totalorder %s21, 5
    %p105 = por %p103, %p104
    %p107 = scmp.ne.s32.totalorder %s92, %s106
    %p108 = scmp.eq.s32.totalorder %s21, 0
    %p109 = por %p107, %p108
    %s111 = sadd.s32 %s110, 1
    %p114 = scmp.eq.s32.totalorder %s15, 5
    %p115 = scmp.ne.s32.totalorder %s110, %s112
    %p116 = scmp.eq.s32.totalorder %s15, 0
    %p117 = por %p115, %p116
    %p118 = scmp.ne.s32.totalorder %s110, %s112
    %p119 = scmp.eq.s32.totalorder %s20, 5
    %p120 = por %p118, %p119
    %p121 = scmp.ne.s32.totalorder %s112, %s113
    %p122 = scmp.eq.s32.totalorder %s20, 0
    %p123 = por %p121, %p122
    %p124 = scmp.ne.s32.totalorder %s112, %s113
    %p125 = scmp.eq.s32.totalorder %s21, 5
    %p126 = por %p124, %p125
    %p128 = scmp.ne.s32.totalorder %s113, %s127
    %p129 = scmp.eq.s32.totalorder %s21, 0
    %p130 = por %p128, %p129
    %s132 = sadd.s32 %s131, 1
    %p135 = scmp.eq.s32.totalorder %s15, 5
    %p136 = scmp.ne.s32.totalorder %s131, %s133
    %p137 = scmp.eq.s32.totalorder %s15, 0
    %p138 = por %p136, %p137
    %p139 = scmp.ne.s32.totalorder %s131, %s133
    %p140 = scmp.eq.s32.totalorder %s20, 5
    %p141 = por %p139, %p140
    %p142 = scmp.ne.s32.totalorder %s133, %s134
    %p143 = scmp.eq.s32.totalorder %s20, 0
    %p144 = por %p142, %p143
    %p145 = scmp.ne.s32.totalorder %s133, %s134
    %p146 = scmp.eq.s32.totalorder %s21, 5
    %p147 = por %p145, %p146
    %p149 = scmp.ne.s32.totalorder %s134, %s148
    %p150 = scmp.eq.s32.totalorder %s21, 0
    %p151 = por %p149, %p150
    %s153 = sadd.s32 %s152, 1
    %p156 = scmp.eq.s32.totalorder %s15, 5
    %p157 = scmp.ne.s32.totalorder %s152, %s154
    %p158 = scmp.eq.s32.totalorder %s15, 0
    %p159 = por %p157, %p158
    %p160 = scmp.ne.s32.totalorder %s152, %s154
    %p161 = scmp.eq.s32.totalorder %s20, 5
    %p162 = por %p160, %p161
    %p163 = scmp.ne.s32.totalorder %s154, %s155
    %p164 = scmp.eq.s32.totalorder %s20, 0
    %p165 = por %p163, %p164
    %p166 = scmp.ne.s32.totalorder %s154, %s155
    %p167 = scmp.eq.s32.totalorder %s21, 5
    %p168 = por %p166, %p167
    %p170 = scmp.ne.s32.totalorder %s155, %s169
    %p171 = scmp.eq.s32.totalorder %s21, 0
    %p172 = por %p170, %p171
    %s174 = sadd.s32 %s173, 1
    %p177 = scmp.eq.s32.totalorder %s15, 5
    %p178 = scmp.ne.s32.totalorder %s173, %s175
    %p179 = scmp.eq.s32.totalorder %s15, 0
    %p180 = por %p178, %p179
    %p181 = scmp.ne.s32.totalorder %s173, %s175
    %p182 = scmp.eq.s32.totalorder %s20, 5
    %p183 = por %p181, %p182
    %p184 = scmp.ne.s32.totalorder %s175, %s176
    %p185 = scmp.eq.s32.totalorder %s20, 0
    %p186 = por %p184, %p185
    %p187 = scmp.ne.s32.totalorder %s175, %s176
    %p188 = scmp.eq.s32.totalorder %s21, 5
    %p189 = por %p187, %p188
    %p191 = scmp.ne.s32.totalorder %s176, %s190
    %p192 = scmp.eq.s32.totalorder %s21, 0
    %p193 = por %p191, %p192
    %s194 = ssub.s32 %s22, %s34
    %p195 = scmp.eq.s32.totalorder %s194, 0
    %s197 = sadd.s32 %s196, 1
    %s198 = scalar_select %p195, %s196, %s197
    %p201 = pneg %p195
    %p202 = scmp.eq.s32.totalorder %s15, 5
    %p203 = por %p201, %p202
    %p204 = scmp.ne.s32.totalorder %s196, %s199
    %p205 = scmp.eq.s32.totalorder %s15, 0
    %p206 = por %p204, %p205
    %p207 = scmp.ne.s32.totalorder %s196, %s199
    %p208 = scmp.eq.s32.totalorder %s20, 5
    %p209 = por %p207, %p208
    %p210 = scmp.ne.s32.totalorder %s199, %s200
    %p211 = scmp.eq.s32.totalorder %s20, 0
    %p212 = por %p210, %p211
    %p213 = scmp.ne.s32.totalorder %s199, %s200
    %p214 = scmp.eq.s32.totalorder %s21, 5
    %p215 = por %p213, %p214
    %p217 = scmp.ne.s32.totalorder %s200, %s216
    %p218 = scmp.eq.s32.totalorder %s21, 0
    %p219 = por %p217, %p218
    %s220 = ssub.s32 %s23, %s30
    %s221 = ssub.s32 %s22, %s34
    %s222 = sor.u32 %s220, %s221
    %p223 = scmp.eq.s32.totalorder %s222, 0
    %s225 = sadd.s32 %s224, 1
    %s226 = scalar_select %p223, %s224, %s225
    %p229 = pneg %p223
    %p230 = scmp.eq.s32.totalorder %s15, 5
    %p231 = por %p229, %p230
    %p232 = scmp.ne.s32.totalorder %s224, %s227
    %p233 = scmp.eq.s32.totalorder %s15, 0
    %p234 = por %p232, %p233
    %p235 = scmp.ne.s32.totalorder %s224, %s227
    %p236 = scmp.eq.s32.totalorder %s20, 5
    %p237 = por %p235, %p236
    %p238 = scmp.ne.s32.totalorder %s227, %s228
    %p239 = scmp.eq.s32.totalorder %s20, 0
    %p240 = por %p238, %p239
    %p241 = scmp.ne.s32.totalorder %s227, %s228
    %p242 = scmp.eq.s32.totalorder %s21, 5
    %p243 = por %p241, %p242
    %p245 = scmp.ne.s32.totalorder %s228, %s244
    %p246 = scmp.eq.s32.totalorder %s21, 0
    %p247 = por %p245, %p246
    %p248 = scmp.le.s32.totalorder 1, %s15
    %p249 = scmp.lt.s32.totalorder %s15, 7
    %p250 = pnand %p248, %p249
    %p251 = pneg %p250
    // Predicated region
    $region9: #{q2s_attention.1} parent=5 // pred_check
      _
    $region10: #{q2s_attention.1} parent=5 // pred_check_branch
      %253 = sbr.rel (%p250) target = $region12
    $region11: #{q2s_attention.1} parent=5 // pred_region
      %s254 = ssub.s32 %s15, 1
      // Predicated region
      $region13: #{q2s_attention.1} parent=11 // pred_check
        %p255 = pneg %p102
      $region14: #{q2s_attention.1} parent=11 // pred_check_branch
        %257 = sbr.rel (%p255) target = $region16
      $region15: #{q2s_attention.1} parent=11 // pred_region
        _
      $region16: #{q2s_attention.1} parent=11 // pred_fallthru
        _
      // Predicated region
      $region17: #{q2s_attention.1} parent=11 // pred_check
        %p258 = pneg %p123
      $region18: #{q2s_attention.1} parent=11 // pred_check_branch
        %260 = sbr.rel (%p258) target = $region20
      $region19: #{q2s_attention.1} parent=11 // pred_region
        _
      $region20: #{q2s_attention.1} parent=11 // pred_fallthru
        _
      // Predicated region
      $region21: #{q2s_attention.1} parent=11 // pred_check
        %p261 = pneg %p144
      $region22: #{q2s_attention.1} parent=11 // pred_check_branch
        %263 = sbr.rel (%p261) target = $region24
      $region23: #{q2s_attention.1} parent=11 // pred_region
        _
      $region24: #{q2s_attention.1} parent=11 // pred_fallthru
        _
      // Predicated region
      $region25: #{q2s_attention.1} parent=11 // pred_check
        %p264 = pneg %p165
      $region26: #{q2s_attention.1} parent=11 // pred_check_branch
        %266 = sbr.rel (%p264) target = $region28
      $region27: #{q2s_attention.1} parent=11 // pred_region
        _
      $region28: #{q2s_attention.1} parent=11 // pred_fallthru
        _
      // Predicated region
      $region29: #{q2s_attention.1} parent=11 // pred_check
        %p267 = pneg %p186
      $region30: #{q2s_attention.1} parent=11 // pred_check_branch
        %269 = sbr.rel (%p267) target = $region32
      $region31: #{q2s_attention.1} parent=11 // pred_region
        _
      $region32: #{q2s_attention.1} parent=11 // pred_fallthru
        _
    $region12: #{q2s_attention.1} parent=5 // pred_fallthru
      _
    %p270 = scmp.lt.s32.totalorder %s15, 6
    // Predicated region
    $region33: #{q2s_attention.1} parent=5 // pred_check
      %p271 = pneg %p270
    $region34: #{q2s_attention.1} parent=5 // pred_check_branch
      %273 = sbr.rel (%p271) target = $region36
    $region35: #{q2s_attention.1} parent=5 // pred_region
      // Predicated region
      $region37: #{q2s_attention.1} parent=35 // pred_check
        %p274 = pneg %p47
      $region38: #{q2s_attention.1} parent=35 // pred_check_branch
        %276 = sbr.rel (%p274) target = $region40
      $region39: #{q2s_attention.1} parent=35 // pred_region
        %p277 = scmp.lt.s32.totalorder %s22, 1
        %s278 = scalar_select %p277, %s22, 1
        %s279 = smul.addr %s278, 6
        %s280 = smul.addr %s279, 8
        %s281 = scalar_lea.vmem %s0, %s280
      $region40: #{q2s_attention.1} parent=35 // pred_fallthru
        _
      // Predicated region
      $region41: #{q2s_attention.1} parent=35 // pred_check
        %p282 = pneg %p75
      $region42: #{q2s_attention.1} parent=35 // pred_check_branch
        %284 = sbr.rel (%p282) target = $region44
      $region43: #{q2s_attention.1} parent=35 // pred_region
        %p285 = scmp.lt.s32.totalorder %s23, 2
        %s286 = scalar_select %p285, %s23, 2
        %p287 = scmp.lt.s32.totalorder %s22, 1
        %s288 = scalar_select %p287, %s22, 1
        %s289 = smul.addr %s288, 6
        %s290 = smul.addr %s286, 12
        %s291 = sadd.s32 %s289, %s290
        %s292 = smul.addr %s291, 8
        %s293 = scalar_lea.vmem %s1, %s292
      $region44: #{q2s_attention.1} parent=35 // pred_fallthru
        _
    $region36: #{q2s_attention.1} parent=5 // pred_fallthru
      _
    %p294 = scmp.le.s32.totalorder 1, %s15
    %p295 = scmp.lt.s32.totalorder %s15, 7
    %p296 = pnand %p294, %p295
    %p297 = pneg %p296
    // Predicated region
    $region45: #{q2s_attention.1} parent=5 // pred_check
      _
    $region46: #{q2s_attention.1} parent=5 // pred_check_branch
      %299 = sbr.rel (%p296) target = $region48
    $region47: #{q2s_attention.1} parent=5 // pred_region
      %s300 = ssub.s32 %s15, 1
      %p301 = scmp.lt.s32.totalorder %s24, 1
      %s302 = scalar_select %p301, %s24, 1
      %s303 = smul.addr %s302, 6
      %s304 = smul.addr %s303, 8
      %s305 = scalar_lea.vmem %s0, %s304
      %p306 = pneg %p53
      %p307 = pneg %p50
      %p308 = scmp.lt.s32.totalorder %s25, 2
      %s309 = scalar_select %p308, %s25, 2
      %p310 = scmp.lt.s32.totalorder %s24, 1
      %s311 = scalar_select %p310, %s24, 1
      %s312 = smul.addr %s311, 6
      %s313 = smul.addr %s309, 12
      %s314 = sadd.s32 %s312, %s313
      %s315 = smul.addr %s314, 8
      %s316 = scalar_lea.vmem %s1, %s315
      %p317 = pneg %p81
      %p318 = pneg %p78
      %p319 = pneg %p102
      %p320 = pneg %p99
      %p321 = pneg %p123
      %p322 = pneg %p120
      %p323 = pneg %p144
      %p324 = pneg %p141
      %p325 = pneg %p165
      %p326 = pneg %p162
      %p327 = pneg %p186
      %p328 = pneg %p183
      %p329 = pneg %p212
      %p330 = pneg %p209
      %p331 = scmp.lt.s32.totalorder %s24, 1
      %s332 = scalar_select %p331, %s24, 1
      %s333 = smul.addr %s332, 2
      %s334 = smul.addr %s333, 8
      %s335 = scalar_lea.vmem %s7, %s334
      %p336 = pneg %p240
      %p337 = pneg %p237
      %p338 = scmp.lt.s32.totalorder %s25, 2
      %s339 = scalar_select %p338, %s25, 2
      %p340 = scmp.lt.s32.totalorder %s24, 1
      %s341 = scalar_select %p340, %s24, 1
      %s342 = smul.addr %s341, 2
      %s343 = smul.addr %s339, 4
      %s344 = sadd.s32 %s342, %s343
      %s345 = smul.addr %s344, 8
      %s346 = scalar_lea.vmem %s8, %s345
      %p347 = scmp.lt.s32.totalorder %s24, 1
      %s348 = scalar_select %p347, %s24, 1
      %s349 = smul.addr %s348, 6
      %s350 = smul.addr %s349, 8
      %s351 = scalar_lea.vmem %s0, %s350
      %p352 = scmp.lt.s32.totalorder %s25, 2
      %s353 = scalar_select %p352, %s25, 2
      %p354 = scmp.lt.s32.totalorder %s24, 1
      %s355 = scalar_select %p354, %s24, 1
      %s356 = smul.addr %s355, 6
      %s357 = smul.addr %s353, 12
      %s358 = sadd.s32 %s356, %s357
      %s359 = smul.addr %s358, 8
      %s360 = scalar_lea.vmem %s1, %s359
      %p361 = scmp.lt.s32.totalorder %s24, 1
      %s362 = scalar_select %p361, %s24, 1
      %s363 = smul.addr %s362, 2
      %s364 = smul.addr %s363, 8
      %s365 = scalar_lea.vmem %s7, %s364
      %p366 = scmp.lt.s32.totalorder %s25, 2
      %s367 = scalar_select %p366, %s25, 2
      %p368 = scmp.lt.s32.totalorder %s24, 1
      %s369 = scalar_select %p368, %s24, 1
      %s370 = smul.addr %s369, 2
      %s371 = smul.addr %s367, 4
      %s372 = sadd.s32 %s370, %s371
      %s373 = smul.addr %s372, 8
      %s374 = scalar_lea.vmem %s8, %s373
      %v375 = vld [vmem:[%s351] sm:$0xfc]
      %v376 = vld [vmem:[%s351 + $0x8] sm:$0xfc]
      %v377 = vld [vmem:[%s351 + $0x10] sm:$0xff]
      %v378 = vld [vmem:[%s351 + $0x18] sm:$0xff]
      %v379 = vld [vmem:[%s351 + $0x20] sm:$0x3]
      %v380 = vld [vmem:[%s351 + $0x28] sm:$0x3]
      %v381 = vld [vmem:[%s2] sm:$0xff]
      %v382 = vld [vmem:[%s2 + $0x8] sm:$0xff]
      %v383 = vld [vmem:[%s2 + $0x10] sm:$0xff]
      %v384 = vld [vmem:[%s2 + $0x18] sm:$0xff]
      %v385 = vld [vmem:[%s2 + $0x20] sm:$0xff]
      %v386 = vld [vmem:[%s2 + $0x28] sm:$0xff]
      %v387 = vld [vmem:[%s2 + $0x30] sm:$0xff]
      %v388 = vld [vmem:[%s2 + $0x38] sm:$0xff]
      %v389 = vld [vmem:[%s2 + $0x40] sm:$0xff]
      %v390 = vld [vmem:[%s2 + $0x48] sm:$0xff]
      %v391 = vld [vmem:[%s2 + $0x50] sm:$0xff]
      %v392 = vld [vmem:[%s2 + $0x58] sm:$0xff]
      %v393 = vld [vmem:[%s2 + $0x60] sm:$0xff]
      %v394 = vld [vmem:[%s2 + $0x68] sm:$0xff]
      %v395 = vld [vmem:[%s2 + $0x70] sm:$0xff]
      %v396 = vld [vmem:[%s2 + $0x78] sm:$0xff]
      %v397 = vld [vmem:[%s2 + $0x80] sm:$0xff]
      %v398 = vld [vmem:[%s2 + $0x88] sm:$0xff]
      %v399 = vld [vmem:[%s2 + $0x90] sm:$0xff]
      %v400 = vld [vmem:[%s2 + $0x98] sm:$0xff]
      %v401 = vld [vmem:[%s2 + $0xa0] sm:$0xff]
      %v402 = vld [vmem:[%s2 + $0xa8] sm:$0xff]
      %v403 = vld [vmem:[%s2 + $0xb0] sm:$0xff]
      %v404 = vld [vmem:[%s2 + $0xb8] sm:$0xff]
      %v405 = vld [vmem:[%s2 + $0xc0] sm:$0xff]
      %v406 = vld [vmem:[%s2 + $0xc8] sm:$0xff]
      %v407 = vld [vmem:[%s2 + $0xd0] sm:$0xff]
      %v408 = vld [vmem:[%s2 + $0xd8] sm:$0xff]
      %v409 = vld [vmem:[%s2 + $0xe0] sm:$0xff]
      %v410 = vld [vmem:[%s2 + $0xe8] sm:$0xff]
      %v411 = vld [vmem:[%s2 + $0xf0] sm:$0xff]
      %v412 = vld [vmem:[%s2 + $0xf8] sm:$0xff]
      %v413 = vld [vmem:[%s2 + $0x100] sm:$0xff]
      %v414 = vld [vmem:[%s2 + $0x108] sm:$0xff]
      %v415 = vld [vmem:[%s2 + $0x110] sm:$0xff]
      %v416 = vld [vmem:[%s2 + $0x118] sm:$0xff]
      %v417 = vld [vmem:[%s2 + $0x120] sm:$0xff]
      %v418 = vld [vmem:[%s2 + $0x128] sm:$0xff]
      %v419 = vld [vmem:[%s2 + $0x130] sm:$0xff]
      %v420 = vld [vmem:[%s2 + $0x138] sm:$0xff]
      %v421 = vld [vmem:[%s2 + $0x140] sm:$0xff]
      %v422 = vld [vmem:[%s2 + $0x148] sm:$0xff]
      %v423 = vld [vmem:[%s2 + $0x150] sm:$0xff]
      %v424 = vld [vmem:[%s2 + $0x158] sm:$0xff]
      %v425 = vld [vmem:[%s2 + $0x160] sm:$0xff]
      %v426 = vld [vmem:[%s2 + $0x168] sm:$0xff]
      %v427 = vld [vmem:[%s2 + $0x170] sm:$0xff]
      %v428 = vld [vmem:[%s2 + $0x178] sm:$0xff]
      %v429 = vld [vmem:[%s2 + $0x180] sm:$0xff]
      %v430 = vld [vmem:[%s2 + $0x188] sm:$0xff]
      %v431 = vld [vmem:[%s2 + $0x190] sm:$0xff]
      %v432 = vld [vmem:[%s2 + $0x198] sm:$0xff]
      %v433 = vld [vmem:[%s2 + $0x1a0] sm:$0xff]
      %v434 = vld [vmem:[%s2 + $0x1a8] sm:$0xff]
      %v435 = vld [vmem:[%s2 + $0x1b0] sm:$0xff]
      %v436 = vld [vmem:[%s2 + $0x1b8] sm:$0xff]
      %v437 = vld [vmem:[%s2 + $0x1c0] sm:$0xff]
      %v438 = vld [vmem:[%s2 + $0x1c8] sm:$0xff]
      %v439 = vld [vmem:[%s2 + $0x1d0] sm:$0xff]
      %v440 = vld [vmem:[%s2 + $0x1d8] sm:$0xff]
      %v441 = vld [vmem:[%s2 + $0x1e0] sm:$0xff]
      %v442 = vld [vmem:[%s2 + $0x1e8] sm:$0xff]
      %v443 = vld [vmem:[%s2 + $0x1f0] sm:$0xff]
      %v444 = vld [vmem:[%s2 + $0x1f8] sm:$0xff]
      %v445 = vld [vmem:[%s2 + $0x200] sm:$0xff]
      %v446 = vld [vmem:[%s2 + $0x208] sm:$0xff]
      %v447 = vld [vmem:[%s360] sm:$0xfc]
      %v448 = vld [vmem:[%s360 + $0x8] sm:$0xfc]
      %v449 = vld [vmem:[%s360 + $0x10] sm:$0xff]
      %v450 = vld [vmem:[%s360 + $0x18] sm:$0xff]
      %v451 = vld [vmem:[%s360 + $0x20] sm:$0x3]
      %v452 = vld [vmem:[%s360 + $0x28] sm:$0x3]
      %v453 = vld [vmem:[%s2 + $0x210] sm:$0xff]
      %v454 = vld [vmem:[%s2 + $0x218] sm:$0xff]
      %v455 = vld [vmem:[%s2 + $0x220] sm:$0xff]
      %v456 = vld [vmem:[%s2 + $0x228] sm:$0xff]
      %v457 = vld [vmem:[%s2 + $0x230] sm:$0xff]
      %v458 = vld [vmem:[%s2 + $0x238] sm:$0xff]
      %v459 = vld [vmem:[%s2 + $0x240] sm:$0xff]
      %v460 = vld [vmem:[%s2 + $0x248] sm:$0xff]
      %v461 = vld [vmem:[%s2 + $0x250] sm:$0xff]
      %v462 = vld [vmem:[%s2 + $0x258] sm:$0xff]
      %v463 = vld [vmem:[%s2 + $0x260] sm:$0xff]
      %v464 = vld [vmem:[%s2 + $0x268] sm:$0xff]
      %v465 = vld [vmem:[%s2 + $0x270] sm:$0xff]
      %v466 = vld [vmem:[%s2 + $0x278] sm:$0xff]
      %v467 = vld [vmem:[%s2 + $0x280] sm:$0xff]
      %v468 = vld [vmem:[%s2 + $0x288] sm:$0xff]
      %v469 = vld [vmem:[%s2 + $0x290] sm:$0xff]
      %v470 = vld [vmem:[%s2 + $0x298] sm:$0xff]
      %v471 = vld [vmem:[%s2 + $0x2a0] sm:$0xff]
      %v472 = vld [vmem:[%s2 + $0x2a8] sm:$0xff]
      %v473 = vld [vmem:[%s2 + $0x2b0] sm:$0xff]
      %v474 = vld [vmem:[%s2 + $0x2b8] sm:$0xff]
      %v475 = vld [vmem:[%s2 + $0x2c0] sm:$0xff]
      %v476 = vld [vmem:[%s2 + $0x2c8] sm:$0xff]
      %v477 = vld [vmem:[%s2 + $0x2d0] sm:$0xff]
      %v478 = vld [vmem:[%s2 + $0x2d8] sm:$0xff]
      %v479 = vld [vmem:[%s2 + $0x2e0] sm:$0xff]
      %v480 = vld [vmem:[%s2 + $0x2e8] sm:$0xff]
      %v481 = vld [vmem:[%s2 + $0x2f0] sm:$0xff]
      %v482 = vld [vmem:[%s2 + $0x2f8] sm:$0xff]
      %v483 = vld [vmem:[%s2 + $0x300] sm:$0xff]
      %v484 = vld [vmem:[%s2 + $0x308] sm:$0xff]
      %v485 = vld [vmem:[%s2 + $0x310] sm:$0xff]
      %v486 = vld [vmem:[%s2 + $0x318] sm:$0xff]
      %v487 = vld [vmem:[%s2 + $0x320] sm:$0xff]
      %v488 = vld [vmem:[%s2 + $0x328] sm:$0xff]
      %v489 = vld [vmem:[%s2 + $0x330] sm:$0xff]
      %v490 = vld [vmem:[%s2 + $0x338] sm:$0xff]
      %v491 = vld [vmem:[%s2 + $0x340] sm:$0xff]
      %v492 = vld [vmem:[%s2 + $0x348] sm:$0xff]
      %v493 = vld [vmem:[%s2 + $0x350] sm:$0xff]
      %v494 = vld [vmem:[%s2 + $0x358] sm:$0xff]
      %v495 = vld [vmem:[%s2 + $0x360] sm:$0xff]
      %v496 = vld [vmem:[%s2 + $0x368] sm:$0xff]
      %v497 = vld [vmem:[%s2 + $0x370] sm:$0xff]
      %v498 = vld [vmem:[%s2 + $0x378] sm:$0xff]
      %v499 = vld [vmem:[%s2 + $0x380] sm:$0xff]
      %v500 = vld [vmem:[%s2 + $0x388] sm:$0xff]
      %v501 = vld [vmem:[%s2 + $0x390] sm:$0xff]
      %v502 = vld [vmem:[%s2 + $0x398] sm:$0xff]
      %v503 = vld [vmem:[%s2 + $0x3a0] sm:$0xff]
      %v504 = vld [vmem:[%s2 + $0x3a8] sm:$0xff]
      %v505 = vld [vmem:[%s2 + $0x3b0] sm:$0xff]
      %v506 = vld [vmem:[%s2 + $0x3b8] sm:$0xff]
      %v507 = vld [vmem:[%s2 + $0x3c0] sm:$0xff]
      %v508 = vld [vmem:[%s2 + $0x3c8] sm:$0xff]
      %v509 = vld [vmem:[%s2 + $0x3d0] sm:$0xff]
      %v510 = vld [vmem:[%s2 + $0x3d8] sm:$0xff]
      %v511 = vld [vmem:[%s2 + $0x3e0] sm:$0xff]
      %v512 = vld [vmem:[%s2 + $0x3e8] sm:$0xff]
      %v513 = vld [vmem:[%s2 + $0x3f0] sm:$0xff]
      %v514 = vld [vmem:[%s2 + $0x3f8] sm:$0xff]
      %v515 = vld [vmem:[%s2 + $0x400] sm:$0xff]
      %v516 = vld [vmem:[%s2 + $0x408] sm:$0xff]
      %v517 = vld [vmem:[%s2 + $0x410] sm:$0xff]
      %v518 = vld [vmem:[%s2 + $0x418] sm:$0xff]
      %vm525 = vcmask 1045504
      %v526 = vrot.slane %v447, 2
      %v527 = vrot.slane %v449, 2
      %v528 = vsel %vm525, %v526, %v527
      %v529 = vrot.slane %v448, 2
      %v530 = vrot.slane %v450, 2
      %v531 = vsel %vm525, %v529, %v530
      %v532 = vrot.slane %v451, 2
      %v533 = vsel %vm525, %v527, %v532
      %v534 = vrot.slane %v452, 2
      %v535 = vsel %vm525, %v530, %v534
      %vm538 = vcmask 392192
      %v539 = vsel %vm538, %v531, 0
      %v541 = vsel %vm538, %v535, 0
      %543 = vmatprep.subr.mxu0 %v499
      %544 = vmatpush1.msra.mxu0 %v498
      %545 = vmatprep.subr.mxu0 %v496
      %546 = vmatpush1.msra.mxu0 %v495
      %547 = vmatprep.subr.mxu0 %v493
      %548 = vmatpush1.msra.mxu0 %v492
      %549 = vmatprep.subr.mxu0 %v490
      %550 = vmatpush1.msra.mxu0 %v489
      %551 = vmatprep.subr.mxu0 %v487
      %552 = vmatpush1.msra.mxu0 %v486
      %553 = vmatprep.subr.mxu0 %v484
      %554 = vmatpush1.msra.mxu0 %v483
      %555 = vmatprep.subr.mxu0 %v481
      %556 = vmatpush1.msra.mxu0 %v480
      %557 = vmatprep.subr.mxu0 %v478
      %558 = vmatpush1.msra.mxu0 %v477
      %559 = vmatprep.subr.mxu0 %v475
      %560 = vmatpush1.msra.mxu0 %v474
      %561 = vmatprep.subr.mxu0 %v472
      %562 = vmatpush1.msra.mxu0 %v471
      %563 = vmatprep.subr.mxu0 %v469
      %564 = vmatpush1.msra.mxu0 %v468
      %565 = vmatprep.subr.mxu0 %v466
      %566 = vmatpush1.msra.mxu0 %v465
      %567 = vmatprep.subr.mxu0 %v463
      %568 = vmatpush1.msra.mxu0 %v462
      %569 = vmatprep.subr.mxu0 %v460
      %570 = vmatpush1.msra.mxu0 %v459
      %571 = vmatprep.subr.mxu0 %v457
      %572 = vmatpush1.msra.mxu0 %v456
      %573 = vmatprep.subr.mxu0 %v454
      %574 = vmatpush1.msra.mxu0 %v453
      %575 = vmatprep.subr.mxu0 0.0
      %576 = vmatpush2.msra.mxu0 0.0
      %577 = vmatprep.subr.mxu0 0.0
      %578 = vmatpush2.msra.mxu0 0.0
      %579 = vmatprep.subr.mxu0 0.0
      %580 = vmatpush2.msra.mxu0 0.0
      %581 = vmatprep.subr.mxu0 0.0
      %582 = vmatpush2.msra.mxu0 0.0
      %583 = vmatprep.subr.mxu0 0.0
      %584 = vmatpush2.msra.mxu0 0.0
      %585 = vmatprep.subr.mxu0 0.0
      %586 = vmatpush2.msra.mxu0 0.0
      %587 = vmatprep.subr.mxu0 0.0
      %588 = vmatpush2.msra.mxu0 0.0
      %589 = vmatprep.subr.mxu0 0.0
      %590 = vmatpush2.msra.mxu0 0.0
      %591 = vmatprep.subr.mxu0 0.0
      %592 = vmatpush2.msra.mxu0 0.0
      %593 = vmatprep.subr.mxu0 0.0
      %594 = vmatpush2.msra.mxu0 0.0
      %595 = vmatprep.subr.mxu0 %v517
      %596 = vmatpush2.msra.mxu0 %v516
      %597 = vmatprep.subr.mxu0 %v514
      %598 = vmatpush2.msra.mxu0 %v513
      %599 = vmatprep.subr.mxu0 %v511
      %600 = vmatpush2.msra.mxu0 %v510
      %601 = vmatprep.subr.mxu0 %v508
      %602 = vmatpush2.msra.mxu0 %v507
      %603 = vmatprep.subr.mxu0 %v505
      %604 = vmatpush2.msra.mxu0 %v504
      %605 = vmatprep.subr.mxu0 %v502
      %606 = vmatpush2.msra.mxu0 %v501
      %607 = vmatprep.mubr.f32.mxu0 %v539
      %608 = vmatmul.mubr.f32.gmra.mxu0 %v528
      %v609 = vpop.f32.mrf.mxu0
      %v610 = vadd.f32 0.0, %v609
      %v611 = vpop.f32.mrf.mxu0
      %v612 = vadd.f32 0.0, %v611
      %613 = vmatprep.mubr.f32.mxu0 %v541
      %614 = vmatmul.mubr.f32.gmra.mxu0 %v533
      %v615 = vpop.f32.mrf.mxu0
      %v616 = vadd.f32 0.0, %v615
      %v617 = vpop.f32.mrf.mxu0
      %v618 = vadd.f32 0.0, %v617
      %619 = vdwg.mxu0
      %620 = vmatprep.subr.mxu0 0.0
      %621 = vmatpush1.msra.mxu0 %v500
      %622 = vmatprep.subr.mxu0 0.0
      %623 = vmatpush1.msra.mxu0 %v497
      %624 = vmatprep.subr.mxu0 0.0
      %625 = vmatpush1.msra.mxu0 %v494
      %626 = vmatprep.subr.mxu0 0.0
      %627 = vmatpush1.msra.mxu0 %v491
      %628 = vmatprep.subr.mxu0 0.0
      %629 = vmatpush1.msra.mxu0 %v488
      %630 = vmatprep.subr.mxu0 0.0
      %631 = vmatpush1.msra.mxu0 %v485
      %632 = vmatprep.subr.mxu0 0.0
      %633 = vmatpush1.msra.mxu0 %v482
      %634 = vmatprep.subr.mxu0 0.0
      %635 = vmatpush1.msra.mxu0 %v479
      %636 = vmatprep.subr.mxu0 0.0
      %637 = vmatpush1.msra.mxu0 %v476
      %638 = vmatprep.subr.mxu0 0.0
      %639 = vmatpush1.msra.mxu0 %v473
      %640 = vmatprep.subr.mxu0 0.0
      %641 = vmatpush1.msra.mxu0 %v470
      %642 = vmatprep.subr.mxu0 0.0
      %643 = vmatpush1.msra.mxu0 %v467
      %644 = vmatprep.subr.mxu0 0.0
      %645 = vmatpush1.msra.mxu0 %v464
      %646 = vmatprep.subr.mxu0 0.0
      %647 = vmatpush1.msra.mxu0 %v461
      %648 = vmatprep.subr.mxu0 0.0
      %649 = vmatpush1.msra.mxu0 %v458
      %650 = vmatprep.subr.mxu0 0.0
      %651 = vmatpush1.msra.mxu0 %v455
      %652 = vmatprep.subr.mxu0 0.0
      %653 = vmatpush2.msra.mxu0 0.0
      %654 = vmatprep.subr.mxu0 0.0
      %655 = vmatpush2.msra.mxu0 0.0
      %656 = vmatprep.subr.mxu0 0.0
      %657 = vmatpush2.msra.mxu0 0.0
      %658 = vmatprep.subr.mxu0 0.0
      %659 = vmatpush2.msra.mxu0 0.0
      %660 = vmatprep.subr.mxu0 0.0
      %661 = vmatpush2.msra.mxu0 0.0
      %662 = vmatprep.subr.mxu0 0.0
      %663 = vmatpush2.msra.mxu0 0.0
      %664 = vmatprep.subr.mxu0 0.0
      %665 = vmatpush2.msra.mxu0 0.0
      %666 = vmatprep.subr.mxu0 0.0
      %667 = vmatpush2.msra.mxu0 0.0
      %668 = vmatprep.subr.mxu0 0.0
      %669 = vmatpush2.msra.mxu0 0.0
      %670 = vmatprep.subr.mxu0 0.0
      %671 = vmatpush2.msra.mxu0 0.0
      %672 = vmatprep.subr.mxu0 0.0
      %673 = vmatpush2.msra.mxu0 %v518
      %674 = vmatprep.subr.mxu0 0.0
      %675 = vmatpush2.msra.mxu0 %v515
      %676 = vmatprep.subr.mxu0 0.0
      %677 = vmatpush2.msra.mxu0 %v512
      %678 = vmatprep.subr.mxu0 0.0
      %679 = vmatpush2.msra.mxu0 %v509
      %680 = vmatprep.subr.mxu0 0.0
      %681 = vmatpush2.msra.mxu0 %v506
      %682 = vmatprep.subr.mxu0 0.0
      %683 = vmatpush2.msra.mxu0 %v503
      %684 = vmatprep.mubr.f32.mxu0 %v539
      %685 = vmatmul.mubr.f32.gmra.mxu0 %v528
      %v686 = vpop.f32.mrf.mxu0
      %v687 = vadd.f32 0.0, %v686
      %v688 = vpop.f32.mrf.mxu0
      %689 = vmatprep.mubr.f32.mxu0 %v541
      %690 = vmatmul.mubr.f32.gmra.mxu0 %v533
      %v691 = vpop.f32.mrf.mxu0
      %v692 = vadd.f32 0.0, %v691
      %v693 = vpop.f32.mrf.mxu0
      %694 = vdwg.mxu0
      %v701 = vrot.slane %v375, 2
      %v702 = vrot.slane %v377, 2
      %v703 = vsel %vm525, %v701, %v702
      %v704 = vrot.slane %v376, 2
      %v705 = vrot.slane %v378, 2
      %v706 = vsel %vm525, %v704, %v705
      %v707 = vrot.slane %v379, 2
      %v708 = vsel %vm525, %v702, %v707
      %v709 = vrot.slane %v380, 2
      %v710 = vsel %vm525, %v705, %v709
      %v713 = vsel %vm538, %v706, 0
      %v715 = vsel %vm538, %v710, 0
      %717 = vmatprep.subr.mxu0 %v427
      %718 = vmatpush1.msra.mxu0 %v426
      %719 = vmatprep.subr.mxu0 %v424
      %720 = vmatpush1.msra.mxu0 %v423
      %721 = vmatprep.subr.mxu0 %v421
      %722 = vmatpush1.msra.mxu0 %v420
      %723 = vmatprep.subr.mxu0 %v418
      %724 = vmatpush1.msra.mxu0 %v417
      %725 = vmatprep.subr.mxu0 %v415
      %726 = vmatpush1.msra.mxu0 %v414
      %727 = vmatprep.subr.mxu0 %v412
      %728 = vmatpush1.msra.mxu0 %v411
      %729 = vmatprep.subr.mxu0 %v409
      %730 = vmatpush1.msra.mxu0 %v408
      %731 = vmatprep.subr.mxu0 %v406
      %732 = vmatpush1.msra.mxu0 %v405
      %733 = vmatprep.subr.mxu0 %v403
      %734 = vmatpush1.msra.mxu0 %v402
      %735 = vmatprep.subr.mxu0 %v400
      %736 = vmatpush1.msra.mxu0 %v399
      %737 = vmatprep.subr.mxu0 %v397
      %738 = vmatpush1.msra.mxu0 %v396
      %739 = vmatprep.subr.mxu0 %v394
      %740 = vmatpush1.msra.mxu0 %v393
      %741 = vmatprep.subr.mxu0 %v391
      %742 = vmatpush1.msra.mxu0 %v390
      %743 = vmatprep.subr.mxu0 %v388
      %744 = vmatpush1.msra.mxu0 %v387
      %745 = vmatprep.subr.mxu0 %v385
      %746 = vmatpush1.msra.mxu0 %v384
      %747 = vmatprep.subr.mxu0 %v382
      %748 = vmatpush1.msra.mxu0 %v381
      %749 = vmatprep.subr.mxu0 0.0
      %750 = vmatpush2.msra.mxu0 0.0
      %751 = vmatprep.subr.mxu0 0.0
      %752 = vmatpush2.msra.mxu0 0.0
      %753 = vmatprep.subr.mxu0 0.0
      %754 = vmatpush2.msra.mxu0 0.0
      %755 = vmatprep.subr.mxu0 0.0
      %756 = vmatpush2.msra.mxu0 0.0
      %757 = vmatprep.subr.mxu0 0.0
      %758 = vmatpush2.msra.mxu0 0.0
      %759 = vmatprep.subr.mxu0 0.0
      %760 = vmatpush2.msra.mxu0 0.0
      %761 = vmatprep.subr.mxu0 0.0
      %762 = vmatpush2.msra.mxu0 0.0
      %763 = vmatprep.subr.mxu0 0.0
      %764 = vmatpush2.msra.mxu0 0.0
      %765 = vmatprep.subr.mxu0 0.0
      %766 = vmatpush2.msra.mxu0 0.0
      %767 = vmatprep.subr.mxu0 0.0
      %768 = vmatpush2.msra.mxu0 0.0
      %769 = vmatprep.subr.mxu0 %v445
      %770 = vmatpush2.msra.mxu0 %v444
      %771 = vmatprep.subr.mxu0 %v442
      %772 = vmatpush2.msra.mxu0 %v441
      %773 = vmatprep.subr.mxu0 %v439
      %774 = vmatpush2.msra.mxu0 %v438
      %775 = vmatprep.subr.mxu0 %v436
      %776 = vmatpush2.msra.mxu0 %v435
      %777 = vmatprep.subr.mxu0 %v433
      %778 = vmatpush2.msra.mxu0 %v432
      %779 = vmatprep.subr.mxu0 %v430
      %780 = vmatpush2.msra.mxu0 %v429
      %781 = vmatprep.mubr.f32.mxu0 %v713
      %782 = vmatmul.mubr.f32.gmra.mxu0 %v703
      %v783 = vpop.f32.mrf.mxu0
      %v784 = vadd.f32 %v610, %v783
      %v785 = vpop.f32.mrf.mxu0
      %v786 = vadd.f32 %v612, %v785
      %787 = vmatprep.mubr.f32.mxu0 %v715
      %788 = vmatmul.mubr.f32.gmra.mxu0 %v708
      %v789 = vpop.f32.mrf.mxu0
      %v790 = vadd.f32 %v616, %v789
      %v791 = vpop.f32.mrf.mxu0
      %v792 = vadd.f32 %v618, %v791
      %793 = vdwg.mxu0
      %794 = vmatprep.subr.mxu0 0.0
      %795 = vmatpush1.msra.mxu0 %v428
      %796 = vmatprep.subr.mxu0 0.0
      %797 = vmatpush1.msra.mxu0 %v425
      %798 = vmatprep.subr.mxu0 0.0
      %799 = vmatpush1.msra.mxu0 %v422
      %800 = vmatprep.subr.mxu0 0.0
      %801 = vmatpush1.msra.mxu0 %v419
      %802 = vmatprep.subr.mxu0 0.0
      %803 = vmatpush1.msra.mxu0 %v416
      %804 = vmatprep.subr.mxu0 0.0
      %805 = vmatpush1.msra.mxu0 %v413
      %806 = vmatprep.subr.mxu0 0.0
      %807 = vmatpush1.msra.mxu0 %v410
      %808 = vmatprep.subr.mxu0 0.0
      %809 = vmatpush1.msra.mxu0 %v407
      %810 = vmatprep.subr.mxu0 0.0
      %811 = vmatpush1.msra.mxu0 %v404
      %812 = vmatprep.subr.mxu0 0.0
      %813 = vmatpush1.msra.mxu0 %v401
      %814 = vmatprep.subr.mxu0 0.0
      %815 = vmatpush1.msra.mxu0 %v398
      %816 = vmatprep.subr.mxu0 0.0
      %817 = vmatpush1.msra.mxu0 %v395
      %818 = vmatprep.subr.mxu0 0.0
      %819 = vmatpush1.msra.mxu0 %v392
      %820 = vmatprep.subr.mxu0 0.0
      %821 = vmatpush1.msra.mxu0 %v389
      %822 = vmatprep.subr.mxu0 0.0
      %823 = vmatpush1.msra.mxu0 %v386
      %824 = vmatprep.subr.mxu0 0.0
      %825 = vmatpush1.msra.mxu0 %v383
      %826 = vmatprep.subr.mxu0 0.0
      %827 = vmatpush2.msra.mxu0 0.0
      %828 = vmatprep.subr.mxu0 0.0
      %829 = vmatpush2.msra.mxu0 0.0
      %830 = vmatprep.subr.mxu0 0.0
      %831 = vmatpush2.msra.mxu0 0.0
      %832 = vmatprep.subr.mxu0 0.0
      %833 = vmatpush2.msra.mxu0 0.0
      %834 = vmatprep.subr.mxu0 0.0
      %835 = vmatpush2.msra.mxu0 0.0
      %836 = vmatprep.subr.mxu0 0.0
      %837 = vmatpush2.msra.mxu0 0.0
      %838 = vmatprep.subr.mxu0 0.0
      %839 = vmatpush2.msra.mxu0 0.0
      %840 = vmatprep.subr.mxu0 0.0
      %841 = vmatpush2.msra.mxu0 0.0
      %842 = vmatprep.subr.mxu0 0.0
      %843 = vmatpush2.msra.mxu0 0.0
      %844 = vmatprep.subr.mxu0 0.0
      %845 = vmatpush2.msra.mxu0 0.0
      %846 = vmatprep.subr.mxu0 0.0
      %847 = vmatpush2.msra.mxu0 %v446
      %848 = vmatprep.subr.mxu0 0.0
      %849 = vmatpush2.msra.mxu0 %v443
      %850 = vmatprep.subr.mxu0 0.0
      %851 = vmatpush2.msra.mxu0 %v440
      %852 = vmatprep.subr.mxu0 0.0
      %853 = vmatpush2.msra.mxu0 %v437
      %854 = vmatprep.subr.mxu0 0.0
      %855 = vmatpush2.msra.mxu0 %v434
      %856 = vmatprep.subr.mxu0 0.0
      %857 = vmatpush2.msra.mxu0 %v431
      %858 = vmatprep.mubr.f32.mxu0 %v713
      %859 = vmatmul.mubr.f32.gmra.mxu0 %v703
      %v860 = vpop.f32.mrf.mxu0
      %v861 = vadd.f32 %v687, %v860
      %v862 = vpop.f32.mrf.mxu0
      %863 = vmatprep.mubr.f32.mxu0 %v715
      %864 = vmatmul.mubr.f32.gmra.mxu0 %v708
      %v865 = vpop.f32.mrf.mxu0
      %v866 = vadd.f32 %v692, %v865
      %v867 = vpop.f32.mrf.mxu0
      %868 = vdwg.mxu0
      %v869 = vld [vmem:[%s351] sm:$0xf8]
      %v870 = vld [vmem:[%s351 + $0x8] sm:$0xf8]
      %v871 = vld [vmem:[%s351 + $0x20] sm:$0x7]
      %v872 = vld [vmem:[%s351 + $0x28] sm:$0x7]
      %s873 = scalar_lea.vmem %s2, 1056
      %v874 = vld [vmem:[%s873] sm:$0xff]
      %v875 = vld [vmem:[%s873 + $0x8] sm:$0xff]
      %v876 = vld [vmem:[%s873 + $0x10] sm:$0xff]
      %v877 = vld [vmem:[%s873 + $0x18] sm:$0xff]
      %v878 = vld [vmem:[%s873 + $0x20] sm:$0xff]
      %v879 = vld [vmem:[%s873 + $0x28] sm:$0xff]
      %v880 = vld [vmem:[%s873 + $0x30] sm:$0xff]
      %v881 = vld [vmem:[%s873 + $0x38] sm:$0xff]
      %v882 = vld [vmem:[%s873 + $0x40] sm:$0xff]
      %v883 = vld [vmem:[%s873 + $0x48] sm:$0xff]
      %v884 = vld [vmem:[%s873 + $0x50] sm:$0xff]
      %v885 = vld [vmem:[%s873 + $0x58] sm:$0xff]
      %v886 = vld [vmem:[%s873 + $0x60] sm:$0xff]
      %v887 = vld [vmem:[%s873 + $0x68] sm:$0xff]
      %v888 = vld [vmem:[%s873 + $0x70] sm:$0xff]
      %v889 = vld [vmem:[%s873 + $0x78] sm:$0xff]
      %v890 = vld [vmem:[%s873 + $0x80] sm:$0xff]
      %v891 = vld [vmem:[%s873 + $0x88] sm:$0xff]
      %v892 = vld [vmem:[%s873 + $0x90] sm:$0xff]
      %v893 = vld [vmem:[%s873 + $0x98] sm:$0xff]
      %v894 = vld [vmem:[%s873 + $0xa0] sm:$0xff]
      %v895 = vld [vmem:[%s873 + $0xa8] sm:$0xff]
      %v896 = vld [vmem:[%s873 + $0xb0] sm:$0xff]
      %v897 = vld [vmem:[%s873 + $0xb8] sm:$0xff]
      %v898 = vld [vmem:[%s873 + $0xc0] sm:$0xff]
      %v899 = vld [vmem:[%s873 + $0xc8] sm:$0xff]
      %v900 = vld [vmem:[%s873 + $0xd0] sm:$0xff]
      %v901 = vld [vmem:[%s873 + $0xd8] sm:$0xff]
      %v902 = vld [vmem:[%s873 + $0xe0] sm:$0xff]
      %v903 = vld [vmem:[%s873 + $0xe8] sm:$0xff]
      %v904 = vld [vmem:[%s873 + $0xf0] sm:$0xff]
      %v905 = vld [vmem:[%s873 + $0xf8] sm:$0xff]
      %v906 = vld [vmem:[%s873 + $0x100] sm:$0xff]
      %v907 = vld [vmem:[%s873 + $0x108] sm:$0xff]
      %v908 = vld [vmem:[%s873 + $0x110] sm:$0xff]
      %v909 = vld [vmem:[%s873 + $0x118] sm:$0xff]
      %v910 = vld [vmem:[%s873 + $0x120] sm:$0xff]
      %v911 = vld [vmem:[%s873 + $0x128] sm:$0xff]
      %v912 = vld [vmem:[%s873 + $0x130] sm:$0xff]
      %v913 = vld [vmem:[%s873 + $0x138] sm:$0xff]
      %v914 = vld [vmem:[%s873 + $0x140] sm:$0xff]
      %v915 = vld [vmem:[%s873 + $0x148] sm:$0xff]
      %v916 = vld [vmem:[%s873 + $0x150] sm:$0xff]
      %v917 = vld [vmem:[%s873 + $0x158] sm:$0xff]
      %v918 = vld [vmem:[%s873 + $0x160] sm:$0xff]
      %v919 = vld [vmem:[%s873 + $0x168] sm:$0xff]
      %v920 = vld [vmem:[%s873 + $0x170] sm:$0xff]
      %v921 = vld [vmem:[%s873 + $0x178] sm:$0xff]
      %v922 = vld [vmem:[%s873 + $0x180] sm:$0xff]
      %v923 = vld [vmem:[%s873 + $0x188] sm:$0xff]
      %v924 = vld [vmem:[%s873 + $0x190] sm:$0xff]
      %v925 = vld [vmem:[%s873 + $0x198] sm:$0xff]
      %v926 = vld [vmem:[%s873 + $0x1a0] sm:$0xff]
      %v927 = vld [vmem:[%s873 + $0x1a8] sm:$0xff]
      %v928 = vld [vmem:[%s873 + $0x1b0] sm:$0xff]
      %v929 = vld [vmem:[%s873 + $0x1b8] sm:$0xff]
      %v930 = vld [vmem:[%s873 + $0x1c0] sm:$0xff]
      %v931 = vld [vmem:[%s873 + $0x1c8] sm:$0xff]
      %v932 = vld [vmem:[%s873 + $0x1d0] sm:$0xff]
      %v933 = vld [vmem:[%s873 + $0x1d8] sm:$0xff]
      %v934 = vld [vmem:[%s873 + $0x1e0] sm:$0xff]
      %v935 = vld [vmem:[%s873 + $0x1e8] sm:$0xff]
      %v936 = vld [vmem:[%s873 + $0x1f0] sm:$0xff]
      %v937 = vld [vmem:[%s873 + $0x1f8] sm:$0xff]
      %v938 = vld [vmem:[%s873 + $0x200] sm:$0xff]
      %v939 = vld [vmem:[%s873 + $0x208] sm:$0xff]
      %vm944 = vcmask 1044480
      %v945 = vrot.slane %v869, 3
      %v946 = vrot.slane %v377, 3
      %v947 = vsel %vm944, %v945, %v946
      %v948 = vrot.slane %v870, 3
      %v949 = vrot.slane %v378, 3
      %v950 = vsel %vm944, %v948, %v949
      %v951 = vrot.slane %v871, 3
      %v952 = vsel %vm944, %v946, %v951
      %v953 = vrot.slane %v872, 3
      %v954 = vsel %vm944, %v949, %v953
      %v957 = vsel %vm538, %v950, 0
      %v959 = vsel %vm538, %v954, 0
      %961 = vmatprep.subr.mxu0 %v920
      %962 = vmatpush1.msra.mxu0 %v919
      %963 = vmatprep.subr.mxu0 %v917
      %964 = vmatpush1.msra.mxu0 %v916
      %965 = vmatprep.subr.mxu0 %v914
      %966 = vmatpush1.msra.mxu0 %v913
      %967 = vmatprep.subr.mxu0 %v911
      %968 = vmatpush1.msra.mxu0 %v910
      %969 = vmatprep.subr.mxu0 %v908
      %970 = vmatpush1.msra.mxu0 %v907
      %971 = vmatprep.subr.mxu0 %v905
      %972 = vmatpush1.msra.mxu0 %v904
      %973 = vmatprep.subr.mxu0 %v902
      %974 = vmatpush1.msra.mxu0 %v901
      %975 = vmatprep.subr.mxu0 %v899
      %976 = vmatpush1.msra.mxu0 %v898
      %977 = vmatprep.subr.mxu0 %v896
      %978 = vmatpush1.msra.mxu0 %v895
      %979 = vmatprep.subr.mxu0 %v893
      %980 = vmatpush1.msra.mxu0 %v892
      %981 = vmatprep.subr.mxu0 %v890
      %982 = vmatpush1.msra.mxu0 %v889
      %983 = vmatprep.subr.mxu0 %v887
      %984 = vmatpush1.msra.mxu0 %v886
      %985 = vmatprep.subr.mxu0 %v884
      %986 = vmatpush1.msra.mxu0 %v883
      %987 = vmatprep.subr.mxu0 %v881
      %988 = vmatpush1.msra.mxu0 %v880
      %989 = vmatprep.subr.mxu0 %v878
      %990 = vmatpush1.msra.mxu0 %v877
      %991 = vmatprep.subr.mxu0 %v875
      %992 = vmatpush1.msra.mxu0 %v874
      %993 = vmatprep.subr.mxu0 0.0
      %994 = vmatpush2.msra.mxu0 0.0
      %995 = vmatprep.subr.mxu0 0.0
      %996 = vmatpush2.msra.mxu0 0.0
      %997 = vmatprep.subr.mxu0 0.0
      %998 = vmatpush2.msra.mxu0 0.0
      %999 = vmatprep.subr.mxu0 0.0
      %1000 = vmatpush2.msra.mxu0 0.0
      %1001 = vmatprep.subr.mxu0 0.0
      %1002 = vmatpush2.msra.mxu0 0.0
      %1003 = vmatprep.subr.mxu0 0.0
      %1004 = vmatpush2.msra.mxu0 0.0
      %1005 = vmatprep.subr.mxu0 0.0
      %1006 = vmatpush2.msra.mxu0 0.0
      %1007 = vmatprep.subr.mxu0 0.0
      %1008 = vmatpush2.msra.mxu0 0.0
      %1009 = vmatprep.subr.mxu0 0.0
      %1010 = vmatpush2.msra.mxu0 0.0
      %1011 = vmatprep.subr.mxu0 0.0
      %1012 = vmatpush2.msra.mxu0 0.0
      %1013 = vmatprep.subr.mxu0 %v938
      %1014 = vmatpush2.msra.mxu0 %v937
      %1015 = vmatprep.subr.mxu0 %v935
      %1016 = vmatpush2.msra.mxu0 %v934
      %1017 = vmatprep.subr.mxu0 %v932
      %1018 = vmatpush2.msra.mxu0 %v931
      %1019 = vmatprep.subr.mxu0 %v929
      %1020 = vmatpush2.msra.mxu0 %v928
      %1021 = vmatprep.subr.mxu0 %v926
      %1022 = vmatpush2.msra.mxu0 %v925
      %1023 = vmatprep.subr.mxu0 %v923
      %1024 = vmatpush2.msra.mxu0 %v922
      %1025 = vmatprep.mubr.f32.mxu0 %v957
      %1026 = vmatmul.mubr.f32.gmra.mxu0 %v947
      %v1027 = vpop.f32.mrf.mxu0
      %v1028 = vadd.f32 0.0, %v1027
      %v1029 = vpop.f32.mrf.mxu0
      %v1030 = vadd.f32 0.0, %v1029
      %1031 = vmatprep.mubr.f32.mxu0 %v959
      %1032 = vmatmul.mubr.f32.gmra.mxu0 %v952
      %v1033 = vpop.f32.mrf.mxu0
      %v1034 = vadd.f32 0.0, %v1033
      %v1035 = vpop.f32.mrf.mxu0
      %v1036 = vadd.f32 0.0, %v1035
      %1037 = vdwg.mxu0
      %1038 = vmatprep.subr.mxu0 0.0
      %1039 = vmatpush1.msra.mxu0 %v921
      %1040 = vmatprep.subr.mxu0 0.0
      %1041 = vmatpush1.msra.mxu0 %v918
      %1042 = vmatprep.subr.mxu0 0.0
      %1043 = vmatpush1.msra.mxu0 %v915
      %1044 = vmatprep.subr.mxu0 0.0
      %1045 = vmatpush1.msra.mxu0 %v912
      %1046 = vmatprep.subr.mxu0 0.0
      %1047 = vmatpush1.msra.mxu0 %v909
      %1048 = vmatprep.subr.mxu0 0.0
      %1049 = vmatpush1.msra.mxu0 %v906
      %1050 = vmatprep.subr.mxu0 0.0
      %1051 = vmatpush1.msra.mxu0 %v903
      %1052 = vmatprep.subr.mxu0 0.0
      %1053 = vmatpush1.msra.mxu0 %v900
      %1054 = vmatprep.subr.mxu0 0.0
      %1055 = vmatpush1.msra.mxu0 %v897
      %1056 = vmatprep.subr.mxu0 0.0
      %1057 = vmatpush1.msra.mxu0 %v894
      %1058 = vmatprep.subr.mxu0 0.0
      %1059 = vmatpush1.msra.mxu0 %v891
      %1060 = vmatprep.subr.mxu0 0.0
      %1061 = vmatpush1.msra.mxu0 %v888
      %1062 = vmatprep.subr.mxu0 0.0
      %1063 = vmatpush1.msra.mxu0 %v885
      %1064 = vmatprep.subr.mxu0 0.0
      %1065 = vmatpush1.msra.mxu0 %v882
      %1066 = vmatprep.subr.mxu0 0.0
      %1067 = vmatpush1.msra.mxu0 %v879
      %1068 = vmatprep.subr.mxu0 0.0
      %1069 = vmatpush1.msra.mxu0 %v876
      %1070 = vmatprep.subr.mxu0 0.0
      %1071 = vmatpush2.msra.mxu0 0.0
      %1072 = vmatprep.subr.mxu0 0.0
      %1073 = vmatpush2.msra.mxu0 0.0
      %1074 = vmatprep.subr.mxu0 0.0
      %1075 = vmatpush2.msra.mxu0 0.0
      %1076 = vmatprep.subr.mxu0 0.0
      %1077 = vmatpush2.msra.mxu0 0.0
      %1078 = vmatprep.subr.mxu0 0.0
      %1079 = vmatpush2.msra.mxu0 0.0
      %1080 = vmatprep.subr.mxu0 0.0
      %1081 = vmatpush2.msra.mxu0 0.0
      %1082 = vmatprep.subr.mxu0 0.0
      %1083 = vmatpush2.msra.mxu0 0.0
      %1084 = vmatprep.subr.mxu0 0.0
      %1085 = vmatpush2.msra.mxu0 0.0
      %1086 = vmatprep.subr.mxu0 0.0
      %1087 = vmatpush2.msra.mxu0 0.0
      %1088 = vmatprep.subr.mxu0 0.0
      %1089 = vmatpush2.msra.mxu0 0.0
      %1090 = vmatprep.subr.mxu0 0.0
      %1091 = vmatpush2.msra.mxu0 %v939
      %1092 = vmatprep.subr.mxu0 0.0
      %1093 = vmatpush2.msra.mxu0 %v936
      %1094 = vmatprep.subr.mxu0 0.0
      %1095 = vmatpush2.msra.mxu0 %v933
      %1096 = vmatprep.subr.mxu0 0.0
      %1097 = vmatpush2.msra.mxu0 %v930
      %1098 = vmatprep.subr.mxu0 0.0
      %1099 = vmatpush2.msra.mxu0 %v927
      %1100 = vmatprep.subr.mxu0 0.0
      %1101 = vmatpush2.msra.mxu0 %v924
      %1102 = vmatprep.mubr.f32.mxu0 %v957
      %1103 = vmatmul.mubr.f32.gmra.mxu0 %v947
      %v1104 = vpop.f32.mrf.mxu0
      %v1105 = vadd.f32 0.0, %v1104
      %v1106 = vpop.f32.mrf.mxu0
      %1107 = vmatprep.mubr.f32.mxu0 %v959
      %1108 = vmatmul.mubr.f32.gmra.mxu0 %v952
      %v1109 = vpop.f32.mrf.mxu0
      %v1110 = vadd.f32 0.0, %v1109
      %v1111 = vpop.f32.mrf.mxu0
      %1112 = vdwg.mxu0
      %v1113 = vadd.f32 %v784, %v1028
      %v1114 = vadd.f32 %v786, %v1030
      %v1115 = vadd.f32 %v861, %v1105
      %v1116 = vadd.f32 %v790, %v1034
      %v1117 = vadd.f32 %v792, %v1036
      %v1118 = vadd.f32 %v866, %v1110
      %v1119 = vld [vmem:[%s360] sm:$0xf8]
      %v1120 = vld [vmem:[%s360 + $0x8] sm:$0xf8]
      %v1121 = vld [vmem:[%s360 + $0x20] sm:$0x7]
      %v1122 = vld [vmem:[%s360 + $0x28] sm:$0x7]
      %v1123 = vld [vmem:[%s873 + $0x210] sm:$0xff]
      %v1124 = vld [vmem:[%s873 + $0x218] sm:$0xff]
      %v1125 = vld [vmem:[%s873 + $0x220] sm:$0xff]
      %v1126 = vld [vmem:[%s873 + $0x228] sm:$0xff]
      %v1127 = vld [vmem:[%s873 + $0x230] sm:$0xff]
      %v1128 = vld [vmem:[%s873 + $0x238] sm:$0xff]
      %v1129 = vld [vmem:[%s873 + $0x240] sm:$0xff]
      %v1130 = vld [vmem:[%s873 + $0x248] sm:$0xff]
      %v1131 = vld [vmem:[%s873 + $0x250] sm:$0xff]
      %v1132 = vld [vmem:[%s873 + $0x258] sm:$0xff]
      %v1133 = vld [vmem:[%s873 + $0x260] sm:$0xff]
      %v1134 = vld [vmem:[%s873 + $0x268] sm:$0xff]
      %v1135 = vld [vmem:[%s873 + $0x270] sm:$0xff]
      %v1136 = vld [vmem:[%s873 + $0x278] sm:$0xff]
      %v1137 = vld [vmem:[%s873 + $0x280] sm:$0xff]
      %v1138 = vld [vmem:[%s873 + $0x288] sm:$0xff]
      %v1139 = vld [vmem:[%s873 + $0x290] sm:$0xff]
      %v1140 = vld [vmem:[%s873 + $0x298] sm:$0xff]
      %v1141 = vld [vmem:[%s873 + $0x2a0] sm:$0xff]
      %v1142 = vld [vmem:[%s873 + $0x2a8] sm:$0xff]
      %v1143 = vld [vmem:[%s873 + $0x2b0] sm:$0xff]
      %v1144 = vld [vmem:[%s873 + $0x2b8] sm:$0xff]
      %v1145 = vld [vmem:[%s873 + $0x2c0] sm:$0xff]
      %v1146 = vld [vmem:[%s873 + $0x2c8] sm:$0xff]
      %v1147 = vld [vmem:[%s873 + $0x2d0] sm:$0xff]
      %v1148 = vld [vmem:[%s873 + $0x2d8] sm:$0xff]
      %v1149 = vld [vmem:[%s873 + $0x2e0] sm:$0xff]
      %v1150 = vld [vmem:[%s873 + $0x2e8] sm:$0xff]
      %v1151 = vld [vmem:[%s873 + $0x2f0] sm:$0xff]
      %v1152 = vld [vmem:[%s873 + $0x2f8] sm:$0xff]
      %v1153 = vld [vmem:[%s873 + $0x300] sm:$0xff]
      %v1154 = vld [vmem:[%s873 + $0x308] sm:$0xff]
      %v1155 = vld [vmem:[%s873 + $0x310] sm:$0xff]
      %v1156 = vld [vmem:[%s873 + $0x318] sm:$0xff]
      %v1157 = vld [vmem:[%s873 + $0x320] sm:$0xff]
      %v1158 = vld [vmem:[%s873 + $0x328] sm:$0xff]
      %v1159 = vld [vmem:[%s873 + $0x330] sm:$0xff]
      %v1160 = vld [vmem:[%s873 + $0x338] sm:$0xff]
      %v1161 = vld [vmem:[%s873 + $0x340] sm:$0xff]
      %v1162 = vld [vmem:[%s873 + $0x348] sm:$0xff]
      %v1163 = vld [vmem:[%s873 + $0x350] sm:$0xff]
      %v1164 = vld [vmem:[%s873 + $0x358] sm:$0xff]
      %v1165 = vld [vmem:[%s873 + $0x360] sm:$0xff]
      %v1166 = vld [vmem:[%s873 + $0x368] sm:$0xff]
      %v1167 = vld [vmem:[%s873 + $0x370] sm:$0xff]
      %v1168 = vld [vmem:[%s873 + $0x378] sm:$0xff]
      %v1169 = vld [vmem:[%s873 + $0x380] sm:$0xff]
      %v1170 = vld [vmem:[%s873 + $0x388] sm:$0xff]
      %v1171 = vld [vmem:[%s873 + $0x390] sm:$0xff]
      %v1172 = vld [vmem:[%s873 + $0x398] sm:$0xff]
      %v1173 = vld [vmem:[%s873 + $0x3a0] sm:$0xff]
      %v1174 = vld [vmem:[%s873 + $0x3a8] sm:$0xff]
      %v1175 = vld [vmem:[%s873 + $0x3b0] sm:$0xff]
      %v1176 = vld [vmem:[%s873 + $0x3b8] sm:$0xff]
      %v1177 = vld [vmem:[%s873 + $0x3c0] sm:$0xff]
      %v1178 = vld [vmem:[%s873 + $0x3c8] sm:$0xff]
      %v1179 = vld [vmem:[%s873 + $0x3d0] sm:$0xff]
      %v1180 = vld [vmem:[%s873 + $0x3d8] sm:$0xff]
      %v1181 = vld [vmem:[%s873 + $0x3e0] sm:$0xff]
      %v1182 = vld [vmem:[%s873 + $0x3e8] sm:$0xff]
      %v1183 = vld [vmem:[%s873 + $0x3f0] sm:$0xff]
      %v1184 = vld [vmem:[%s873 + $0x3f8] sm:$0xff]
      %v1185 = vld [vmem:[%s873 + $0x400] sm:$0xff]
      %v1186 = vld [vmem:[%s873 + $0x408] sm:$0xff]
      %v1187 = vld [vmem:[%s873 + $0x410] sm:$0xff]
      %v1188 = vld [vmem:[%s873 + $0x418] sm:$0xff]
      %v1193 = vrot.slane %v1119, 3
      %v1194 = vrot.slane %v449, 3
      %v1195 = vsel %vm944, %v1193, %v1194
      %v1196 = vrot.slane %v1120, 3
      %v1197 = vrot.slane %v450, 3
      %v1198 = vsel %vm944, %v1196, %v1197
      %v1199 = vrot.slane %v1121, 3
      %v1200 = vsel %vm944, %v1194, %v1199
      %v1201 = vrot.slane %v1122, 3
      %v1202 = vsel %vm944, %v1197, %v1201
      %v1205 = vsel %vm538, %v1198, 0
      %v1207 = vsel %vm538, %v1202, 0
      %1209 = vmatprep.subr.mxu0 %v1169
      %1210 = vmatpush1.msra.mxu0 %v1168
      %1211 = vmatprep.subr.mxu0 %v1166
      %1212 = vmatpush1.msra.mxu0 %v1165
      %1213 = vmatprep.subr.mxu0 %v1163
      %1214 = vmatpush1.msra.mxu0 %v1162
      %1215 = vmatprep.subr.mxu0 %v1160
      %1216 = vmatpush1.msra.mxu0 %v1159
      %1217 = vmatprep.subr.mxu0 %v1157
      %1218 = vmatpush1.msra.mxu0 %v1156
      %1219 = vmatprep.subr.mxu0 %v1154
      %1220 = vmatpush1.msra.mxu0 %v1153
      %1221 = vmatprep.subr.mxu0 %v1151
      %1222 = vmatpush1.msra.mxu0 %v1150
      %1223 = vmatprep.subr.mxu0 %v1148
      %1224 = vmatpush1.msra.mxu0 %v1147
      %1225 = vmatprep.subr.mxu0 %v1145
      %1226 = vmatpush1.msra.mxu0 %v1144
      %1227 = vmatprep.subr.mxu0 %v1142
      %1228 = vmatpush1.msra.mxu0 %v1141
      %1229 = vmatprep.subr.mxu0 %v1139
      %1230 = vmatpush1.msra.mxu0 %v1138
      %1231 = vmatprep.subr.mxu0 %v1136
      %1232 = vmatpush1.msra.mxu0 %v1135
      %1233 = vmatprep.subr.mxu0 %v1133
      %1234 = vmatpush1.msra.mxu0 %v1132
      %1235 = vmatprep.subr.mxu0 %v1130
      %1236 = vmatpush1.msra.mxu0 %v1129
      %1237 = vmatprep.subr.mxu0 %v1127
      %1238 = vmatpush1.msra.mxu0 %v1126
      %1239 = vmatprep.subr.mxu0 %v1124
      %1240 = vmatpush1.msra.mxu0 %v1123
      %1241 = vmatprep.subr.mxu0 0.0
      %1242 = vmatpush2.msra.mxu0 0.0
      %1243 = vmatprep.subr.mxu0 0.0
      %1244 = vmatpush2.msra.mxu0 0.0
      %1245 = vmatprep.subr.mxu0 0.0
      %1246 = vmatpush2.msra.mxu0 0.0
      %1247 = vmatprep.subr.mxu0 0.0
      %1248 = vmatpush2.msra.mxu0 0.0
      %1249 = vmatprep.subr.mxu0 0.0
      %1250 = vmatpush2.msra.mxu0 0.0
      %1251 = vmatprep.subr.mxu0 0.0
      %1252 = vmatpush2.msra.mxu0 0.0
      %1253 = vmatprep.subr.mxu0 0.0
      %1254 = vmatpush2.msra.mxu0 0.0
      %1255 = vmatprep.subr.mxu0 0.0
      %1256 = vmatpush2.msra.mxu0 0.0
      %1257 = vmatprep.subr.mxu0 0.0
      %1258 = vmatpush2.msra.mxu0 0.0
      %1259 = vmatprep.subr.mxu0 0.0
      %1260 = vmatpush2.msra.mxu0 0.0
      %1261 = vmatprep.subr.mxu0 %v1187
      %1262 = vmatpush2.msra.mxu0 %v1186
      %1263 = vmatprep.subr.mxu0 %v1184
      %1264 = vmatpush2.msra.mxu0 %v1183
      %1265 = vmatprep.subr.mxu0 %v1181
      %1266 = vmatpush2.msra.mxu0 %v1180
      %1267 = vmatprep.subr.mxu0 %v1178
      %1268 = vmatpush2.msra.mxu0 %v1177
      %1269 = vmatprep.subr.mxu0 %v1175
      %1270 = vmatpush2.msra.mxu0 %v1174
      %1271 = vmatprep.subr.mxu0 %v1172
      %1272 = vmatpush2.msra.mxu0 %v1171
      %1273 = vmatprep.mubr.f32.mxu0 %v1205
      %1274 = vmatmul.mubr.f32.gmra.mxu0 %v1195
      %v1275 = vpop.f32.mrf.mxu0
      %v1276 = vadd.f32 0.0, %v1275
      %v1277 = vpop.f32.mrf.mxu0
      %v1278 = vadd.f32 0.0, %v1277
      %1279 = vmatprep.mubr.f32.mxu0 %v1207
      %1280 = vmatmul.mubr.f32.gmra.mxu0 %v1200
      %v1281 = vpop.f32.mrf.mxu0
      %v1282 = vadd.f32 0.0, %v1281
      %v1283 = vpop.f32.mrf.mxu0
      %v1284 = vadd.f32 0.0, %v1283
      %1285 = vdwg.mxu0
      %1286 = vmatprep.subr.mxu0 0.0
      %1287 = vmatpush1.msra.mxu0 %v1170
      %1288 = vmatprep.subr.mxu0 0.0
      %1289 = vmatpush1.msra.mxu0 %v1167
      %1290 = vmatprep.subr.mxu0 0.0
      %1291 = vmatpush1.msra.mxu0 %v1164
      %1292 = vmatprep.subr.mxu0 0.0
      %1293 = vmatpush1.msra.mxu0 %v1161
      %1294 = vmatprep.subr.mxu0 0.0
      %1295 = vmatpush1.msra.mxu0 %v1158
      %1296 = vmatprep.subr.mxu0 0.0
      %1297 = vmatpush1.msra.mxu0 %v1155
      %1298 = vmatprep.subr.mxu0 0.0
      %1299 = vmatpush1.msra.mxu0 %v1152
      %1300 = vmatprep.subr.mxu0 0.0
      %1301 = vmatpush1.msra.mxu0 %v1149
      %1302 = vmatprep.subr.mxu0 0.0
      %1303 = vmatpush1.msra.mxu0 %v1146
      %1304 = vmatprep.subr.mxu0 0.0
      %1305 = vmatpush1.msra.mxu0 %v1143
      %1306 = vmatprep.subr.mxu0 0.0
      %1307 = vmatpush1.msra.mxu0 %v1140
      %1308 = vmatprep.subr.mxu0 0.0
      %1309 = vmatpush1.msra.mxu0 %v1137
      %1310 = vmatprep.subr.mxu0 0.0
      %1311 = vmatpush1.msra.mxu0 %v1134
      %1312 = vmatprep.subr.mxu0 0.0
      %1313 = vmatpush1.msra.mxu0 %v1131
      %1314 = vmatprep.subr.mxu0 0.0
      %1315 = vmatpush1.msra.mxu0 %v1128
      %1316 = vmatprep.subr.mxu0 0.0
      %1317 = vmatpush1.msra.mxu0 %v1125
      %1318 = vmatprep.subr.mxu0 0.0
      %1319 = vmatpush2.msra.mxu0 0.0
      %1320 = vmatprep.subr.mxu0 0.0
      %1321 = vmatpush2.msra.mxu0 0.0
      %1322 = vmatprep.subr.mxu0 0.0
      %1323 = vmatpush2.msra.mxu0 0.0
      %1324 = vmatprep.subr.mxu0 0.0
      %1325 = vmatpush2.msra.mxu0 0.0
      %1326 = vmatprep.subr.mxu0 0.0
      %1327 = vmatpush2.msra.mxu0 0.0
      %1328 = vmatprep.subr.mxu0 0.0
      %1329 = vmatpush2.msra.mxu0 0.0
      %1330 = vmatprep.subr.mxu0 0.0
      %1331 = vmatpush2.msra.mxu0 0.0
      %1332 = vmatprep.subr.mxu0 0.0
      %1333 = vmatpush2.msra.mxu0 0.0
      %1334 = vmatprep.subr.mxu0 0.0
      %1335 = vmatpush2.msra.mxu0 0.0
      %1336 = vmatprep.subr.mxu0 0.0
      %1337 = vmatpush2.msra.mxu0 0.0
      %1338 = vmatprep.subr.mxu0 0.0
      %1339 = vmatpush2.msra.mxu0 %v1188
      %1340 = vmatprep.subr.mxu0 0.0
      %1341 = vmatpush2.msra.mxu0 %v1185
      %1342 = vmatprep.subr.mxu0 0.0
      %1343 = vmatpush2.msra.mxu0 %v1182
      %1344 = vmatprep.subr.mxu0 0.0
      %1345 = vmatpush2.msra.mxu0 %v1179
      %1346 = vmatprep.subr.mxu0 0.0
      %1347 = vmatpush2.msra.mxu0 %v1176
      %1348 = vmatprep.subr.mxu0 0.0
      %1349 = vmatpush2.msra.mxu0 %v1173
      %1350 = vmatprep.mubr.f32.mxu0 %v1205
      %1351 = vmatmul.mubr.f32.gmra.mxu0 %v1195
      %v1352 = vpop.f32.mrf.mxu0
      %v1353 = vadd.f32 0.0, %v1352
      %v1354 = vpop.f32.mrf.mxu0
      %1355 = vmatprep.mubr.f32.mxu0 %v1207
      %1356 = vmatmul.mubr.f32.gmra.mxu0 %v1200
      %v1357 = vpop.f32.mrf.mxu0
      %v1358 = vadd.f32 0.0, %v1357
      %v1359 = vpop.f32.mrf.mxu0
      %1360 = vdwg.mxu0
      %v1361 = vadd.f32 %v1113, %v1276
      %v1362 = vadd.f32 %v1114, %v1278
      %v1363 = vadd.f32 %v1115, %v1353
      %v1364 = vadd.f32 %v1116, %v1282
      %v1365 = vadd.f32 %v1117, %v1284
      %v1366 = vadd.f32 %v1118, %v1358
      %v1367 = vld [vmem:[%s351] sm:$0xf0]
      %v1368 = vld [vmem:[%s351 + $0x8] sm:$0xf0]
      %v1369 = vld [vmem:[%s351 + $0x20] sm:$0xf]
      %v1370 = vld [vmem:[%s351 + $0x28] sm:$0xf]
      %s1371 = scalar_lea.vmem %s2, 2112
      %v1372 = vld [vmem:[%s1371] sm:$0xff]
      %v1373 = vld [vmem:[%s1371 + $0x8] sm:$0xff]
      %v1374 = vld [vmem:[%s1371 + $0x10] sm:$0xff]
      %v1375 = vld [vmem:[%s1371 + $0x18] sm:$0xff]
      %v1376 = vld [vmem:[%s1371 + $0x20] sm:$0xff]
      %v1377 = vld [vmem:[%s1371 + $0x28] sm:$0xff]
      %v1378 = vld [vmem:[%s1371 + $0x30] sm:$0xff]
      %v1379 = vld [vmem:[%s1371 + $0x38] sm:$0xff]
      %v1380 = vld [vmem:[%s1371 + $0x40] sm:$0xff]
      %v1381 = vld [vmem:[%s1371 + $0x48] sm:$0xff]
      %v1382 = vld [vmem:[%s1371 + $0x50] sm:$0xff]
      %v1383 = vld [vmem:[%s1371 + $0x58] sm:$0xff]
      %v1384 = vld [vmem:[%s1371 + $0x60] sm:$0xff]
      %v1385 = vld [vmem:[%s1371 + $0x68] sm:$0xff]
      %v1386 = vld [vmem:[%s1371 + $0x70] sm:$0xff]
      %v1387 = vld [vmem:[%s1371 + $0x78] sm:$0xff]
      %v1388 = vld [vmem:[%s1371 + $0x80] sm:$0xff]
      %v1389 = vld [vmem:[%s1371 + $0x88] sm:$0xff]
      %v1390 = vld [vmem:[%s1371 + $0x90] sm:$0xff]
      %v1391 = vld [vmem:[%s1371 + $0x98] sm:$0xff]
      %v1392 = vld [vmem:[%s1371 + $0xa0] sm:$0xff]
      %v1393 = vld [vmem:[%s1371 + $0xa8] sm:$0xff]
      %v1394 = vld [vmem:[%s1371 + $0xb0] sm:$0xff]
      %v1395 = vld [vmem:[%s1371 + $0xb8] sm:$0xff]
      %v1396 = vld [vmem:[%s1371 + $0xc0] sm:$0xff]
      %v1397 = vld [vmem:[%s1371 + $0xc8] sm:$0xff]
      %v1398 = vld [vmem:[%s1371 + $0xd0] sm:$0xff]
      %v1399 = vld [vmem:[%s1371 + $0xd8] sm:$0xff]
      %v1400 = vld [vmem:[%s1371 + $0xe0] sm:$0xff]
      %v1401 = vld [vmem:[%s1371 + $0xe8] sm:$0xff]
      %v1402 = vld [vmem:[%s1371 + $0xf0] sm:$0xff]
      %v1403 = vld [vmem:[%s1371 + $0xf8] sm:$0xff]
      %v1404 = vld [vmem:[%s1371 + $0x100] sm:$0xff]
      %v1405 = vld [vmem:[%s1371 + $0x108] sm:$0xff]
      %v1406 = vld [vmem:[%s1371 + $0x110] sm:$0xff]
      %v1407 = vld [vmem:[%s1371 + $0x118] sm:$0xff]
      %v1408 = vld [vmem:[%s1371 + $0x120] sm:$0xff]
      %v1409 = vld [vmem:[%s1371 + $0x128] sm:$0xff]
      %v1410 = vld [vmem:[%s1371 + $0x130] sm:$0xff]
      %v1411 = vld [vmem:[%s1371 + $0x138] sm:$0xff]
      %v1412 = vld [vmem:[%s1371 + $0x140] sm:$0xff]
      %v1413 = vld [vmem:[%s1371 + $0x148] sm:$0xff]
      %v1414 = vld [vmem:[%s1371 + $0x150] sm:$0xff]
      %v1415 = vld [vmem:[%s1371 + $0x158] sm:$0xff]
      %v1416 = vld [vmem:[%s1371 + $0x160] sm:$0xff]
      %v1417 = vld [vmem:[%s1371 + $0x168] sm:$0xff]
      %v1418 = vld [vmem:[%s1371 + $0x170] sm:$0xff]
      %v1419 = vld [vmem:[%s1371 + $0x178] sm:$0xff]
      %v1420 = vld [vmem:[%s1371 + $0x180] sm:$0xff]
      %v1421 = vld [vmem:[%s1371 + $0x188] sm:$0xff]
      %v1422 = vld [vmem:[%s1371 + $0x190] sm:$0xff]
      %v1423 = vld [vmem:[%s1371 + $0x198] sm:$0xff]
      %v1424 = vld [vmem:[%s1371 + $0x1a0] sm:$0xff]
      %v1425 = vld [vmem:[%s1371 + $0x1a8] sm:$0xff]
      %v1426 = vld [vmem:[%s1371 + $0x1b0] sm:$0xff]
      %v1427 = vld [vmem:[%s1371 + $0x1b8] sm:$0xff]
      %v1428 = vld [vmem:[%s1371 + $0x1c0] sm:$0xff]
      %v1429 = vld [vmem:[%s1371 + $0x1c8] sm:$0xff]
      %v1430 = vld [vmem:[%s1371 + $0x1d0] sm:$0xff]
      %v1431 = vld [vmem:[%s1371 + $0x1d8] sm:$0xff]
      %v1432 = vld [vmem:[%s1371 + $0x1e0] sm:$0xff]
      %v1433 = vld [vmem:[%s1371 + $0x1e8] sm:$0xff]
      %v1434 = vld [vmem:[%s1371 + $0x1f0] sm:$0xff]
      %v1435 = vld [vmem:[%s1371 + $0x1f8] sm:$0xff]
      %v1436 = vld [vmem:[%s1371 + $0x200] sm:$0xff]
      %v1437 = vld [vmem:[%s1371 + $0x208] sm:$0xff]
      %vm1442 = vcmask 1043456
      %v1443 = vrot.slane %v1367, 4
      %v1444 = vrot.slane %v377, 4
      %v1445 = vsel %vm1442, %v1443, %v1444
      %v1446 = vrot.slane %v1368, 4
      %v1447 = vrot.slane %v378, 4
      %v1448 = vsel %vm1442, %v1446, %v1447
      %v1449 = vrot.slane %v1369, 4
      %v1450 = vsel %vm1442, %v1444, %v1449
      %v1451 = vrot.slane %v1370, 4
      %v1452 = vsel %vm1442, %v1447, %v1451
      %v1455 = vsel %vm538, %v1448, 0
      %v1457 = vsel %vm538, %v1452, 0
      %1459 = vmatprep.subr.mxu0 %v1418
      %1460 = vmatpush1.msra.mxu0 %v1417
      %1461 = vmatprep.subr.mxu0 %v1415
      %1462 = vmatpush1.msra.mxu0 %v1414
      %1463 = vmatprep.subr.mxu0 %v1412
      %1464 = vmatpush1.msra.mxu0 %v1411
      %1465 = vmatprep.subr.mxu0 %v1409
      %1466 = vmatpush1.msra.mxu0 %v1408
      %1467 = vmatprep.subr.mxu0 %v1406
      %1468 = vmatpush1.msra.mxu0 %v1405
      %1469 = vmatprep.subr.mxu0 %v1403
      %1470 = vmatpush1.msra.mxu0 %v1402
      %1471 = vmatprep.subr.mxu0 %v1400
      %1472 = vmatpush1.msra.mxu0 %v1399
      %1473 = vmatprep.subr.mxu0 %v1397
      %1474 = vmatpush1.msra.mxu0 %v1396
      %1475 = vmatprep.subr.mxu0 %v1394
      %1476 = vmatpush1.msra.mxu0 %v1393
      %1477 = vmatprep.subr.mxu0 %v1391
      %1478 = vmatpush1.msra.mxu0 %v1390
      %1479 = vmatprep.subr.mxu0 %v1388
      %1480 = vmatpush1.msra.mxu0 %v1387
      %1481 = vmatprep.subr.mxu0 %v1385
      %1482 = vmatpush1.msra.mxu0 %v1384
      %1483 = vmatprep.subr.mxu0 %v1382
      %1484 = vmatpush1.msra.mxu0 %v1381
      %1485 = vmatprep.subr.mxu0 %v1379
      %1486 = vmatpush1.msra.mxu0 %v1378
      %1487 = vmatprep.subr.mxu0 %v1376
      %1488 = vmatpush1.msra.mxu0 %v1375
      %1489 = vmatprep.subr.mxu0 %v1373
      %1490 = vmatpush1.msra.mxu0 %v1372
      %1491 = vmatprep.subr.mxu0 0.0
      %1492 = vmatpush2.msra.mxu0 0.0
      %1493 = vmatprep.subr.mxu0 0.0
      %1494 = vmatpush2.msra.mxu0 0.0
      %1495 = vmatprep.subr.mxu0 0.0
      %1496 = vmatpush2.msra.mxu0 0.0
      %1497 = vmatprep.subr.mxu0 0.0
      %1498 = vmatpush2.msra.mxu0 0.0
      %1499 = vmatprep.subr.mxu0 0.0
      %1500 = vmatpush2.msra.mxu0 0.0
      %1501 = vmatprep.subr.mxu0 0.0
      %1502 = vmatpush2.msra.mxu0 0.0
      %1503 = vmatprep.subr.mxu0 0.0
      %1504 = vmatpush2.msra.mxu0 0.0
      %1505 = vmatprep.subr.mxu0 0.0
      %1506 = vmatpush2.msra.mxu0 0.0
      %1507 = vmatprep.subr.mxu0 0.0
      %1508 = vmatpush2.msra.mxu0 0.0
      %1509 = vmatprep.subr.mxu0 0.0
      %1510 = vmatpush2.msra.mxu0 0.0
      %1511 = vmatprep.subr.mxu0 %v1436
      %1512 = vmatpush2.msra.mxu0 %v1435
      %1513 = vmatprep.subr.mxu0 %v1433
      %1514 = vmatpush2.msra.mxu0 %v1432
      %1515 = vmatprep.subr.mxu0 %v1430
      %1516 = vmatpush2.msra.mxu0 %v1429
      %1517 = vmatprep.subr.mxu0 %v1427
      %1518 = vmatpush2.msra.mxu0 %v1426
      %1519 = vmatprep.subr.mxu0 %v1424
      %1520 = vmatpush2.msra.mxu0 %v1423
      %1521 = vmatprep.subr.mxu0 %v1421
      %1522 = vmatpush2.msra.mxu0 %v1420
      %1523 = vmatprep.mubr.f32.mxu0 %v1455
      %1524 = vmatmul.mubr.f32.gmra.mxu0 %v1445
      %v1525 = vpop.f32.mrf.mxu0
      %v1526 = vadd.f32 0.0, %v1525
      %v1527 = vpop.f32.mrf.mxu0
      %v1528 = vadd.f32 0.0, %v1527
      %1529 = vmatprep.mubr.f32.mxu0 %v1457
      %1530 = vmatmul.mubr.f32.gmra.mxu0 %v1450
      %v1531 = vpop.f32.mrf.mxu0
      %v1532 = vadd.f32 0.0, %v1531
      %v1533 = vpop.f32.mrf.mxu0
      %v1534 = vadd.f32 0.0, %v1533
      %1535 = vdwg.mxu0
      %1536 = vmatprep.subr.mxu0 0.0
      %1537 = vmatpush1.msra.mxu0 %v1419
      %1538 = vmatprep.subr.mxu0 0.0
      %1539 = vmatpush1.msra.mxu0 %v1416
      %1540 = vmatprep.subr.mxu0 0.0
      %1541 = vmatpush1.msra.mxu0 %v1413
      %1542 = vmatprep.subr.mxu0 0.0
      %1543 = vmatpush1.msra.mxu0 %v1410
      %1544 = vmatprep.subr.mxu0 0.0
      %1545 = vmatpush1.msra.mxu0 %v1407
      %1546 = vmatprep.subr.mxu0 0.0
      %1547 = vmatpush1.msra.mxu0 %v1404
      %1548 = vmatprep.subr.mxu0 0.0
      %1549 = vmatpush1.msra.mxu0 %v1401
      %1550 = vmatprep.subr.mxu0 0.0
      %1551 = vmatpush1.msra.mxu0 %v1398
      %1552 = vmatprep.subr.mxu0 0.0
      %1553 = vmatpush1.msra.mxu0 %v1395
      %1554 = vmatprep.subr.mxu0 0.0
      %1555 = vmatpush1.msra.mxu0 %v1392
      %1556 = vmatprep.subr.mxu0 0.0
      %1557 = vmatpush1.msra.mxu0 %v1389
      %1558 = vmatprep.subr.mxu0 0.0
      %1559 = vmatpush1.msra.mxu0 %v1386
      %1560 = vmatprep.subr.mxu0 0.0
      %1561 = vmatpush1.msra.mxu0 %v1383
      %1562 = vmatprep.subr.mxu0 0.0
      %1563 = vmatpush1.msra.mxu0 %v1380
      %1564 = vmatprep.subr.mxu0 0.0
      %1565 = vmatpush1.msra.mxu0 %v1377
      %1566 = vmatprep.subr.mxu0 0.0
      %1567 = vmatpush1.msra.mxu0 %v1374
      %1568 = vmatprep.subr.mxu0 0.0
      %1569 = vmatpush2.msra.mxu0 0.0
      %1570 = vmatprep.subr.mxu0 0.0
      %1571 = vmatpush2.msra.mxu0 0.0
      %1572 = vmatprep.subr.mxu0 0.0
      %1573 = vmatpush2.msra.mxu0 0.0
      %1574 = vmatprep.subr.mxu0 0.0
      %1575 = vmatpush2.msra.mxu0 0.0
      %1576 = vmatprep.subr.mxu0 0.0
      %1577 = vmatpush2.msra.mxu0 0.0
      %1578 = vmatprep.subr.mxu0 0.0
      %1579 = vmatpush2.msra.mxu0 0.0
      %1580 = vmatprep.subr.mxu0 0.0
      %1581 = vmatpush2.msra.mxu0 0.0
      %1582 = vmatprep.subr.mxu0 0.0
      %1583 = vmatpush2.msra.mxu0 0.0
      %1584 = vmatprep.subr.mxu0 0.0
      %1585 = vmatpush2.msra.mxu0 0.0
      %1586 = vmatprep.subr.mxu0 0.0
      %1587 = vmatpush2.msra.mxu0 0.0
      %1588 = vmatprep.subr.mxu0 0.0
      %1589 = vmatpush2.msra.mxu0 %v1437
      %1590 = vmatprep.subr.mxu0 0.0
      %1591 = vmatpush2.msra.mxu0 %v1434
      %1592 = vmatprep.subr.mxu0 0.0
      %1593 = vmatpush2.msra.mxu0 %v1431
      %1594 = vmatprep.subr.mxu0 0.0
      %1595 = vmatpush2.msra.mxu0 %v1428
      %1596 = vmatprep.subr.mxu0 0.0
      %1597 = vmatpush2.msra.mxu0 %v1425
      %1598 = vmatprep.subr.mxu0 0.0
      %1599 = vmatpush2.msra.mxu0 %v1422
      %1600 = vmatprep.mubr.f32.mxu0 %v1455
      %1601 = vmatmul.mubr.f32.gmra.mxu0 %v1445
      %v1602 = vpop.f32.mrf.mxu0
      %v1603 = vadd.f32 0.0, %v1602
      %v1604 = vpop.f32.mrf.mxu0
      %1605 = vmatprep.mubr.f32.mxu0 %v1457
      %1606 = vmatmul.mubr.f32.gmra.mxu0 %v1450
      %v1607 = vpop.f32.mrf.mxu0
      %v1608 = vadd.f32 0.0, %v1607
      %v1609 = vpop.f32.mrf.mxu0
      %1610 = vdwg.mxu0
      %v1611 = vadd.f32 %v1361, %v1526
      %v1612 = vadd.f32 %v1362, %v1528
      %v1613 = vadd.f32 %v1363, %v1603
      %v1614 = vadd.f32 %v1364, %v1532
      %v1615 = vadd.f32 %v1365, %v1534
      %v1616 = vadd.f32 %v1366, %v1608
      %v1617 = vld [vmem:[%s360] sm:$0xf0]
      %v1618 = vld [vmem:[%s360 + $0x8] sm:$0xf0]
      %v1619 = vld [vmem:[%s360 + $0x20] sm:$0xf]
      %v1620 = vld [vmem:[%s360 + $0x28] sm:$0xf]
      %v1621 = vld [vmem:[%s1371 + $0x210] sm:$0xff]
      %v1622 = vld [vmem:[%s1371 + $0x218] sm:$0xff]
      %v1623 = vld [vmem:[%s1371 + $0x220] sm:$0xff]
      %v1624 = vld [vmem:[%s1371 + $0x228] sm:$0xff]
      %v1625 = vld [vmem:[%s1371 + $0x230] sm:$0xff]
      %v1626 = vld [vmem:[%s1371 + $0x238] sm:$0xff]
      %v1627 = vld [vmem:[%s1371 + $0x240] sm:$0xff]
      %v1628 = vld [vmem:[%s1371 + $0x248] sm:$0xff]
      %v1629 = vld [vmem:[%s1371 + $0x250] sm:$0xff]
      %v1630 = vld [vmem:[%s1371 + $0x258] sm:$0xff]
      %v1631 = vld [vmem:[%s1371 + $0x260] sm:$0xff]
      %v1632 = vld [vmem:[%s1371 + $0x268] sm:$0xff]
      %v1633 = vld [vmem:[%s1371 + $0x270] sm:$0xff]
      %v1634 = vld [vmem:[%s1371 + $0x278] sm:$0xff]
      %v1635 = vld [vmem:[%s1371 + $0x280] sm:$0xff]
      %v1636 = vld [vmem:[%s1371 + $0x288] sm:$0xff]
      %v1637 = vld [vmem:[%s1371 + $0x290] sm:$0xff]
      %v1638 = vld [vmem:[%s1371 + $0x298] sm:$0xff]
      %v1639 = vld [vmem:[%s1371 + $0x2a0] sm:$0xff]
      %v1640 = vld [vmem:[%s1371 + $0x2a8] sm:$0xff]
      %v1641 = vld [vmem:[%s1371 + $0x2b0] sm:$0xff]
      %v1642 = vld [vmem:[%s1371 + $0x2b8] sm:$0xff]
      %v1643 = vld [vmem:[%s1371 + $0x2c0] sm:$0xff]
      %v1644 = vld [vmem:[%s1371 + $0x2c8] sm:$0xff]
      %v1645 = vld [vmem:[%s1371 + $0x2d0] sm:$0xff]
      %v1646 = vld [vmem:[%s1371 + $0x2d8] sm:$0xff]
      %v1647 = vld [vmem:[%s1371 + $0x2e0] sm:$0xff]
      %v1648 = vld [vmem:[%s1371 + $0x2e8] sm:$0xff]
      %v1649 = vld [vmem:[%s1371 + $0x2f0] sm:$0xff]
      %v1650 = vld [vmem:[%s1371 + $0x2f8] sm:$0xff]
      %v1651 = vld [vmem:[%s1371 + $0x300] sm:$0xff]
      %v1652 = vld [vmem:[%s1371 + $0x308] sm:$0xff]
      %v1653 = vld [vmem:[%s1371 + $0x310] sm:$0xff]
      %v1654 = vld [vmem:[%s1371 + $0x318] sm:$0xff]
      %v1655 = vld [vmem:[%s1371 + $0x320] sm:$0xff]
      %v1656 = vld [vmem:[%s1371 + $0x328] sm:$0xff]
      %v1657 = vld [vmem:[%s1371 + $0x330] sm:$0xff]
      %v1658 = vld [vmem:[%s1371 + $0x338] sm:$0xff]
      %v1659 = vld [vmem:[%s1371 + $0x340] sm:$0xff]
      %v1660 = vld [vmem:[%s1371 + $0x348] sm:$0xff]
      %v1661 = vld [vmem:[%s1371 + $0x350] sm:$0xff]
      %v1662 = vld [vmem:[%s1371 + $0x358] sm:$0xff]
      %v1663 = vld [vmem:[%s1371 + $0x360] sm:$0xff]
      %v1664 = vld [vmem:[%s1371 + $0x368] sm:$0xff]
      %v1665 = vld [vmem:[%s1371 + $0x370] sm:$0xff]
      %v1666 = vld [vmem:[%s1371 + $0x378] sm:$0xff]
      %v1667 = vld [vmem:[%s1371 + $0x380] sm:$0xff]
      %v1668 = vld [vmem:[%s1371 + $0x388] sm:$0xff]
      %v1669 = vld [vmem:[%s1371 + $0x390] sm:$0xff]
      %v1670 = vld [vmem:[%s1371 + $0x398] sm:$0xff]
      %v1671 = vld [vmem:[%s1371 + $0x3a0] sm:$0xff]
      %v1672 = vld [vmem:[%s1371 + $0x3a8] sm:$0xff]
      %v1673 = vld [vmem:[%s1371 + $0x3b0] sm:$0xff]
      %v1674 = vld [vmem:[%s1371 + $0x3b8] sm:$0xff]
      %v1675 = vld [vmem:[%s1371 + $0x3c0] sm:$0xff]
      %v1676 = vld [vmem:[%s1371 + $0x3c8] sm:$0xff]
      %v1677 = vld [vmem:[%s1371 + $0x3d0] sm:$0xff]
      %v1678 = vld [vmem:[%s1371 + $0x3d8] sm:$0xff]
      %v1679 = vld [vmem:[%s1371 + $0x3e0] sm:$0xff]
      %v1680 = vld [vmem:[%s1371 + $0x3e8] sm:$0xff]
      %v1681 = vld [vmem:[%s1371 + $0x3f0] sm:$0xff]
      %v1682 = vld [vmem:[%s1371 + $0x3f8] sm:$0xff]
      %v1683 = vld [vmem:[%s1371 + $0x400] sm:$0xff]
      %v1684 = vld [vmem:[%s1371 + $0x408] sm:$0xff]
      %v1685 = vld [vmem:[%s1371 + $0x410] sm:$0xff]
      %v1686 = vld [vmem:[%s1371 + $0x418] sm:$0xff]
      %v1691 = vrot.slane %v1617, 4
      %v1692 = vrot.slane %v449, 4
      %v1693 = vsel %vm1442, %v1691, %v1692
      %v1694 = vrot.slane %v1618, 4
      %v1695 = vrot.slane %v450, 4
      %v1696 = vsel %vm1442, %v1694, %v1695
      %v1697 = vrot.slane %v1619, 4
      %v1698 = vsel %vm1442, %v1692, %v1697
      %v1699 = vrot.slane %v1620, 4
      %v1700 = vsel %vm1442, %v1695, %v1699
      %v1703 = vsel %vm538, %v1696, 0
      %v1705 = vsel %vm538, %v1700, 0
      %1707 = vmatprep.subr.mxu0 %v1667
      %1708 = vmatpush1.msra.mxu0 %v1666
      %1709 = vmatprep.subr.mxu0 %v1664
      %1710 = vmatpush1.msra.mxu0 %v1663
      %1711 = vmatprep.subr.mxu0 %v1661
      %1712 = vmatpush1.msra.mxu0 %v1660
      %1713 = vmatprep.subr.mxu0 %v1658
      %1714 = vmatpush1.msra.mxu0 %v1657
      %1715 = vmatprep.subr.mxu0 %v1655
      %1716 = vmatpush1.msra.mxu0 %v1654
      %1717 = vmatprep.subr.mxu0 %v1652
      %1718 = vmatpush1.msra.mxu0 %v1651
      %1719 = vmatprep.subr.mxu0 %v1649
      %1720 = vmatpush1.msra.mxu0 %v1648
      %1721 = vmatprep.subr.mxu0 %v1646
      %1722 = vmatpush1.msra.mxu0 %v1645
      %1723 = vmatprep.subr.mxu0 %v1643
      %1724 = vmatpush1.msra.mxu0 %v1642
      %1725 = vmatprep.subr.mxu0 %v1640
      %1726 = vmatpush1.msra.mxu0 %v1639
      %1727 = vmatprep.subr.mxu0 %v1637
      %1728 = vmatpush1.msra.mxu0 %v1636
      %1729 = vmatprep.subr.mxu0 %v1634
      %1730 = vmatpush1.msra.mxu0 %v1633
      %1731 = vmatprep.subr.mxu0 %v1631
      %1732 = vmatpush1.msra.mxu0 %v1630
      %1733 = vmatprep.subr.mxu0 %v1628
      %1734 = vmatpush1.msra.mxu0 %v1627
      %1735 = vmatprep.subr.mxu0 %v1625
      %1736 = vmatpush1.msra.mxu0 %v1624
      %1737 = vmatprep.subr.mxu0 %v1622
      %1738 = vmatpush1.msra.mxu0 %v1621
      %1739 = vmatprep.subr.mxu0 0.0
      %1740 = vmatpush2.msra.mxu0 0.0
      %1741 = vmatprep.subr.mxu0 0.0
      %1742 = vmatpush2.msra.mxu0 0.0
      %1743 = vmatprep.subr.mxu0 0.0
      %1744 = vmatpush2.msra.mxu0 0.0
      %1745 = vmatprep.subr.mxu0 0.0
      %1746 = vmatpush2.msra.mxu0 0.0
      %1747 = vmatprep.subr.mxu0 0.0
      %1748 = vmatpush2.msra.mxu0 0.0
      %1749 = vmatprep.subr.mxu0 0.0
      %1750 = vmatpush2.msra.mxu0 0.0
      %1751 = vmatprep.subr.mxu0 0.0
      %1752 = vmatpush2.msra.mxu0 0.0
      %1753 = vmatprep.subr.mxu0 0.0
      %1754 = vmatpush2.msra.mxu0 0.0
      %1755 = vmatprep.subr.mxu0 0.0
      %1756 = vmatpush2.msra.mxu0 0.0
      %1757 = vmatprep.subr.mxu0 0.0
      %1758 = vmatpush2.msra.mxu0 0.0
      %1759 = vmatprep.subr.mxu0 %v1685
      %1760 = vmatpush2.msra.mxu0 %v1684
      %1761 = vmatprep.subr.mxu0 %v1682
      %1762 = vmatpush2.msra.mxu0 %v1681
      %1763 = vmatprep.subr.mxu0 %v1679
      %1764 = vmatpush2.msra.mxu0 %v1678
      %1765 = vmatprep.subr.mxu0 %v1676
      %1766 = vmatpush2.msra.mxu0 %v1675
      %1767 = vmatprep.subr.mxu0 %v1673
      %1768 = vmatpush2.msra.mxu0 %v1672
      %1769 = vmatprep.subr.mxu0 %v1670
      %1770 = vmatpush2.msra.mxu0 %v1669
      %1771 = vmatprep.mubr.f32.mxu0 %v1703
      %1772 = vmatmul.mubr.f32.gmra.mxu0 %v1693
      %v1773 = vpop.f32.mrf.mxu0
      %v1774 = vadd.f32 0.0, %v1773
      %v1775 = vpop.f32.mrf.mxu0
      %v1776 = vadd.f32 0.0, %v1775
      %1777 = vmatprep.mubr.f32.mxu0 %v1705
      %1778 = vmatmul.mubr.f32.gmra.mxu0 %v1698
      %v1779 = vpop.f32.mrf.mxu0
      %v1780 = vadd.f32 0.0, %v1779
      %v1781 = vpop.f32.mrf.mxu0
      %v1782 = vadd.f32 0.0, %v1781
      %1783 = vdwg.mxu0
      %1784 = vmatprep.subr.mxu0 0.0
      %1785 = vmatpush1.msra.mxu0 %v1668
      %1786 = vmatprep.subr.mxu0 0.0
      %1787 = vmatpush1.msra.mxu0 %v1665
      %1788 = vmatprep.subr.mxu0 0.0
      %1789 = vmatpush1.msra.mxu0 %v1662
      %1790 = vmatprep.subr.mxu0 0.0
      %1791 = vmatpush1.msra.mxu0 %v1659
      %1792 = vmatprep.subr.mxu0 0.0
      %1793 = vmatpush1.msra.mxu0 %v1656
      %1794 = vmatprep.subr.mxu0 0.0
      %1795 = vmatpush1.msra.mxu0 %v1653
      %1796 = vmatprep.subr.mxu0 0.0
      %1797 = vmatpush1.msra.mxu0 %v1650
      %1798 = vmatprep.subr.mxu0 0.0
      %1799 = vmatpush1.msra.mxu0 %v1647
      %1800 = vmatprep.subr.mxu0 0.0
      %1801 = vmatpush1.msra.mxu0 %v1644
      %1802 = vmatprep.subr.mxu0 0.0
      %1803 = vmatpush1.msra.mxu0 %v1641
      %1804 = vmatprep.subr.mxu0 0.0
      %1805 = vmatpush1.msra.mxu0 %v1638
      %1806 = vmatprep.subr.mxu0 0.0
      %1807 = vmatpush1.msra.mxu0 %v1635
      %1808 = vmatprep.subr.mxu0 0.0
      %1809 = vmatpush1.msra.mxu0 %v1632
      %1810 = vmatprep.subr.mxu0 0.0
      %1811 = vmatpush1.msra.mxu0 %v1629
      %1812 = vmatprep.subr.mxu0 0.0
      %1813 = vmatpush1.msra.mxu0 %v1626
      %1814 = vmatprep.subr.mxu0 0.0
      %1815 = vmatpush1.msra.mxu0 %v1623
      %1816 = vmatprep.subr.mxu0 0.0
      %1817 = vmatpush2.msra.mxu0 0.0
      %1818 = vmatprep.subr.mxu0 0.0
      %1819 = vmatpush2.msra.mxu0 0.0
      %1820 = vmatprep.subr.mxu0 0.0
      %1821 = vmatpush2.msra.mxu0 0.0
      %1822 = vmatprep.subr.mxu0 0.0
      %1823 = vmatpush2.msra.mxu0 0.0
      %1824 = vmatprep.subr.mxu0 0.0
      %1825 = vmatpush2.msra.mxu0 0.0
      %1826 = vmatprep.subr.mxu0 0.0
      %1827 = vmatpush2.msra.mxu0 0.0
      %1828 = vmatprep.subr.mxu0 0.0
      %1829 = vmatpush2.msra.mxu0 0.0
      %1830 = vmatprep.subr.mxu0 0.0
      %1831 = vmatpush2.msra.mxu0 0.0
      %1832 = vmatprep.subr.mxu0 0.0
      %1833 = vmatpush2.msra.mxu0 0.0
      %1834 = vmatprep.subr.mxu0 0.0
      %1835 = vmatpush2.msra.mxu0 0.0
      %1836 = vmatprep.subr.mxu0 0.0
      %1837 = vmatpush2.msra.mxu0 %v1686
      %1838 = vmatprep.subr.mxu0 0.0
      %1839 = vmatpush2.msra.mxu0 %v1683
      %1840 = vmatprep.subr.mxu0 0.0
      %1841 = vmatpush2.msra.mxu0 %v1680
      %1842 = vmatprep.subr.mxu0 0.0
      %1843 = vmatpush2.msra.mxu0 %v1677
      %1844 = vmatprep.subr.mxu0 0.0
      %1845 = vmatpush2.msra.mxu0 %v1674
      %1846 = vmatprep.subr.mxu0 0.0
      %1847 = vmatpush2.msra.mxu0 %v1671
      %1848 = vmatprep.mubr.f32.mxu0 %v1703
      %1849 = vmatmul.mubr.f32.gmra.mxu0 %v1693
      %v1850 = vpop.f32.mrf.mxu0
      %v1851 = vadd.f32 0.0, %v1850
      %v1852 = vpop.f32.mrf.mxu0
      %1853 = vmatprep.mubr.f32.mxu0 %v1705
      %1854 = vmatmul.mubr.f32.gmra.mxu0 %v1698
      %v1855 = vpop.f32.mrf.mxu0
      %v1856 = vadd.f32 0.0, %v1855
      %v1857 = vpop.f32.mrf.mxu0
      %1858 = vdwg.mxu0
      %v1859 = vadd.f32 %v1611, %v1774
      %v1860 = vadd.f32 %v1612, %v1776
      %v1861 = vadd.f32 %v1613, %v1851
      %v1862 = vadd.f32 %v1614, %v1780
      %v1863 = vadd.f32 %v1615, %v1782
      %v1864 = vadd.f32 %v1616, %v1856
      %v1865 = vld [vmem:[%s3] sm:$0x7]
      %v1867 = vlaneseq
      %v1868 = vshrl.u32 %v1867, 7
      %v1869 = vsub.s32 0, %v1868
      %v1870 = vrot.slane %v1865, %v1869
      %v1871 = vlaneseq
      %v1872 = vshrl.u32 %v1871, 7
      %v1873 = vsub.s32 1, %v1872
      %v1874 = vrot.slane %v1865, %v1873
      %v1875 = vlaneseq
      %v1876 = vshrl.u32 %v1875, 7
      %v1877 = vsub.s32 2, %v1876
      %v1878 = vrot.slane %v1865, %v1877
      %v1882 = vadd.f32 %v1859, %v1870
      %v1883 = vadd.f32 %v1860, %v1874
      %v1884 = vadd.f32 %v1861, %v1878
      %v1885 = vadd.f32 %v1862, %v1870
      %v1886 = vadd.f32 %v1863, %v1874
      %v1887 = vadd.f32 %v1864, %v1878
      %v1888 = vmax.f32 %v1882, 0.0
      %v1889 = vmax.f32 %v1883, 0.0
      %v1890 = vmax.f32 %v1884, 0.0
      %v1891 = vmax.f32 %v1885, 0.0
      %v1892 = vmax.f32 %v1886, 0.0
      %v1893 = vmax.f32 %v1887, 0.0
      %v1894 = vlaneseq
      %vm1895 = vcmp.ge.s32.totalorder %v1894, 0
      %vm1896 = vcmp.lt.s32.totalorder %v1894, 352
      %vm1897 = vmand %vm1895, %vm1896
      %1898 = vst.msk [vmem:[#allocation2] ss:$8 sm:$0x7] %vm1897, 0.0
      %1899 = vst.msk [vmem:[#allocation2] ss:$8 sm:$0x0] %vm1897, 0.0
      %s1900 = scalar_lea.vmem [#allocation2], 49
      %1901 = vst.msk [vmem:[%s1900] ss:$8 sm:$0x7] %vm1897, 0.0
      %1902 = vst.msk [vmem:[%s1900] ss:$8 sm:$0x0] %vm1897, 0.0
      %vm1909 = vcmask 1040384
      %v1910 = vrot.slane %v1888, 7
      %v1911 = vrot.slane %v1889, 7
      %v1912 = vrot.slane %v1890, 7
      %v1913 = vrot.slane %v1891, 7
      %v1914 = vsel %vm1909, %v1910, %v1913
      %v1915 = vrot.slane %v1892, 7
      %v1916 = vsel %vm1909, %v1911, %v1915
      %v1917 = vrot.slane %v1893, 7
      %v1918 = vsel %vm1909, %v1912, %v1917
      %1928 = vst [vmem:[#allocation2] sm:$0xfe] %v1910
      %1929 = vst [vmem:[#allocation2 + $0x8] sm:$0xfe] %v1911
      %vm1930 = vcmask 785409
      %1931 = vst.msk [vmem:[#allocation2 + $0x10] sm:$0xfe] %vm1930, %v1912
      %1932 = vst [vmem:[#allocation2 + $0x18] sm:$0xff] %v1914
      %1933 = vst [vmem:[#allocation2 + $0x20] sm:$0xff] %v1916
      %vm1934 = vcmask 785408
      %1935 = vst.msk [vmem:[#allocation2 + $0x28] sm:$0xff] %vm1934, %v1918
      %1936 = vst [vmem:[#allocation2 + $0x30] sm:$0x1] %v1913
      %1937 = vst [vmem:[#allocation2 + $0x38] sm:$0x1] %v1915
      %vm1938 = vcmask 778240
      %1939 = vst.msk [vmem:[#allocation2 + $0x40] sm:$0x1] %vm1938, %v1917
      %v1940 = vld [vmem:[#allocation2] sm:$0xff]
      %v1941 = vld [vmem:[#allocation2 + $0x8] sm:$0xff]
      %v1942 = vld [vmem:[#allocation2 + $0x10] sm:$0xff]
      %v1943 = vld [vmem:[#allocation2 + $0x18] sm:$0xff]
      %v1944 = vld [vmem:[#allocation2 + $0x20] sm:$0xff]
      %v1945 = vld [vmem:[#allocation2 + $0x28] sm:$0xff]
      %v1946 = vld [vmem:[%s4] sm:$0xff]
      %v1947 = vld [vmem:[%s4 + $0x8] sm:$0xff]
      %v1948 = vld [vmem:[%s4 + $0x10] sm:$0xff]
      %v1949 = vld [vmem:[%s4 + $0x18] sm:$0xff]
      %v1950 = vld [vmem:[%s4 + $0x20] sm:$0xff]
      %v1951 = vld [vmem:[%s4 + $0x28] sm:$0xff]
      %v1952 = vld [vmem:[%s4 + $0x30] sm:$0xff]
      %v1953 = vld [vmem:[%s4 + $0x38] sm:$0xff]
      %v1954 = vld [vmem:[%s4 + $0x40] sm:$0xff]
      %v1955 = vld [vmem:[%s4 + $0x48] sm:$0xff]
      %v1956 = vld [vmem:[%s4 + $0x50] sm:$0xff]
      %v1957 = vld [vmem:[%s4 + $0x58] sm:$0xff]
      %v1958 = vld [vmem:[%s4 + $0x60] sm:$0xff]
      %v1959 = vld [vmem:[%s4 + $0x68] sm:$0xff]
      %v1960 = vld [vmem:[%s4 + $0x70] sm:$0xff]
      %v1961 = vld [vmem:[%s4 + $0x78] sm:$0xff]
      %v1962 = vld [vmem:[%s4 + $0x80] sm:$0xff]
      %v1963 = vld [vmem:[%s4 + $0x88] sm:$0xff]
      %v1964 = vld [vmem:[%s4 + $0x90] sm:$0xff]
      %v1965 = vld [vmem:[%s4 + $0x98] sm:$0xff]
      %v1966 = vld [vmem:[%s4 + $0xa0] sm:$0xff]
      %v1967 = vld [vmem:[%s4 + $0xa8] sm:$0xff]
      %v1968 = vld [vmem:[%s4 + $0xb0] sm:$0xff]
      %v1969 = vld [vmem:[%s4 + $0xb8] sm:$0xff]
      %v1970 = vld [vmem:[%s4 + $0xc0] sm:$0xff]
      %v1971 = vld [vmem:[%s4 + $0xc8] sm:$0xff]
      %v1972 = vld [vmem:[%s4 + $0xd0] sm:$0xff]
      %v1973 = vld [vmem:[%s4 + $0xd8] sm:$0xff]
      %v1974 = vld [vmem:[%s4 + $0xe0] sm:$0xff]
      %v1975 = vld [vmem:[%s4 + $0xe8] sm:$0xff]
      %v1976 = vld [vmem:[%s4 + $0xf0] sm:$0xff]
      %v1977 = vld [vmem:[%s4 + $0xf8] sm:$0xff]
      %v1978 = vld [vmem:[%s4 + $0x100] sm:$0xff]
      %v1979 = vld [vmem:[%s4 + $0x108] sm:$0xff]
      %v1980 = vld [vmem:[%s4 + $0x110] sm:$0xff]
      %v1981 = vld [vmem:[%s4 + $0x118] sm:$0xff]
      %v1982 = vld [vmem:[%s4 + $0x120] sm:$0xff]
      %v1983 = vld [vmem:[%s4 + $0x128] sm:$0xff]
      %v1984 = vld [vmem:[%s4 + $0x130] sm:$0xff]
      %v1985 = vld [vmem:[%s4 + $0x138] sm:$0xff]
      %v1986 = vld [vmem:[%s4 + $0x140] sm:$0xff]
      %v1987 = vld [vmem:[%s4 + $0x148] sm:$0xff]
      %v1988 = vld [vmem:[%s4 + $0x150] sm:$0xff]
      %v1989 = vld [vmem:[%s4 + $0x158] sm:$0xff]
      %v1990 = vld [vmem:[%s4 + $0x160] sm:$0xff]
      %v1991 = vld [vmem:[%s4 + $0x168] sm:$0xff]
      %v1992 = vld [vmem:[%s4 + $0x170] sm:$0xff]
      %v1993 = vld [vmem:[%s4 + $0x178] sm:$0xff]
      %v1994 = vld [vmem:[%s4 + $0x180] sm:$0xff]
      %v1995 = vld [vmem:[%s4 + $0x188] sm:$0xff]
      %v1996 = vld [vmem:[%s4 + $0x190] sm:$0xff]
      %v1997 = vld [vmem:[%s4 + $0x198] sm:$0xff]
      %v1998 = vld [vmem:[%s4 + $0x1a0] sm:$0xff]
      %v1999 = vld [vmem:[%s4 + $0x1a8] sm:$0xff]
      %v2000 = vld [vmem:[%s4 + $0x1b0] sm:$0xff]
      %v2001 = vld [vmem:[%s4 + $0x1b8] sm:$0xff]
      %v2002 = vld [vmem:[%s4 + $0x1c0] sm:$0xff]
      %v2003 = vld [vmem:[%s4 + $0x1c8] sm:$0xff]
      %v2004 = vld [vmem:[%s4 + $0x1d0] sm:$0xff]
      %v2005 = vld [vmem:[%s4 + $0x1d8] sm:$0xff]
      %v2006 = vld [vmem:[%s4 + $0x1e0] sm:$0xff]
      %v2007 = vld [vmem:[%s4 + $0x1e8] sm:$0xff]
      %v2008 = vld [vmem:[%s4 + $0x1f0] sm:$0xff]
      %v2009 = vld [vmem:[%s4 + $0x1f8] sm:$0xff]
      %v2010 = vld [vmem:[%s4 + $0x200] sm:$0xff]
      %v2011 = vld [vmem:[%s4 + $0x208] sm:$0xff]
      %v2012 = vld [vmem:[%s4 + $0x210] sm:$0xff]
      %v2013 = vld [vmem:[%s4 + $0x218] sm:$0xff]
      %v2014 = vld [vmem:[%s4 + $0x220] sm:$0xff]
      %v2015 = vld [vmem:[%s4 + $0x228] sm:$0xff]
      %v2016 = vld [vmem:[%s4 + $0x230] sm:$0xff]
      %v2017 = vld [vmem:[%s4 + $0x238] sm:$0xff]
      %v2018 = vld [vmem:[%s4 + $0x240] sm:$0xff]
      %v2019 = vld [vmem:[%s4 + $0x248] sm:$0xff]
      %v2020 = vld [vmem:[%s4 + $0x250] sm:$0xff]
      %v2021 = vld [vmem:[%s4 + $0x258] sm:$0xff]
      %v2022 = vld [vmem:[%s4 + $0x260] sm:$0xff]
      %v2023 = vld [vmem:[%s4 + $0x268] sm:$0xff]
      %v2024 = vld [vmem:[%s4 + $0x270] sm:$0xff]
      %v2025 = vld [vmem:[%s4 + $0x278] sm:$0xff]
      %v2026 = vld [vmem:[%s4 + $0x280] sm:$0xff]
      %v2027 = vld [vmem:[%s4 + $0x288] sm:$0xff]
      %v2028 = vld [vmem:[%s4 + $0x290] sm:$0xff]
      %v2029 = vld [vmem:[%s4 + $0x298] sm:$0xff]
      %v2030 = vld [vmem:[%s4 + $0x2a0] sm:$0xff]
      %v2031 = vld [vmem:[%s4 + $0x2a8] sm:$0xff]
      %v2032 = vld [vmem:[%s4 + $0x2b0] sm:$0xff]
      %v2033 = vld [vmem:[%s4 + $0x2b8] sm:$0xff]
      %v2034 = vld [vmem:[%s4 + $0x2c0] sm:$0xff]
      %v2035 = vld [vmem:[%s4 + $0x2c8] sm:$0xff]
      %v2036 = vld [vmem:[%s4 + $0x2d0] sm:$0xff]
      %v2037 = vld [vmem:[%s4 + $0x2d8] sm:$0xff]
      %v2038 = vld [vmem:[%s4 + $0x2e0] sm:$0xff]
      %v2039 = vld [vmem:[%s4 + $0x2e8] sm:$0xff]
      %v2040 = vld [vmem:[%s4 + $0x2f0] sm:$0xff]
      %v2041 = vld [vmem:[%s4 + $0x2f8] sm:$0xff]
      %v2042 = vld [vmem:[%s4 + $0x300] sm:$0xff]
      %v2043 = vld [vmem:[%s4 + $0x308] sm:$0xff]
      %v2044 = vld [vmem:[%s4 + $0x310] sm:$0xff]
      %v2045 = vld [vmem:[%s4 + $0x318] sm:$0xff]
      %v2046 = vld [vmem:[%s4 + $0x320] sm:$0xff]
      %v2047 = vld [vmem:[%s4 + $0x328] sm:$0xff]
      %v2048 = vld [vmem:[%s4 + $0x330] sm:$0xff]
      %v2049 = vld [vmem:[%s4 + $0x338] sm:$0xff]
      %v2050 = vld [vmem:[%s4 + $0x340] sm:$0xff]
      %v2051 = vld [vmem:[%s4 + $0x348] sm:$0xff]
      %v2052 = vld [vmem:[%s4 + $0x350] sm:$0xff]
      %v2053 = vld [vmem:[%s4 + $0x358] sm:$0xff]
      %v2054 = vld [vmem:[%s4 + $0x360] sm:$0xff]
      %v2055 = vld [vmem:[%s4 + $0x368] sm:$0xff]
      %v2056 = vld [vmem:[%s4 + $0x370] sm:$0xff]
      %v2057 = vld [vmem:[%s4 + $0x378] sm:$0xff]
      %v2058 = vld [vmem:[%s4 + $0x380] sm:$0xff]
      %v2059 = vld [vmem:[%s4 + $0x388] sm:$0xff]
      %v2060 = vld [vmem:[%s4 + $0x390] sm:$0xff]
      %v2061 = vld [vmem:[%s4 + $0x398] sm:$0xff]
      %v2062 = vld [vmem:[%s4 + $0x3a0] sm:$0xff]
      %v2063 = vld [vmem:[%s4 + $0x3a8] sm:$0xff]
      %v2064 = vld [vmem:[%s4 + $0x3b0] sm:$0xff]
      %v2065 = vld [vmem:[%s4 + $0x3b8] sm:$0xff]
      %v2066 = vld [vmem:[%s4 + $0x3c0] sm:$0xff]
      %v2067 = vld [vmem:[%s4 + $0x3c8] sm:$0xff]
      %v2068 = vld [vmem:[%s4 + $0x3d0] sm:$0xff]
      %v2069 = vld [vmem:[%s4 + $0x3d8] sm:$0xff]
      %v2070 = vld [vmem:[%s4 + $0x3e0] sm:$0xff]
      %v2071 = vld [vmem:[%s4 + $0x3e8] sm:$0xff]
      %v2072 = vld [vmem:[%s4 + $0x3f0] sm:$0xff]
      %v2073 = vld [vmem:[%s4 + $0x3f8] sm:$0xff]
      %v2074 = vld [vmem:[%s4 + $0x400] sm:$0xff]
      %v2075 = vld [vmem:[%s4 + $0x408] sm:$0xff]
      %v2076 = vld [vmem:[%s4 + $0x410] sm:$0xff]
      %v2077 = vld [vmem:[%s4 + $0x418] sm:$0xff]
      %v2078 = vld [vmem:[#allocation2] sm:$0xfe]
      %v2079 = vld [vmem:[#allocation2 + $0x8] sm:$0xfe]
      %v2080 = vld [vmem:[#allocation2 + $0x10] sm:$0xfe]
      %v2081 = vld [vmem:[#allocation2 + $0x30] sm:$0x1]
      %v2082 = vld [vmem:[#allocation2 + $0x38] sm:$0x1]
      %v2083 = vld [vmem:[#allocation2 + $0x40] sm:$0x1]
      %s2084 = scalar_lea.vmem %s4, 1056
      %v2085 = vld [vmem:[%s2084] sm:$0xff]
      %v2086 = vld [vmem:[%s2084 + $0x8] sm:$0xff]
      %v2087 = vld [vmem:[%s2084 + $0x10] sm:$0xff]
      %v2088 = vld [vmem:[%s2084 + $0x18] sm:$0xff]
      %v2089 = vld [vmem:[%s2084 + $0x20] sm:$0xff]
      %v2090 = vld [vmem:[%s2084 + $0x28] sm:$0xff]
      %v2091 = vld [vmem:[%s2084 + $0x30] sm:$0xff]
      %v2092 = vld [vmem:[%s2084 + $0x38] sm:$0xff]
      %v2093 = vld [vmem:[%s2084 + $0x40] sm:$0xff]
      %v2094 = vld [vmem:[%s2084 + $0x48] sm:$0xff]
      %v2095 = vld [vmem:[%s2084 + $0x50] sm:$0xff]
      %v2096 = vld [vmem:[%s2084 + $0x58] sm:$0xff]
      %v2097 = vld [vmem:[%s2084 + $0x60] sm:$0xff]
      %v2098 = vld [vmem:[%s2084 + $0x68] sm:$0xff]
      %v2099 = vld [vmem:[%s2084 + $0x70] sm:$0xff]
      %v2100 = vld [vmem:[%s2084 + $0x78] sm:$0xff]
      %v2101 = vld [vmem:[%s2084 + $0x80] sm:$0xff]
      %v2102 = vld [vmem:[%s2084 + $0x88] sm:$0xff]
      %v2103 = vld [vmem:[%s2084 + $0x90] sm:$0xff]
      %v2104 = vld [vmem:[%s2084 + $0x98] sm:$0xff]
      %v2105 = vld [vmem:[%s2084 + $0xa0] sm:$0xff]
      %v2106 = vld [vmem:[%s2084 + $0xa8] sm:$0xff]
      %v2107 = vld [vmem:[%s2084 + $0xb0] sm:$0xff]
      %v2108 = vld [vmem:[%s2084 + $0xb8] sm:$0xff]
      %v2109 = vld [vmem:[%s2084 + $0xc0] sm:$0xff]
      %v2110 = vld [vmem:[%s2084 + $0xc8] sm:$0xff]
      %v2111 = vld [vmem:[%s2084 + $0xd0] sm:$0xff]
      %v2112 = vld [vmem:[%s2084 + $0xd8] sm:$0xff]
      %v2113 = vld [vmem:[%s2084 + $0xe0] sm:$0xff]
      %v2114 = vld [vmem:[%s2084 + $0xe8] sm:$0xff]
      %v2115 = vld [vmem:[%s2084 + $0xf0] sm:$0xff]
      %v2116 = vld [vmem:[%s2084 + $0xf8] sm:$0xff]
      %v2117 = vld [vmem:[%s2084 + $0x100] sm:$0xff]
      %v2118 = vld [vmem:[%s2084 + $0x108] sm:$0xff]
      %v2119 = vld [vmem:[%s2084 + $0x110] sm:$0xff]
      %v2120 = vld [vmem:[%s2084 + $0x118] sm:$0xff]
      %v2121 = vld [vmem:[%s2084 + $0x120] sm:$0xff]
      %v2122 = vld [vmem:[%s2084 + $0x128] sm:$0xff]
      %v2123 = vld [vmem:[%s2084 + $0x130] sm:$0xff]
      %v2124 = vld [vmem:[%s2084 + $0x138] sm:$0xff]
      %v2125 = vld [vmem:[%s2084 + $0x140] sm:$0xff]
      %v2126 = vld [vmem:[%s2084 + $0x148] sm:$0xff]
      %v2127 = vld [vmem:[%s2084 + $0x150] sm:$0xff]
      %v2128 = vld [vmem:[%s2084 + $0x158] sm:$0xff]
      %v2129 = vld [vmem:[%s2084 + $0x160] sm:$0xff]
      %v2130 = vld [vmem:[%s2084 + $0x168] sm:$0xff]
      %v2131 = vld [vmem:[%s2084 + $0x170] sm:$0xff]
      %v2132 = vld [vmem:[%s2084 + $0x178] sm:$0xff]
      %v2133 = vld [vmem:[%s2084 + $0x180] sm:$0xff]
      %v2134 = vld [vmem:[%s2084 + $0x188] sm:$0xff]
      %v2135 = vld [vmem:[%s2084 + $0x190] sm:$0xff]
      %v2136 = vld [vmem:[%s2084 + $0x198] sm:$0xff]
      %v2137 = vld [vmem:[%s2084 + $0x1a0] sm:$0xff]
      %v2138 = vld [vmem:[%s2084 + $0x1a8] sm:$0xff]
      %v2139 = vld [vmem:[%s2084 + $0x1b0] sm:$0xff]
      %v2140 = vld [vmem:[%s2084 + $0x1b8] sm:$0xff]
      %v2141 = vld [vmem:[%s2084 + $0x1c0] sm:$0xff]
      %v2142 = vld [vmem:[%s2084 + $0x1c8] sm:$0xff]
      %v2143 = vld [vmem:[%s2084 + $0x1d0] sm:$0xff]
      %v2144 = vld [vmem:[%s2084 + $0x1d8] sm:$0xff]
      %v2145 = vld [vmem:[%s2084 + $0x1e0] sm:$0xff]
      %v2146 = vld [vmem:[%s2084 + $0x1e8] sm:$0xff]
      %v2147 = vld [vmem:[%s2084 + $0x1f0] sm:$0xff]
      %v2148 = vld [vmem:[%s2084 + $0x1f8] sm:$0xff]
      %v2149 = vld [vmem:[%s2084 + $0x200] sm:$0xff]
      %v2150 = vld [vmem:[%s2084 + $0x208] sm:$0xff]
      %v2151 = vld [vmem:[%s2084 + $0x210] sm:$0xff]
      %v2152 = vld [vmem:[%s2084 + $0x218] sm:$0xff]
      %v2153 = vld [vmem:[%s2084 + $0x220] sm:$0xff]
      %v2154 = vld [vmem:[%s2084 + $0x228] sm:$0xff]
      %v2155 = vld [vmem:[%s2084 + $0x230] sm:$0xff]
      %v2156 = vld [vmem:[%s2084 + $0x238] sm:$0xff]
      %v2157 = vld [vmem:[%s2084 + $0x240] sm:$0xff]
      %v2158 = vld [vmem:[%s2084 + $0x248] sm:$0xff]
      %v2159 = vld [vmem:[%s2084 + $0x250] sm:$0xff]
      %v2160 = vld [vmem:[%s2084 + $0x258] sm:$0xff]
      %v2161 = vld [vmem:[%s2084 + $0x260] sm:$0xff]
      %v2162 = vld [vmem:[%s2084 + $0x268] sm:$0xff]
      %v2163 = vld [vmem:[%s2084 + $0x270] sm:$0xff]
      %v2164 = vld [vmem:[%s2084 + $0x278] sm:$0xff]
      %v2165 = vld [vmem:[%s2084 + $0x280] sm:$0xff]
      %v2166 = vld [vmem:[%s2084 + $0x288] sm:$0xff]
      %v2167 = vld [vmem:[%s2084 + $0x290] sm:$0xff]
      %v2168 = vld [vmem:[%s2084 + $0x298] sm:$0xff]
      %v2169 = vld [vmem:[%s2084 + $0x2a0] sm:$0xff]
      %v2170 = vld [vmem:[%s2084 + $0x2a8] sm:$0xff]
      %v2171 = vld [vmem:[%s2084 + $0x2b0] sm:$0xff]
      %v2172 = vld [vmem:[%s2084 + $0x2b8] sm:$0xff]
      %v2173 = vld [vmem:[%s2084 + $0x2c0] sm:$0xff]
      %v2174 = vld [vmem:[%s2084 + $0x2c8] sm:$0xff]
      %v2175 = vld [vmem:[%s2084 + $0x2d0] sm:$0xff]
      %v2176 = vld [vmem:[%s2084 + $0x2d8] sm:$0xff]
      %v2177 = vld [vmem:[%s2084 + $0x2e0] sm:$0xff]
      %v2178 = vld [vmem:[%s2084 + $0x2e8] sm:$0xff]
      %v2179 = vld [vmem:[%s2084 + $0x2f0] sm:$0xff]
      %v2180 = vld [vmem:[%s2084 + $0x2f8] sm:$0xff]
      %v2181 = vld [vmem:[%s2084 + $0x300] sm:$0xff]
      %v2182 = vld [vmem:[%s2084 + $0x308] sm:$0xff]
      %v2183 = vld [vmem:[%s2084 + $0x310] sm:$0xff]
      %v2184 = vld [vmem:[%s2084 + $0x318] sm:$0xff]
      %v2185 = vld [vmem:[%s2084 + $0x320] sm:$0xff]
      %v2186 = vld [vmem:[%s2084 + $0x328] sm:$0xff]
      %v2187 = vld [vmem:[%s2084 + $0x330] sm:$0xff]
      %v2188 = vld [vmem:[%s2084 + $0x338] sm:$0xff]
      %v2189 = vld [vmem:[%s2084 + $0x340] sm:$0xff]
      %v2190 = vld [vmem:[%s2084 + $0x348] sm:$0xff]
      %v2191 = vld [vmem:[%s2084 + $0x350] sm:$0xff]
      %v2192 = vld [vmem:[%s2084 + $0x358] sm:$0xff]
      %v2193 = vld [vmem:[%s2084 + $0x360] sm:$0xff]
      %v2194 = vld [vmem:[%s2084 + $0x368] sm:$0xff]
      %v2195 = vld [vmem:[%s2084 + $0x370] sm:$0xff]
      %v2196 = vld [vmem:[%s2084 + $0x378] sm:$0xff]
      %v2197 = vld [vmem:[%s2084 + $0x380] sm:$0xff]
      %v2198 = vld [vmem:[%s2084 + $0x388] sm:$0xff]
      %v2199 = vld [vmem:[%s2084 + $0x390] sm:$0xff]
      %v2200 = vld [vmem:[%s2084 + $0x398] sm:$0xff]
      %v2201 = vld [vmem:[%s2084 + $0x3a0] sm:$0xff]
      %v2202 = vld [vmem:[%s2084 + $0x3a8] sm:$0xff]
      %v2203 = vld [vmem:[%s2084 + $0x3b0] sm:$0xff]
      %v2204 = vld [vmem:[%s2084 + $0x3b8] sm:$0xff]
      %v2205 = vld [vmem:[%s2084 + $0x3c0] sm:$0xff]
      %v2206 = vld [vmem:[%s2084 + $0x3c8] sm:$0xff]
      %v2207 = vld [vmem:[%s2084 + $0x3d0] sm:$0xff]
      %v2208 = vld [vmem:[%s2084 + $0x3d8] sm:$0xff]
      %v2209 = vld [vmem:[%s2084 + $0x3e0] sm:$0xff]
      %v2210 = vld [vmem:[%s2084 + $0x3e8] sm:$0xff]
      %v2211 = vld [vmem:[%s2084 + $0x3f0] sm:$0xff]
      %v2212 = vld [vmem:[%s2084 + $0x3f8] sm:$0xff]
      %v2213 = vld [vmem:[%s2084 + $0x400] sm:$0xff]
      %v2214 = vld [vmem:[%s2084 + $0x408] sm:$0xff]
      %v2215 = vld [vmem:[%s2084 + $0x410] sm:$0xff]
      %v2216 = vld [vmem:[%s2084 + $0x418] sm:$0xff]
      %vm2226 = vcmask 1046528
      %v2227 = vrot.slane %v2078, 1
      %v2228 = vrot.slane %v1943, 1
      %v2229 = vsel %vm2226, %v2227, %v2228
      %v2230 = vrot.slane %v2079, 1
      %v2231 = vrot.slane %v1944, 1
      %v2232 = vsel %vm2226, %v2230, %v2231
      %v2233 = vrot.slane %v2080, 1
      %v2234 = vrot.slane %v1945, 1
      %v2235 = vsel %vm2226, %v2233, %v2234
      %v2236 = vrot.slane %v2081, 1
      %v2237 = vsel %vm2226, %v2228, %v2236
      %v2238 = vrot.slane %v2082, 1
      %v2239 = vsel %vm2226, %v2231, %v2238
      %v2240 = vrot.slane %v2083, 1
      %v2241 = vsel %vm2226, %v2234, %v2240
      %v2246 = vsel %vm1934, %v2235, 0
      %v2248 = vsel %vm1934, %v2241, 0
      %2250 = vmatprep.subr.mxu0 %v2131
      %2251 = vmatpush1.msra.mxu0 %v2130
      %2252 = vmatprep.subr.mxu0 %v2128
      %2253 = vmatpush1.msra.mxu0 %v2127
      %2254 = vmatprep.subr.mxu0 %v2125
      %2255 = vmatpush1.msra.mxu0 %v2124
      %2256 = vmatprep.subr.mxu0 %v2122
      %2257 = vmatpush1.msra.mxu0 %v2121
      %2258 = vmatprep.subr.mxu0 %v2119
      %2259 = vmatpush1.msra.mxu0 %v2118
      %2260 = vmatprep.subr.mxu0 %v2116
      %2261 = vmatpush1.msra.mxu0 %v2115
      %2262 = vmatprep.subr.mxu0 %v2113
      %2263 = vmatpush1.msra.mxu0 %v2112
      %2264 = vmatprep.subr.mxu0 %v2110
      %2265 = vmatpush1.msra.mxu0 %v2109
      %2266 = vmatprep.subr.mxu0 %v2107
      %2267 = vmatpush1.msra.mxu0 %v2106
      %2268 = vmatprep.subr.mxu0 %v2104
      %2269 = vmatpush1.msra.mxu0 %v2103
      %2270 = vmatprep.subr.mxu0 %v2101
      %2271 = vmatpush1.msra.mxu0 %v2100
      %2272 = vmatprep.subr.mxu0 %v2098
      %2273 = vmatpush1.msra.mxu0 %v2097
      %2274 = vmatprep.subr.mxu0 %v2095
      %2275 = vmatpush1.msra.mxu0 %v2094
      %2276 = vmatprep.subr.mxu0 %v2092
      %2277 = vmatpush1.msra.mxu0 %v2091
      %2278 = vmatprep.subr.mxu0 %v2089
      %2279 = vmatpush1.msra.mxu0 %v2088
      %2280 = vmatprep.subr.mxu0 %v2086
      %2281 = vmatpush1.msra.mxu0 %v2085
      %2282 = vmatprep.subr.mxu0 %v2179
      %2283 = vmatpush2.msra.mxu0 %v2178
      %2284 = vmatprep.subr.mxu0 %v2176
      %2285 = vmatpush2.msra.mxu0 %v2175
      %2286 = vmatprep.subr.mxu0 %v2173
      %2287 = vmatpush2.msra.mxu0 %v2172
      %2288 = vmatprep.subr.mxu0 %v2170
      %2289 = vmatpush2.msra.mxu0 %v2169
      %2290 = vmatprep.subr.mxu0 %v2167
      %2291 = vmatpush2.msra.mxu0 %v2166
      %2292 = vmatprep.subr.mxu0 %v2164
      %2293 = vmatpush2.msra.mxu0 %v2163
      %2294 = vmatprep.subr.mxu0 %v2161
      %2295 = vmatpush2.msra.mxu0 %v2160
      %2296 = vmatprep.subr.mxu0 %v2158
      %2297 = vmatpush2.msra.mxu0 %v2157
      %2298 = vmatprep.subr.mxu0 %v2155
      %2299 = vmatpush2.msra.mxu0 %v2154
      %2300 = vmatprep.subr.mxu0 %v2152
      %2301 = vmatpush2.msra.mxu0 %v2151
      %2302 = vmatprep.subr.mxu0 %v2149
      %2303 = vmatpush2.msra.mxu0 %v2148
      %2304 = vmatprep.subr.mxu0 %v2146
      %2305 = vmatpush2.msra.mxu0 %v2145
      %2306 = vmatprep.subr.mxu0 %v2143
      %2307 = vmatpush2.msra.mxu0 %v2142
      %2308 = vmatprep.subr.mxu0 %v2140
      %2309 = vmatpush2.msra.mxu0 %v2139
      %2310 = vmatprep.subr.mxu0 %v2137
      %2311 = vmatpush2.msra.mxu0 %v2136
      %2312 = vmatprep.subr.mxu0 %v2134
      %2313 = vmatpush2.msra.mxu0 %v2133
      %2314 = vmatprep.mubr.f32.mxu0 %v2232
      %2315 = vmatmul.mubr.f32.gmra.mxu0 %v2229
      %v2316 = vpop.f32.mrf.mxu0
      %v2317 = vadd.f32 0.0, %v2316
      %v2318 = vpop.f32.mrf.mxu0
      %v2319 = vadd.f32 0.0, %v2318
      %2320 = vmatprep.mubr.f32.mxu0 %v2239
      %2321 = vmatmul.mubr.f32.gmra.mxu0 %v2237
      %v2322 = vpop.f32.mrf.mxu0
      %v2323 = vadd.f32 0.0, %v2322
      %v2324 = vpop.f32.mrf.mxu0
      %v2325 = vadd.f32 0.0, %v2324
      %2326 = vdwg.mxu0
      %2327 = vmatprep.subr.mxu0 0.0
      %2328 = vmatpush1.msra.mxu0 0.0
      %2329 = vmatprep.subr.mxu0 0.0
      %2330 = vmatpush1.msra.mxu0 0.0
      %2331 = vmatprep.subr.mxu0 0.0
      %2332 = vmatpush1.msra.mxu0 0.0
      %2333 = vmatprep.subr.mxu0 0.0
      %2334 = vmatpush1.msra.mxu0 0.0
      %2335 = vmatprep.subr.mxu0 %v2215
      %2336 = vmatpush1.msra.mxu0 %v2214
      %2337 = vmatprep.subr.mxu0 %v2212
      %2338 = vmatpush1.msra.mxu0 %v2211
      %2339 = vmatprep.subr.mxu0 %v2209
      %2340 = vmatpush1.msra.mxu0 %v2208
      %2341 = vmatprep.subr.mxu0 %v2206
      %2342 = vmatpush1.msra.mxu0 %v2205
      %2343 = vmatprep.subr.mxu0 %v2203
      %2344 = vmatpush1.msra.mxu0 %v2202
      %2345 = vmatprep.subr.mxu0 %v2200
      %2346 = vmatpush1.msra.mxu0 %v2199
      %2347 = vmatprep.subr.mxu0 %v2197
      %2348 = vmatpush1.msra.mxu0 %v2196
      %2349 = vmatprep.subr.mxu0 %v2194
      %2350 = vmatpush1.msra.mxu0 %v2193
      %2351 = vmatprep.subr.mxu0 %v2191
      %2352 = vmatpush1.msra.mxu0 %v2190
      %2353 = vmatprep.subr.mxu0 %v2188
      %2354 = vmatpush1.msra.mxu0 %v2187
      %2355 = vmatprep.subr.mxu0 %v2185
      %2356 = vmatpush1.msra.mxu0 %v2184
      %2357 = vmatprep.subr.mxu0 %v2182
      %2358 = vmatpush1.msra.mxu0 %v2181
      %2359 = vmatprep.subr.mxu0 0.0
      %2360 = vmatpush2.msra.mxu0 0.0
      %2361 = vmatprep.subr.mxu0 0.0
      %2362 = vmatpush2.msra.mxu0 0.0
      %2363 = vmatprep.subr.mxu0 0.0
      %2364 = vmatpush2.msra.mxu0 0.0
      %2365 = vmatprep.subr.mxu0 0.0
      %2366 = vmatpush2.msra.mxu0 0.0
      %2367 = vmatprep.subr.mxu0 0.0
      %2368 = vmatpush2.msra.mxu0 0.0
      %2369 = vmatprep.subr.mxu0 0.0
      %2370 = vmatpush2.msra.mxu0 0.0
      %2371 = vmatprep.subr.mxu0 0.0
      %2372 = vmatpush2.msra.mxu0 0.0
      %2373 = vmatprep.subr.mxu0 0.0
      %2374 = vmatpush2.msra.mxu0 0.0
      %2375 = vmatprep.subr.mxu0 0.0
      %2376 = vmatpush2.msra.mxu0 0.0
      %2377 = vmatprep.subr.mxu0 0.0
      %2378 = vmatpush2.msra.mxu0 0.0
      %2379 = vmatprep.subr.mxu0 0.0
      %2380 = vmatpush2.msra.mxu0 0.0
      %2381 = vmatprep.subr.mxu0 0.0
      %2382 = vmatpush2.msra.mxu0 0.0
      %2383 = vmatprep.subr.mxu0 0.0
      %2384 = vmatpush2.msra.mxu0 0.0
      %2385 = vmatprep.subr.mxu0 0.0
      %2386 = vmatpush2.msra.mxu0 0.0
      %2387 = vmatprep.subr.mxu0 0.0
      %2388 = vmatpush2.msra.mxu0 0.0
      %2389 = vmatprep.subr.mxu0 0.0
      %2390 = vmatpush2.msra.mxu0 0.0
      %2391 = vmatprep.mubr.f32.mxu0 0.0
      %2392 = vmatmul.mubr.f32.gmra.mxu0 %v2246
      %v2393 = vpop.f32.mrf.mxu0
      %v2394 = vadd.f32 %v2317, %v2393
      %v2395 = vpop.f32.mrf.mxu0
      %v2396 = vadd.f32 %v2319, %v2395
      %2397 = vmatprep.mubr.f32.mxu0 0.0
      %2398 = vmatmul.mubr.f32.gmra.mxu0 %v2248
      %v2399 = vpop.f32.mrf.mxu0
      %v2400 = vadd.f32 %v2323, %v2399
      %v2401 = vpop.f32.mrf.mxu0
      %v2402 = vadd.f32 %v2325, %v2401
      %2403 = vdwg.mxu0
      %2404 = vmatprep.subr.mxu0 0.0
      %2405 = vmatpush1.msra.mxu0 %v2132
      %2406 = vmatprep.subr.mxu0 0.0
      %2407 = vmatpush1.msra.mxu0 %v2129
      %2408 = vmatprep.subr.mxu0 0.0
      %2409 = vmatpush1.msra.mxu0 %v2126
      %2410 = vmatprep.subr.mxu0 0.0
      %2411 = vmatpush1.msra.mxu0 %v2123
      %2412 = vmatprep.subr.mxu0 0.0
      %2413 = vmatpush1.msra.mxu0 %v2120
      %2414 = vmatprep.subr.mxu0 0.0
      %2415 = vmatpush1.msra.mxu0 %v2117
      %2416 = vmatprep.subr.mxu0 0.0
      %2417 = vmatpush1.msra.mxu0 %v2114
      %2418 = vmatprep.subr.mxu0 0.0
      %2419 = vmatpush1.msra.mxu0 %v2111
      %2420 = vmatprep.subr.mxu0 0.0
      %2421 = vmatpush1.msra.mxu0 %v2108
      %2422 = vmatprep.subr.mxu0 0.0
      %2423 = vmatpush1.msra.mxu0 %v2105
      %2424 = vmatprep.subr.mxu0 0.0
      %2425 = vmatpush1.msra.mxu0 %v2102
      %2426 = vmatprep.subr.mxu0 0.0
      %2427 = vmatpush1.msra.mxu0 %v2099
      %2428 = vmatprep.subr.mxu0 0.0
      %2429 = vmatpush1.msra.mxu0 %v2096
      %2430 = vmatprep.subr.mxu0 0.0
      %2431 = vmatpush1.msra.mxu0 %v2093
      %2432 = vmatprep.subr.mxu0 0.0
      %2433 = vmatpush1.msra.mxu0 %v2090
      %2434 = vmatprep.subr.mxu0 0.0
      %2435 = vmatpush1.msra.mxu0 %v2087
      %2436 = vmatprep.subr.mxu0 0.0
      %2437 = vmatpush2.msra.mxu0 %v2180
      %2438 = vmatprep.subr.mxu0 0.0
      %2439 = vmatpush2.msra.mxu0 %v2177
      %2440 = vmatprep.subr.mxu0 0.0
      %2441 = vmatpush2.msra.mxu0 %v2174
      %2442 = vmatprep.subr.mxu0 0.0
      %2443 = vmatpush2.msra.mxu0 %v2171
      %2444 = vmatprep.subr.mxu0 0.0
      %2445 = vmatpush2.msra.mxu0 %v2168
      %2446 = vmatprep.subr.mxu0 0.0
      %2447 = vmatpush2.msra.mxu0 %v2165
      %2448 = vmatprep.subr.mxu0 0.0
      %2449 = vmatpush2.msra.mxu0 %v2162
      %2450 = vmatprep.subr.mxu0 0.0
      %2451 = vmatpush2.msra.mxu0 %v2159
      %2452 = vmatprep.subr.mxu0 0.0
      %2453 = vmatpush2.msra.mxu0 %v2156
      %2454 = vmatprep.subr.mxu0 0.0
      %2455 = vmatpush2.msra.mxu0 %v2153
      %2456 = vmatprep.subr.mxu0 0.0
      %2457 = vmatpush2.msra.mxu0 %v2150
      %2458 = vmatprep.subr.mxu0 0.0
      %2459 = vmatpush2.msra.mxu0 %v2147
      %2460 = vmatprep.subr.mxu0 0.0
      %2461 = vmatpush2.msra.mxu0 %v2144
      %2462 = vmatprep.subr.mxu0 0.0
      %2463 = vmatpush2.msra.mxu0 %v2141
      %2464 = vmatprep.subr.mxu0 0.0
      %2465 = vmatpush2.msra.mxu0 %v2138
      %2466 = vmatprep.subr.mxu0 0.0
      %2467 = vmatpush2.msra.mxu0 %v2135
      %2468 = vmatprep.mubr.f32.mxu0 %v2232
      %2469 = vmatmul.mubr.f32.gmra.mxu0 %v2229
      %v2470 = vpop.f32.mrf.mxu0
      %v2471 = vadd.f32 0.0, %v2470
      %v2472 = vpop.f32.mrf.mxu0
      %2473 = vmatprep.mubr.f32.mxu0 %v2239
      %2474 = vmatmul.mubr.f32.gmra.mxu0 %v2237
      %v2475 = vpop.f32.mrf.mxu0
      %v2476 = vadd.f32 0.0, %v2475
      %v2477 = vpop.f32.mrf.mxu0
      %2478 = vdwg.mxu0
      %2479 = vmatprep.subr.mxu0 0.0
      %2480 = vmatpush1.msra.mxu0 0.0
      %2481 = vmatprep.subr.mxu0 0.0
      %2482 = vmatpush1.msra.mxu0 0.0
      %2483 = vmatprep.subr.mxu0 0.0
      %2484 = vmatpush1.msra.mxu0 0.0
      %2485 = vmatprep.subr.mxu0 0.0
      %2486 = vmatpush1.msra.mxu0 0.0
      %2487 = vmatprep.subr.mxu0 0.0
      %2488 = vmatpush1.msra.mxu0 %v2216
      %2489 = vmatprep.subr.mxu0 0.0
      %2490 = vmatpush1.msra.mxu0 %v2213
      %2491 = vmatprep.subr.mxu0 0.0
      %2492 = vmatpush1.msra.mxu0 %v2210
      %2493 = vmatprep.subr.mxu0 0.0
      %2494 = vmatpush1.msra.mxu0 %v2207
      %2495 = vmatprep.subr.mxu0 0.0
      %2496 = vmatpush1.msra.mxu0 %v2204
      %2497 = vmatprep.subr.mxu0 0.0
      %2498 = vmatpush1.msra.mxu0 %v2201
      %2499 = vmatprep.subr.mxu0 0.0
      %2500 = vmatpush1.msra.mxu0 %v2198
      %2501 = vmatprep.subr.mxu0 0.0
      %2502 = vmatpush1.msra.mxu0 %v2195
      %2503 = vmatprep.subr.mxu0 0.0
      %2504 = vmatpush1.msra.mxu0 %v2192
      %2505 = vmatprep.subr.mxu0 0.0
      %2506 = vmatpush1.msra.mxu0 %v2189
      %2507 = vmatprep.subr.mxu0 0.0
      %2508 = vmatpush1.msra.mxu0 %v2186
      %2509 = vmatprep.subr.mxu0 0.0
      %2510 = vmatpush1.msra.mxu0 %v2183
      %2511 = vmatprep.subr.mxu0 0.0
      %2512 = vmatpush2.msra.mxu0 0.0
      %2513 = vmatprep.subr.mxu0 0.0
      %2514 = vmatpush2.msra.mxu0 0.0
      %2515 = vmatprep.subr.mxu0 0.0
      %2516 = vmatpush2.msra.mxu0 0.0
      %2517 = vmatprep.subr.mxu0 0.0
      %2518 = vmatpush2.msra.mxu0 0.0
      %2519 = vmatprep.subr.mxu0 0.0
      %2520 = vmatpush2.msra.mxu0 0.0
      %2521 = vmatprep.subr.mxu0 0.0
      %2522 = vmatpush2.msra.mxu0 0.0
      %2523 = vmatprep.subr.mxu0 0.0
      %2524 = vmatpush2.msra.mxu0 0.0
      %2525 = vmatprep.subr.mxu0 0.0
      %2526 = vmatpush2.msra.mxu0 0.0
      %2527 = vmatprep.subr.mxu0 0.0
      %2528 = vmatpush2.msra.mxu0 0.0
      %2529 = vmatprep.subr.mxu0 0.0
      %2530 = vmatpush2.msra.mxu0 0.0
      %2531 = vmatprep.subr.mxu0 0.0
      %2532 = vmatpush2.msra.mxu0 0.0
      %2533 = vmatprep.subr.mxu0 0.0
      %2534 = vmatpush2.msra.mxu0 0.0
      %2535 = vmatprep.subr.mxu0 0.0
      %2536 = vmatpush2.msra.mxu0 0.0
      %2537 = vmatprep.subr.mxu0 0.0
      %2538 = vmatpush2.msra.mxu0 0.0
      %2539 = vmatprep.subr.mxu0 0.0
      %2540 = vmatpush2.msra.mxu0 0.0
      %2541 = vmatprep.subr.mxu0 0.0
      %2542 = vmatpush2.msra.mxu0 0.0
      %2543 = vmatprep.mubr.f32.mxu0 0.0
      %2544 = vmatmul.mubr.f32.gmra.mxu0 %v2246
      %v2545 = vpop.f32.mrf.mxu0
      %v2546 = vadd.f32 %v2471, %v2545
      %v2547 = vpop.f32.mrf.mxu0
      %2548 = vmatprep.mubr.f32.mxu0 0.0
      %2549 = vmatmul.mubr.f32.gmra.mxu0 %v2248
      %v2550 = vpop.f32.mrf.mxu0
      %v2551 = vadd.f32 %v2476, %v2550
      %v2552 = vpop.f32.mrf.mxu0
      %2553 = vdwg.mxu0
      %v2555 = vsel %vm1934, %v1942, 0
      %v2557 = vsel %vm1934, %v1945, 0
      %2559 = vmatprep.subr.mxu0 %v1992
      %2560 = vmatpush1.msra.mxu0 %v1991
      %2561 = vmatprep.subr.mxu0 %v1989
      %2562 = vmatpush1.msra.mxu0 %v1988
      %2563 = vmatprep.subr.mxu0 %v1986
      %2564 = vmatpush1.msra.mxu0 %v1985
      %2565 = vmatprep.subr.mxu0 %v1983
      %2566 = vmatpush1.msra.mxu0 %v1982
      %2567 = vmatprep.subr.mxu0 %v1980
      %2568 = vmatpush1.msra.mxu0 %v1979
      %2569 = vmatprep.subr.mxu0 %v1977
      %2570 = vmatpush1.msra.mxu0 %v1976
      %2571 = vmatprep.subr.mxu0 %v1974
      %2572 = vmatpush1.msra.mxu0 %v1973
      %2573 = vmatprep.subr.mxu0 %v1971
      %2574 = vmatpush1.msra.mxu0 %v1970
      %2575 = vmatprep.subr.mxu0 %v1968
      %2576 = vmatpush1.msra.mxu0 %v1967
      %2577 = vmatprep.subr.mxu0 %v1965
      %2578 = vmatpush1.msra.mxu0 %v1964
      %2579 = vmatprep.subr.mxu0 %v1962
      %2580 = vmatpush1.msra.mxu0 %v1961
      %2581 = vmatprep.subr.mxu0 %v1959
      %2582 = vmatpush1.msra.mxu0 %v1958
      %2583 = vmatprep.subr.mxu0 %v1956
      %2584 = vmatpush1.msra.mxu0 %v1955
      %2585 = vmatprep.subr.mxu0 %v1953
      %2586 = vmatpush1.msra.mxu0 %v1952
      %2587 = vmatprep.subr.mxu0 %v1950
      %2588 = vmatpush1.msra.mxu0 %v1949
      %2589 = vmatprep.subr.mxu0 %v1947
      %2590 = vmatpush1.msra.mxu0 %v1946
      %2591 = vmatprep.subr.mxu0 %v2040
      %2592 = vmatpush2.msra.mxu0 %v2039
      %2593 = vmatprep.subr.mxu0 %v2037
      %2594 = vmatpush2.msra.mxu0 %v2036
      %2595 = vmatprep.subr.mxu0 %v2034
      %2596 = vmatpush2.msra.mxu0 %v2033
      %2597 = vmatprep.subr.mxu0 %v2031
      %2598 = vmatpush2.msra.mxu0 %v2030
      %2599 = vmatprep.subr.mxu0 %v2028
      %2600 = vmatpush2.msra.mxu0 %v2027
      %2601 = vmatprep.subr.mxu0 %v2025
      %2602 = vmatpush2.msra.mxu0 %v2024
      %2603 = vmatprep.subr.mxu0 %v2022
      %2604 = vmatpush2.msra.mxu0 %v2021
      %2605 = vmatprep.subr.mxu0 %v2019
      %2606 = vmatpush2.msra.mxu0 %v2018
      %2607 = vmatprep.subr.mxu0 %v2016
      %2608 = vmatpush2.msra.mxu0 %v2015
      %2609 = vmatprep.subr.mxu0 %v2013
      %2610 = vmatpush2.msra.mxu0 %v2012
      %2611 = vmatprep.subr.mxu0 %v2010
      %2612 = vmatpush2.msra.mxu0 %v2009
      %2613 = vmatprep.subr.mxu0 %v2007
      %2614 = vmatpush2.msra.mxu0 %v2006
      %2615 = vmatprep.subr.mxu0 %v2004
      %2616 = vmatpush2.msra.mxu0 %v2003
      %2617 = vmatprep.subr.mxu0 %v2001
      %2618 = vmatpush2.msra.mxu0 %v2000
      %2619 = vmatprep.subr.mxu0 %v1998
      %2620 = vmatpush2.msra.mxu0 %v1997
      %2621 = vmatprep.subr.mxu0 %v1995
      %2622 = vmatpush2.msra.mxu0 %v1994
      %2623 = vmatprep.mubr.f32.mxu0 %v1941
      %2624 = vmatmul.mubr.f32.gmra.mxu0 %v1940
      %v2625 = vpop.f32.mrf.mxu0
      %v2626 = vadd.f32 %v2394, %v2625
      %v2627 = vpop.f32.mrf.mxu0
      %v2628 = vadd.f32 %v2396, %v2627
      %2629 = vmatprep.mubr.f32.mxu0 %v1944
      %2630 = vmatmul.mubr.f32.gmra.mxu0 %v1943
      %v2631 = vpop.f32.mrf.mxu0
      %v2632 = vadd.f32 %v2400, %v2631
      %v2633 = vpop.f32.mrf.mxu0
      %v2634 = vadd.f32 %v2402, %v2633
      %2635 = vdwg.mxu0
      %2636 = vmatprep.subr.mxu0 0.0
      %2637 = vmatpush1.msra.mxu0 0.0
      %2638 = vmatprep.subr.mxu0 0.0
      %2639 = vmatpush1.msra.mxu0 0.0
      %2640 = vmatprep.subr.mxu0 0.0
      %2641 = vmatpush1.msra.mxu0 0.0
      %2642 = vmatprep.subr.mxu0 0.0
      %2643 = vmatpush1.msra.mxu0 0.0
      %2644 = vmatprep.subr.mxu0 %v2076
      %2645 = vmatpush1.msra.mxu0 %v2075
      %2646 = vmatprep.subr.mxu0 %v2073
      %2647 = vmatpush1.msra.mxu0 %v2072
      %2648 = vmatprep.subr.mxu0 %v2070
      %2649 = vmatpush1.msra.mxu0 %v2069
      %2650 = vmatprep.subr.mxu0 %v2067
      %2651 = vmatpush1.msra.mxu0 %v2066
      %2652 = vmatprep.subr.mxu0 %v2064
      %2653 = vmatpush1.msra.mxu0 %v2063
      %2654 = vmatprep.subr.mxu0 %v2061
      %2655 = vmatpush1.msra.mxu0 %v2060
      %2656 = vmatprep.subr.mxu0 %v2058
      %2657 = vmatpush1.msra.mxu0 %v2057
      %2658 = vmatprep.subr.mxu0 %v2055
      %2659 = vmatpush1.msra.mxu0 %v2054
      %2660 = vmatprep.subr.mxu0 %v2052
      %2661 = vmatpush1.msra.mxu0 %v2051
      %2662 = vmatprep.subr.mxu0 %v2049
      %2663 = vmatpush1.msra.mxu0 %v2048
      %2664 = vmatprep.subr.mxu0 %v2046
      %2665 = vmatpush1.msra.mxu0 %v2045
      %2666 = vmatprep.subr.mxu0 %v2043
      %2667 = vmatpush1.msra.mxu0 %v2042
      %2668 = vmatprep.subr.mxu0 0.0
      %2669 = vmatpush2.msra.mxu0 0.0
      %2670 = vmatprep.subr.mxu0 0.0
      %2671 = vmatpush2.msra.mxu0 0.0
      %2672 = vmatprep.subr.mxu0 0.0
      %2673 = vmatpush2.msra.mxu0 0.0
      %2674 = vmatprep.subr.mxu0 0.0
      %2675 = vmatpush2.msra.mxu0 0.0
      %2676 = vmatprep.subr.mxu0 0.0
      %2677 = vmatpush2.msra.mxu0 0.0
      %2678 = vmatprep.subr.mxu0 0.0
      %2679 = vmatpush2.msra.mxu0 0.0
      %2680 = vmatprep.subr.mxu0 0.0
      %2681 = vmatpush2.msra.mxu0 0.0
      %2682 = vmatprep.subr.mxu0 0.0
      %2683 = vmatpush2.msra.mxu0 0.0
      %2684 = vmatprep.subr.mxu0 0.0
      %2685 = vmatpush2.msra.mxu0 0.0
      %2686 = vmatprep.subr.mxu0 0.0
      %2687 = vmatpush2.msra.mxu0 0.0
      %2688 = vmatprep.subr.mxu0 0.0
      %2689 = vmatpush2.msra.mxu0 0.0
      %2690 = vmatprep.subr.mxu0 0.0
      %2691 = vmatpush2.msra.mxu0 0.0
      %2692 = vmatprep.subr.mxu0 0.0
      %2693 = vmatpush2.msra.mxu0 0.0
      %2694 = vmatprep.subr.mxu0 0.0
      %2695 = vmatpush2.msra.mxu0 0.0
      %2696 = vmatprep.subr.mxu0 0.0
      %2697 = vmatpush2.msra.mxu0 0.0
      %2698 = vmatprep.subr.mxu0 0.0
      %2699 = vmatpush2.msra.mxu0 0.0
      %2700 = vmatprep.mubr.f32.mxu0 0.0
      %2701 = vmatmul.mubr.f32.gmra.mxu0 %v2555
      %v2702 = vpop.f32.mrf.mxu0
      %v2703 = vadd.f32 %v2626, %v2702
      %v2704 = vpop.f32.mrf.mxu0
      %v2705 = vadd.f32 %v2628, %v2704
      %2706 = vmatprep.mubr.f32.mxu0 0.0
      %2707 = vmatmul.mubr.f32.gmra.mxu0 %v2557
      %v2708 = vpop.f32.mrf.mxu0
      %v2709 = vadd.f32 %v2632, %v2708
      %v2710 = vpop.f32.mrf.mxu0
      %v2711 = vadd.f32 %v2634, %v2710
      %2712 = vdwg.mxu0
      %2713 = vmatprep.subr.mxu0 0.0
      %2714 = vmatpush1.msra.mxu0 %v1993
      %2715 = vmatprep.subr.mxu0 0.0
      %2716 = vmatpush1.msra.mxu0 %v1990
      %2717 = vmatprep.subr.mxu0 0.0
      %2718 = vmatpush1.msra.mxu0 %v1987
      %2719 = vmatprep.subr.mxu0 0.0
      %2720 = vmatpush1.msra.mxu0 %v1984
      %2721 = vmatprep.subr.mxu0 0.0
      %2722 = vmatpush1.msra.mxu0 %v1981
      %2723 = vmatprep.subr.mxu0 0.0
      %2724 = vmatpush1.msra.mxu0 %v1978
      %2725 = vmatprep.subr.mxu0 0.0
      %2726 = vmatpush1.msra.mxu0 %v1975
      %2727 = vmatprep.subr.mxu0 0.0
      %2728 = vmatpush1.msra.mxu0 %v1972
      %2729 = vmatprep.subr.mxu0 0.0
      %2730 = vmatpush1.msra.mxu0 %v1969
      %2731 = vmatprep.subr.mxu0 0.0
      %2732 = vmatpush1.msra.mxu0 %v1966
      %2733 = vmatprep.subr.mxu0 0.0
      %2734 = vmatpush1.msra.mxu0 %v1963
      %2735 = vmatprep.subr.mxu0 0.0
      %2736 = vmatpush1.msra.mxu0 %v1960
      %2737 = vmatprep.subr.mxu0 0.0
      %2738 = vmatpush1.msra.mxu0 %v1957
      %2739 = vmatprep.subr.mxu0 0.0
      %2740 = vmatpush1.msra.mxu0 %v1954
      %2741 = vmatprep.subr.mxu0 0.0
      %2742 = vmatpush1.msra.mxu0 %v1951
      %2743 = vmatprep.subr.mxu0 0.0
      %2744 = vmatpush1.msra.mxu0 %v1948
      %2745 = vmatprep.subr.mxu0 0.0
      %2746 = vmatpush2.msra.mxu0 %v2041
      %2747 = vmatprep.subr.mxu0 0.0
      %2748 = vmatpush2.msra.mxu0 %v2038
      %2749 = vmatprep.subr.mxu0 0.0
      %2750 = vmatpush2.msra.mxu0 %v2035
      %2751 = vmatprep.subr.mxu0 0.0
      %2752 = vmatpush2.msra.mxu0 %v2032
      %2753 = vmatprep.subr.mxu0 0.0
      %2754 = vmatpush2.msra.mxu0 %v2029
      %2755 = vmatprep.subr.mxu0 0.0
      %2756 = vmatpush2.msra.mxu0 %v2026
      %2757 = vmatprep.subr.mxu0 0.0
      %2758 = vmatpush2.msra.mxu0 %v2023
      %2759 = vmatprep.subr.mxu0 0.0
      %2760 = vmatpush2.msra.mxu0 %v2020
      %2761 = vmatprep.subr.mxu0 0.0
      %2762 = vmatpush2.msra.mxu0 %v2017
      %2763 = vmatprep.subr.mxu0 0.0
      %2764 = vmatpush2.msra.mxu0 %v2014
      %2765 = vmatprep.subr.mxu0 0.0
      %2766 = vmatpush2.msra.mxu0 %v2011
      %2767 = vmatprep.subr.mxu0 0.0
      %2768 = vmatpush2.msra.mxu0 %v2008
      %2769 = vmatprep.subr.mxu0 0.0
      %2770 = vmatpush2.msra.mxu0 %v2005
      %2771 = vmatprep.subr.mxu0 0.0
      %2772 = vmatpush2.msra.mxu0 %v2002
      %2773 = vmatprep.subr.mxu0 0.0
      %2774 = vmatpush2.msra.mxu0 %v1999
      %2775 = vmatprep.subr.mxu0 0.0
      %2776 = vmatpush2.msra.mxu0 %v1996
      %2777 = vmatprep.mubr.f32.mxu0 %v1941
      %2778 = vmatmul.mubr.f32.gmra.mxu0 %v1940
      %v2779 = vpop.f32.mrf.mxu0
      %v2780 = vadd.f32 %v2546, %v2779
      %v2781 = vpop.f32.mrf.mxu0
      %2782 = vmatprep.mubr.f32.mxu0 %v1944
      %2783 = vmatmul.mubr.f32.gmra.mxu0 %v1943
      %v2784 = vpop.f32.mrf.mxu0
      %v2785 = vadd.f32 %v2551, %v2784
      %v2786 = vpop.f32.mrf.mxu0
      %2787 = vdwg.mxu0
      %2788 = vmatprep.subr.mxu0 0.0
      %2789 = vmatpush1.msra.mxu0 0.0
      %2790 = vmatprep.subr.mxu0 0.0
      %2791 = vmatpush1.msra.mxu0 0.0
      %2792 = vmatprep.subr.mxu0 0.0
      %2793 = vmatpush1.msra.mxu0 0.0
      %2794 = vmatprep.subr.mxu0 0.0
      %2795 = vmatpush1.msra.mxu0 0.0
      %2796 = vmatprep.subr.mxu0 0.0
      %2797 = vmatpush1.msra.mxu0 %v2077
      %2798 = vmatprep.subr.mxu0 0.0
      %2799 = vmatpush1.msra.mxu0 %v2074
      %2800 = vmatprep.subr.mxu0 0.0
      %2801 = vmatpush1.msra.mxu0 %v2071
      %2802 = vmatprep.subr.mxu0 0.0
      %2803 = vmatpush1.msra.mxu0 %v2068
      %2804 = vmatprep.subr.mxu0 0.0
      %2805 = vmatpush1.msra.mxu0 %v2065
      %2806 = vmatprep.subr.mxu0 0.0
      %2807 = vmatpush1.msra.mxu0 %v2062
      %2808 = vmatprep.subr.mxu0 0.0
      %2809 = vmatpush1.msra.mxu0 %v2059
      %2810 = vmatprep.subr.mxu0 0.0
      %2811 = vmatpush1.msra.mxu0 %v2056
      %2812 = vmatprep.subr.mxu0 0.0
      %2813 = vmatpush1.msra.mxu0 %v2053
      %2814 = vmatprep.subr.mxu0 0.0
      %2815 = vmatpush1.msra.mxu0 %v2050
      %2816 = vmatprep.subr.mxu0 0.0
      %2817 = vmatpush1.msra.mxu0 %v2047
      %2818 = vmatprep.subr.mxu0 0.0
      %2819 = vmatpush1.msra.mxu0 %v2044
      %2820 = vmatprep.subr.mxu0 0.0
      %2821 = vmatpush2.msra.mxu0 0.0
      %2822 = vmatprep.subr.mxu0 0.0
      %2823 = vmatpush2.msra.mxu0 0.0
      %2824 = vmatprep.subr.mxu0 0.0
      %2825 = vmatpush2.msra.mxu0 0.0
      %2826 = vmatprep.subr.mxu0 0.0
      %2827 = vmatpush2.msra.mxu0 0.0
      %2828 = vmatprep.subr.mxu0 0.0
      %2829 = vmatpush2.msra.mxu0 0.0
      %2830 = vmatprep.subr.mxu0 0.0
      %2831 = vmatpush2.msra.mxu0 0.0
      %2832 = vmatprep.subr.mxu0 0.0
      %2833 = vmatpush2.msra.mxu0 0.0
      %2834 = vmatprep.subr.mxu0 0.0
      %2835 = vmatpush2.msra.mxu0 0.0
      %2836 = vmatprep.subr.mxu0 0.0
      %2837 = vmatpush2.msra.mxu0 0.0
      %2838 = vmatprep.subr.mxu0 0.0
      %2839 = vmatpush2.msra.mxu0 0.0
      %2840 = vmatprep.subr.mxu0 0.0
      %2841 = vmatpush2.msra.mxu0 0.0
      %2842 = vmatprep.subr.mxu0 0.0
      %2843 = vmatpush2.msra.mxu0 0.0
      %2844 = vmatprep.subr.mxu0 0.0
      %2845 = vmatpush2.msra.mxu0 0.0
      %2846 = vmatprep.subr.mxu0 0.0
      %2847 = vmatpush2.msra.mxu0 0.0
      %2848 = vmatprep.subr.mxu0 0.0
      %2849 = vmatpush2.msra.mxu0 0.0
      %2850 = vmatprep.subr.mxu0 0.0
      %2851 = vmatpush2.msra.mxu0 0.0
      %2852 = vmatprep.mubr.f32.mxu0 0.0
      %2853 = vmatmul.mubr.f32.gmra.mxu0 %v2555
      %v2854 = vpop.f32.mrf.mxu0
      %v2855 = vadd.f32 %v2780, %v2854
      %v2856 = vpop.f32.mrf.mxu0
      %2857 = vmatprep.mubr.f32.mxu0 0.0
      %2858 = vmatmul.mubr.f32.gmra.mxu0 %v2557
      %v2859 = vpop.f32.mrf.mxu0
      %v2860 = vadd.f32 %v2785, %v2859
      %v2861 = vpop.f32.mrf.mxu0
      %2862 = vdwg.mxu0
      %v2863 = vld [vmem:[#allocation2] sm:$0xfc]
      %v2864 = vld [vmem:[#allocation2 + $0x8] sm:$0xfc]
      %v2865 = vld [vmem:[#allocation2 + $0x10] sm:$0xfc]
      %v2866 = vld [vmem:[#allocation2 + $0x30] sm:$0x3]
      %v2867 = vld [vmem:[#allocation2 + $0x38] sm:$0x3]
      %v2868 = vld [vmem:[#allocation2 + $0x40] sm:$0x3]
      %s2869 = scalar_lea.vmem %s4, 2112
      %v2870 = vld [vmem:[%s2869] sm:$0xff]
      %v2871 = vld [vmem:[%s2869 + $0x8] sm:$0xff]
      %v2872 = vld [vmem:[%s2869 + $0x10] sm:$0xff]
      %v2873 = vld [vmem:[%s2869 + $0x18] sm:$0xff]
      %v2874 = vld [vmem:[%s2869 + $0x20] sm:$0xff]
      %v2875 = vld [vmem:[%s2869 + $0x28] sm:$0xff]
      %v2876 = vld [vmem:[%s2869 + $0x30] sm:$0xff]
      %v2877 = vld [vmem:[%s2869 + $0x38] sm:$0xff]
      %v2878 = vld [vmem:[%s2869 + $0x40] sm:$0xff]
      %v2879 = vld [vmem:[%s2869 + $0x48] sm:$0xff]
      %v2880 = vld [vmem:[%s2869 + $0x50] sm:$0xff]
      %v2881 = vld [vmem:[%s2869 + $0x58] sm:$0xff]
      %v2882 = vld [vmem:[%s2869 + $0x60] sm:$0xff]
      %v2883 = vld [vmem:[%s2869 + $0x68] sm:$0xff]
      %v2884 = vld [vmem:[%s2869 + $0x70] sm:$0xff]
      %v2885 = vld [vmem:[%s2869 + $0x78] sm:$0xff]
      %v2886 = vld [vmem:[%s2869 + $0x80] sm:$0xff]
      %v2887 = vld [vmem:[%s2869 + $0x88] sm:$0xff]
      %v2888 = vld [vmem:[%s2869 + $0x90] sm:$0xff]
      %v2889 = vld [vmem:[%s2869 + $0x98] sm:$0xff]
      %v2890 = vld [vmem:[%s2869 + $0xa0] sm:$0xff]
      %v2891 = vld [vmem:[%s2869 + $0xa8] sm:$0xff]
      %v2892 = vld [vmem:[%s2869 + $0xb0] sm:$0xff]
      %v2893 = vld [vmem:[%s2869 + $0xb8] sm:$0xff]
      %v2894 = vld [vmem:[%s2869 + $0xc0] sm:$0xff]
      %v2895 = vld [vmem:[%s2869 + $0xc8] sm:$0xff]
      %v2896 = vld [vmem:[%s2869 + $0xd0] sm:$0xff]
      %v2897 = vld [vmem:[%s2869 + $0xd8] sm:$0xff]
      %v2898 = vld [vmem:[%s2869 + $0xe0] sm:$0xff]
      %v2899 = vld [vmem:[%s2869 + $0xe8] sm:$0xff]
      %v2900 = vld [vmem:[%s2869 + $0xf0] sm:$0xff]
      %v2901 = vld [vmem:[%s2869 + $0xf8] sm:$0xff]
      %v2902 = vld [vmem:[%s2869 + $0x100] sm:$0xff]
      %v2903 = vld [vmem:[%s2869 + $0x108] sm:$0xff]
      %v2904 = vld [vmem:[%s2869 + $0x110] sm:$0xff]
      %v2905 = vld [vmem:[%s2869 + $0x118] sm:$0xff]
      %v2906 = vld [vmem:[%s2869 + $0x120] sm:$0xff]
      %v2907 = vld [vmem:[%s2869 + $0x128] sm:$0xff]
      %v2908 = vld [vmem:[%s2869 + $0x130] sm:$0xff]
      %v2909 = vld [vmem:[%s2869 + $0x138] sm:$0xff]
      %v2910 = vld [vmem:[%s2869 + $0x140] sm:$0xff]
      %v2911 = vld [vmem:[%s2869 + $0x148] sm:$0xff]
      %v2912 = vld [vmem:[%s2869 + $0x150] sm:$0xff]
      %v2913 = vld [vmem:[%s2869 + $0x158] sm:$0xff]
      %v2914 = vld [vmem:[%s2869 + $0x160] sm:$0xff]
      %v2915 = vld [vmem:[%s2869 + $0x168] sm:$0xff]
      %v2916 = vld [vmem:[%s2869 + $0x170] sm:$0xff]
      %v2917 = vld [vmem:[%s2869 + $0x178] sm:$0xff]
      %v2918 = vld [vmem:[%s2869 + $0x180] sm:$0xff]
      %v2919 = vld [vmem:[%s2869 + $0x188] sm:$0xff]
      %v2920 = vld [vmem:[%s2869 + $0x190] sm:$0xff]
      %v2921 = vld [vmem:[%s2869 + $0x198] sm:$0xff]
      %v2922 = vld [vmem:[%s2869 + $0x1a0] sm:$0xff]
      %v2923 = vld [vmem:[%s2869 + $0x1a8] sm:$0xff]
      %v2924 = vld [vmem:[%s2869 + $0x1b0] sm:$0xff]
      %v2925 = vld [vmem:[%s2869 + $0x1b8] sm:$0xff]
      %v2926 = vld [vmem:[%s2869 + $0x1c0] sm:$0xff]
      %v2927 = vld [vmem:[%s2869 + $0x1c8] sm:$0xff]
      %v2928 = vld [vmem:[%s2869 + $0x1d0] sm:$0xff]
      %v2929 = vld [vmem:[%s2869 + $0x1d8] sm:$0xff]
      %v2930 = vld [vmem:[%s2869 + $0x1e0] sm:$0xff]
      %v2931 = vld [vmem:[%s2869 + $0x1e8] sm:$0xff]
      %v2932 = vld [vmem:[%s2869 + $0x1f0] sm:$0xff]
      %v2933 = vld [vmem:[%s2869 + $0x1f8] sm:$0xff]
      %v2934 = vld [vmem:[%s2869 + $0x200] sm:$0xff]
      %v2935 = vld [vmem:[%s2869 + $0x208] sm:$0xff]
      %v2936 = vld [vmem:[%s2869 + $0x210] sm:$0xff]
      %v2937 = vld [vmem:[%s2869 + $0x218] sm:$0xff]
      %v2938 = vld [vmem:[%s2869 + $0x220] sm:$0xff]
      %v2939 = vld [vmem:[%s2869 + $0x228] sm:$0xff]
      %v2940 = vld [vmem:[%s2869 + $0x230] sm:$0xff]
      %v2941 = vld [vmem:[%s2869 + $0x238] sm:$0xff]
      %v2942 = vld [vmem:[%s2869 + $0x240] sm:$0xff]
      %v2943 = vld [vmem:[%s2869 + $0x248] sm:$0xff]
      %v2944 = vld [vmem:[%s2869 + $0x250] sm:$0xff]
      %v2945 = vld [vmem:[%s2869 + $0x258] sm:$0xff]
      %v2946 = vld [vmem:[%s2869 + $0x260] sm:$0xff]
      %v2947 = vld [vmem:[%s2869 + $0x268] sm:$0xff]
      %v2948 = vld [vmem:[%s2869 + $0x270] sm:$0xff]
      %v2949 = vld [vmem:[%s2869 + $0x278] sm:$0xff]
      %v2950 = vld [vmem:[%s2869 + $0x280] sm:$0xff]
      %v2951 = vld [vmem:[%s2869 + $0x288] sm:$0xff]
      %v2952 = vld [vmem:[%s2869 + $0x290] sm:$0xff]
      %v2953 = vld [vmem:[%s2869 + $0x298] sm:$0xff]
      %v2954 = vld [vmem:[%s2869 + $0x2a0] sm:$0xff]
      %v2955 = vld [vmem:[%s2869 + $0x2a8] sm:$0xff]
      %v2956 = vld [vmem:[%s2869 + $0x2b0] sm:$0xff]
      %v2957 = vld [vmem:[%s2869 + $0x2b8] sm:$0xff]
      %v2958 = vld [vmem:[%s2869 + $0x2c0] sm:$0xff]
      %v2959 = vld [vmem:[%s2869 + $0x2c8] sm:$0xff]
      %v2960 = vld [vmem:[%s2869 + $0x2d0] sm:$0xff]
      %v2961 = vld [vmem:[%s2869 + $0x2d8] sm:$0xff]
      %v2962 = vld [vmem:[%s2869 + $0x2e0] sm:$0xff]
      %v2963 = vld [vmem:[%s2869 + $0x2e8] sm:$0xff]
      %v2964 = vld [vmem:[%s2869 + $0x2f0] sm:$0xff]
      %v2965 = vld [vmem:[%s2869 + $0x2f8] sm:$0xff]
      %v2966 = vld [vmem:[%s2869 + $0x300] sm:$0xff]
      %v2967 = vld [vmem:[%s2869 + $0x308] sm:$0xff]
      %v2968 = vld [vmem:[%s2869 + $0x310] sm:$0xff]
      %v2969 = vld [vmem:[%s2869 + $0x318] sm:$0xff]
      %v2970 = vld [vmem:[%s2869 + $0x320] sm:$0xff]
      %v2971 = vld [vmem:[%s2869 + $0x328] sm:$0xff]
      %v2972 = vld [vmem:[%s2869 + $0x330] sm:$0xff]
      %v2973 = vld [vmem:[%s2869 + $0x338] sm:$0xff]
      %v2974 = vld [vmem:[%s2869 + $0x340] sm:$0xff]
      %v2975 = vld [vmem:[%s2869 + $0x348] sm:$0xff]
      %v2976 = vld [vmem:[%s2869 + $0x350] sm:$0xff]
      %v2977 = vld [vmem:[%s2869 + $0x358] sm:$0xff]
      %v2978 = vld [vmem:[%s2869 + $0x360] sm:$0xff]
      %v2979 = vld [vmem:[%s2869 + $0x368] sm:$0xff]
      %v2980 = vld [vmem:[%s2869 + $0x370] sm:$0xff]
      %v2981 = vld [vmem:[%s2869 + $0x378] sm:$0xff]
      %v2982 = vld [vmem:[%s2869 + $0x380] sm:$0xff]
      %v2983 = vld [vmem:[%s2869 + $0x388] sm:$0xff]
      %v2984 = vld [vmem:[%s2869 + $0x390] sm:$0xff]
      %v2985 = vld [vmem:[%s2869 + $0x398] sm:$0xff]
      %v2986 = vld [vmem:[%s2869 + $0x3a0] sm:$0xff]
      %v2987 = vld [vmem:[%s2869 + $0x3a8] sm:$0xff]
      %v2988 = vld [vmem:[%s2869 + $0x3b0] sm:$0xff]
      %v2989 = vld [vmem:[%s2869 + $0x3b8] sm:$0xff]
      %v2990 = vld [vmem:[%s2869 + $0x3c0] sm:$0xff]
      %v2991 = vld [vmem:[%s2869 + $0x3c8] sm:$0xff]
      %v2992 = vld [vmem:[%s2869 + $0x3d0] sm:$0xff]
      %v2993 = vld [vmem:[%s2869 + $0x3d8] sm:$0xff]
      %v2994 = vld [vmem:[%s2869 + $0x3e0] sm:$0xff]
      %v2995 = vld [vmem:[%s2869 + $0x3e8] sm:$0xff]
      %v2996 = vld [vmem:[%s2869 + $0x3f0] sm:$0xff]
      %v2997 = vld [vmem:[%s2869 + $0x3f8] sm:$0xff]
      %v2998 = vld [vmem:[%s2869 + $0x400] sm:$0xff]
      %v2999 = vld [vmem:[%s2869 + $0x408] sm:$0xff]
      %v3000 = vld [vmem:[%s2869 + $0x410] sm:$0xff]
      %v3001 = vld [vmem:[%s2869 + $0x418] sm:$0xff]
      %v3008 = vrot.slane %v2863, 2
      %v3009 = vrot.slane %v1943, 2
      %v3010 = vsel %vm525, %v3008, %v3009
      %v3011 = vrot.slane %v2864, 2
      %v3012 = vrot.slane %v1944, 2
      %v3013 = vsel %vm525, %v3011, %v3012
      %v3014 = vrot.slane %v2865, 2
      %v3015 = vrot.slane %v1945, 2
      %v3016 = vsel %vm525, %v3014, %v3015
      %v3017 = vrot.slane %v2866, 2
      %v3018 = vsel %vm525, %v3009, %v3017
      %v3019 = vrot.slane %v2867, 2
      %v3020 = vsel %vm525, %v3012, %v3019
      %v3021 = vrot.slane %v2868, 2
      %v3022 = vsel %vm525, %v3015, %v3021
      %v3027 = vsel %vm1934, %v3016, 0
      %v3029 = vsel %vm1934, %v3022, 0
      %3031 = vmatprep.subr.mxu0 %v2916
      %3032 = vmatpush1.msra.mxu0 %v2915
      %3033 = vmatprep.subr.mxu0 %v2913
      %3034 = vmatpush1.msra.mxu0 %v2912
      %3035 = vmatprep.subr.mxu0 %v2910
      %3036 = vmatpush1.msra.mxu0 %v2909
      %3037 = vmatprep.subr.mxu0 %v2907
      %3038 = vmatpush1.msra.mxu0 %v2906
      %3039 = vmatprep.subr.mxu0 %v2904
      %3040 = vmatpush1.msra.mxu0 %v2903
      %3041 = vmatprep.subr.mxu0 %v2901
      %3042 = vmatpush1.msra.mxu0 %v2900
      %3043 = vmatprep.subr.mxu0 %v2898
      %3044 = vmatpush1.msra.mxu0 %v2897
      %3045 = vmatprep.subr.mxu0 %v2895
      %3046 = vmatpush1.msra.mxu0 %v2894
      %3047 = vmatprep.subr.mxu0 %v2892
      %3048 = vmatpush1.msra.mxu0 %v2891
      %3049 = vmatprep.subr.mxu0 %v2889
      %3050 = vmatpush1.msra.mxu0 %v2888
      %3051 = vmatprep.subr.mxu0 %v2886
      %3052 = vmatpush1.msra.mxu0 %v2885
      %3053 = vmatprep.subr.mxu0 %v2883
      %3054 = vmatpush1.msra.mxu0 %v2882
      %3055 = vmatprep.subr.mxu0 %v2880
      %3056 = vmatpush1.msra.mxu0 %v2879
      %3057 = vmatprep.subr.mxu0 %v2877
      %3058 = vmatpush1.msra.mxu0 %v2876
      %3059 = vmatprep.subr.mxu0 %v2874
      %3060 = vmatpush1.msra.mxu0 %v2873
      %3061 = vmatprep.subr.mxu0 %v2871
      %3062 = vmatpush1.msra.mxu0 %v2870
      %3063 = vmatprep.subr.mxu0 %v2964
      %3064 = vmatpush2.msra.mxu0 %v2963
      %3065 = vmatprep.subr.mxu0 %v2961
      %3066 = vmatpush2.msra.mxu0 %v2960
      %3067 = vmatprep.subr.mxu0 %v2958
      %3068 = vmatpush2.msra.mxu0 %v2957
      %3069 = vmatprep.subr.mxu0 %v2955
      %3070 = vmatpush2.msra.mxu0 %v2954
      %3071 = vmatprep.subr.mxu0 %v2952
      %3072 = vmatpush2.msra.mxu0 %v2951
      %3073 = vmatprep.subr.mxu0 %v2949
      %3074 = vmatpush2.msra.mxu0 %v2948
      %3075 = vmatprep.subr.mxu0 %v2946
      %3076 = vmatpush2.msra.mxu0 %v2945
      %3077 = vmatprep.subr.mxu0 %v2943
      %3078 = vmatpush2.msra.mxu0 %v2942
      %3079 = vmatprep.subr.mxu0 %v2940
      %3080 = vmatpush2.msra.mxu0 %v2939
      %3081 = vmatprep.subr.mxu0 %v2937
      %3082 = vmatpush2.msra.mxu0 %v2936
      %3083 = vmatprep.subr.mxu0 %v2934
      %3084 = vmatpush2.msra.mxu0 %v2933
      %3085 = vmatprep.subr.mxu0 %v2931
      %3086 = vmatpush2.msra.mxu0 %v2930
      %3087 = vmatprep.subr.mxu0 %v2928
      %3088 = vmatpush2.msra.mxu0 %v2927
      %3089 = vmatprep.subr.mxu0 %v2925
      %3090 = vmatpush2.msra.mxu0 %v2924
      %3091 = vmatprep.subr.mxu0 %v2922
      %3092 = vmatpush2.msra.mxu0 %v2921
      %3093 = vmatprep.subr.mxu0 %v2919
      %3094 = vmatpush2.msra.mxu0 %v2918
      %3095 = vmatprep.mubr.f32.mxu0 %v3013
      %3096 = vmatmul.mubr.f32.gmra.mxu0 %v3010
      %v3097 = vpop.f32.mrf.mxu0
      %v3098 = vadd.f32 0.0, %v3097
      %v3099 = vpop.f32.mrf.mxu0
      %v3100 = vadd.f32 0.0, %v3099
      %3101 = vmatprep.mubr.f32.mxu0 %v3020
      %3102 = vmatmul.mubr.f32.gmra.mxu0 %v3018
      %v3103 = vpop.f32.mrf.mxu0
      %v3104 = vadd.f32 0.0, %v3103
      %v3105 = vpop.f32.mrf.mxu0
      %v3106 = vadd.f32 0.0, %v3105
      %3107 = vdwg.mxu0
      %3108 = vmatprep.subr.mxu0 0.0
      %3109 = vmatpush1.msra.mxu0 0.0
      %3110 = vmatprep.subr.mxu0 0.0
      %3111 = vmatpush1.msra.mxu0 0.0
      %3112 = vmatprep.subr.mxu0 0.0
      %3113 = vmatpush1.msra.mxu0 0.0
      %3114 = vmatprep.subr.mxu0 0.0
      %3115 = vmatpush1.msra.mxu0 0.0
      %3116 = vmatprep.subr.mxu0 %v3000
      %3117 = vmatpush1.msra.mxu0 %v2999
      %3118 = vmatprep.subr.mxu0 %v2997
      %3119 = vmatpush1.msra.mxu0 %v2996
      %3120 = vmatprep.subr.mxu0 %v2994
      %3121 = vmatpush1.msra.mxu0 %v2993
      %3122 = vmatprep.subr.mxu0 %v2991
      %3123 = vmatpush1.msra.mxu0 %v2990
      %3124 = vmatprep.subr.mxu0 %v2988
      %3125 = vmatpush1.msra.mxu0 %v2987
      %3126 = vmatprep.subr.mxu0 %v2985
      %3127 = vmatpush1.msra.mxu0 %v2984
      %3128 = vmatprep.subr.mxu0 %v2982
      %3129 = vmatpush1.msra.mxu0 %v2981
      %3130 = vmatprep.subr.mxu0 %v2979
      %3131 = vmatpush1.msra.mxu0 %v2978
      %3132 = vmatprep.subr.mxu0 %v2976
      %3133 = vmatpush1.msra.mxu0 %v2975
      %3134 = vmatprep.subr.mxu0 %v2973
      %3135 = vmatpush1.msra.mxu0 %v2972
      %3136 = vmatprep.subr.mxu0 %v2970
      %3137 = vmatpush1.msra.mxu0 %v2969
      %3138 = vmatprep.subr.mxu0 %v2967
      %3139 = vmatpush1.msra.mxu0 %v2966
      %3140 = vmatprep.subr.mxu0 0.0
      %3141 = vmatpush2.msra.mxu0 0.0
      %3142 = vmatprep.subr.mxu0 0.0
      %3143 = vmatpush2.msra.mxu0 0.0
      %3144 = vmatprep.subr.mxu0 0.0
      %3145 = vmatpush2.msra.mxu0 0.0
      %3146 = vmatprep.subr.mxu0 0.0
      %3147 = vmatpush2.msra.mxu0 0.0
      %3148 = vmatprep.subr.mxu0 0.0
      %3149 = vmatpush2.msra.mxu0 0.0
      %3150 = vmatprep.subr.mxu0 0.0
      %3151 = vmatpush2.msra.mxu0 0.0
      %3152 = vmatprep.subr.mxu0 0.0
      %3153 = vmatpush2.msra.mxu0 0.0
      %3154 = vmatprep.subr.mxu0 0.0
      %3155 = vmatpush2.msra.mxu0 0.0
      %3156 = vmatprep.subr.mxu0 0.0
      %3157 = vmatpush2.msra.mxu0 0.0
      %3158 = vmatprep.subr.mxu0 0.0
      %3159 = vmatpush2.msra.mxu0 0.0
      %3160 = vmatprep.subr.mxu0 0.0
      %3161 = vmatpush2.msra.mxu0 0.0
      %3162 = vmatprep.subr.mxu0 0.0
      %3163 = vmatpush2.msra.mxu0 0.0
      %3164 = vmatprep.subr.mxu0 0.0
      %3165 = vmatpush2.msra.mxu0 0.0
      %3166 = vmatprep.subr.mxu0 0.0
      %3167 = vmatpush2.msra.mxu0 0.0
      %3168 = vmatprep.subr.mxu0 0.0
      %3169 = vmatpush2.msra.mxu0 0.0
      %3170 = vmatprep.subr.mxu0 0.0
      %3171 = vmatpush2.msra.mxu0 0.0
      %3172 = vmatprep.mubr.f32.mxu0 0.0
      %3173 = vmatmul.mubr.f32.gmra.mxu0 %v3027
      %v3174 = vpop.f32.mrf.mxu0
      %v3175 = vadd.f32 %v3098, %v3174
      %v3176 = vpop.f32.mrf.mxu0
      %v3177 = vadd.f32 %v3100, %v3176
      %3178 = vmatprep.mubr.f32.mxu0 0.0
      %3179 = vmatmul.mubr.f32.gmra.mxu0 %v3029
      %v3180 = vpop.f32.mrf.mxu0
      %v3181 = vadd.f32 %v3104, %v3180
      %v3182 = vpop.f32.mrf.mxu0
      %v3183 = vadd.f32 %v3106, %v3182
      %3184 = vdwg.mxu0
      %3185 = vmatprep.subr.mxu0 0.0
      %3186 = vmatpush1.msra.mxu0 %v2917
      %3187 = vmatprep.subr.mxu0 0.0
      %3188 = vmatpush1.msra.mxu0 %v2914
      %3189 = vmatprep.subr.mxu0 0.0
      %3190 = vmatpush1.msra.mxu0 %v2911
      %3191 = vmatprep.subr.mxu0 0.0
      %3192 = vmatpush1.msra.mxu0 %v2908
      %3193 = vmatprep.subr.mxu0 0.0
      %3194 = vmatpush1.msra.mxu0 %v2905
      %3195 = vmatprep.subr.mxu0 0.0
      %3196 = vmatpush1.msra.mxu0 %v2902
      %3197 = vmatprep.subr.mxu0 0.0
      %3198 = vmatpush1.msra.mxu0 %v2899
      %3199 = vmatprep.subr.mxu0 0.0
      %3200 = vmatpush1.msra.mxu0 %v2896
      %3201 = vmatprep.subr.mxu0 0.0
      %3202 = vmatpush1.msra.mxu0 %v2893
      %3203 = vmatprep.subr.mxu0 0.0
      %3204 = vmatpush1.msra.mxu0 %v2890
      %3205 = vmatprep.subr.mxu0 0.0
      %3206 = vmatpush1.msra.mxu0 %v2887
      %3207 = vmatprep.subr.mxu0 0.0
      %3208 = vmatpush1.msra.mxu0 %v2884
      %3209 = vmatprep.subr.mxu0 0.0
      %3210 = vmatpush1.msra.mxu0 %v2881
      %3211 = vmatprep.subr.mxu0 0.0
      %3212 = vmatpush1.msra.mxu0 %v2878
      %3213 = vmatprep.subr.mxu0 0.0
      %3214 = vmatpush1.msra.mxu0 %v2875
      %3215 = vmatprep.subr.mxu0 0.0
      %3216 = vmatpush1.msra.mxu0 %v2872
      %3217 = vmatprep.subr.mxu0 0.0
      %3218 = vmatpush2.msra.mxu0 %v2965
      %3219 = vmatprep.subr.mxu0 0.0
      %3220 = vmatpush2.msra.mxu0 %v2962
      %3221 = vmatprep.subr.mxu0 0.0
      %3222 = vmatpush2.msra.mxu0 %v2959
      %3223 = vmatprep.subr.mxu0 0.0
      %3224 = vmatpush2.msra.mxu0 %v2956
      %3225 = vmatprep.subr.mxu0 0.0
      %3226 = vmatpush2.msra.mxu0 %v2953
      %3227 = vmatprep.subr.mxu0 0.0
      %3228 = vmatpush2.msra.mxu0 %v2950
      %3229 = vmatprep.subr.mxu0 0.0
      %3230 = vmatpush2.msra.mxu0 %v2947
      %3231 = vmatprep.subr.mxu0 0.0
      %3232 = vmatpush2.msra.mxu0 %v2944
      %3233 = vmatprep.subr.mxu0 0.0
      %3234 = vmatpush2.msra.mxu0 %v2941
      %3235 = vmatprep.subr.mxu0 0.0
      %3236 = vmatpush2.msra.mxu0 %v2938
      %3237 = vmatprep.subr.mxu0 0.0
      %3238 = vmatpush2.msra.mxu0 %v2935
      %3239 = vmatprep.subr.mxu0 0.0
      %3240 = vmatpush2.msra.mxu0 %v2932
      %3241 = vmatprep.subr.mxu0 0.0
      %3242 = vmatpush2.msra.mxu0 %v2929
      %3243 = vmatprep.subr.mxu0 0.0
      %3244 = vmatpush2.msra.mxu0 %v2926
      %3245 = vmatprep.subr.mxu0 0.0
      %3246 = vmatpush2.msra.mxu0 %v2923
      %3247 = vmatprep.subr.mxu0 0.0
      %3248 = vmatpush2.msra.mxu0 %v2920
      %3249 = vmatprep.mubr.f32.mxu0 %v3013
      %3250 = vmatmul.mubr.f32.gmra.mxu0 %v3010
      %v3251 = vpop.f32.mrf.mxu0
      %v3252 = vadd.f32 0.0, %v3251
      %v3253 = vpop.f32.mrf.mxu0
      %3254 = vmatprep.mubr.f32.mxu0 %v3020
      %3255 = vmatmul.mubr.f32.gmra.mxu0 %v3018
      %v3256 = vpop.f32.mrf.mxu0
      %v3257 = vadd.f32 0.0, %v3256
      %v3258 = vpop.f32.mrf.mxu0
      %3259 = vdwg.mxu0
      %3260 = vmatprep.subr.mxu0 0.0
      %3261 = vmatpush1.msra.mxu0 0.0
      %3262 = vmatprep.subr.mxu0 0.0
      %3263 = vmatpush1.msra.mxu0 0.0
      %3264 = vmatprep.subr.mxu0 0.0
      %3265 = vmatpush1.msra.mxu0 0.0
      %3266 = vmatprep.subr.mxu0 0.0
      %3267 = vmatpush1.msra.mxu0 0.0
      %3268 = vmatprep.subr.mxu0 0.0
      %3269 = vmatpush1.msra.mxu0 %v3001
      %3270 = vmatprep.subr.mxu0 0.0
      %3271 = vmatpush1.msra.mxu0 %v2998
      %3272 = vmatprep.subr.mxu0 0.0
      %3273 = vmatpush1.msra.mxu0 %v2995
      %3274 = vmatprep.subr.mxu0 0.0
      %3275 = vmatpush1.msra.mxu0 %v2992
      %3276 = vmatprep.subr.mxu0 0.0
      %3277 = vmatpush1.msra.mxu0 %v2989
      %3278 = vmatprep.subr.mxu0 0.0
      %3279 = vmatpush1.msra.mxu0 %v2986
      %3280 = vmatprep.subr.mxu0 0.0
      %3281 = vmatpush1.msra.mxu0 %v2983
      %3282 = vmatprep.subr.mxu0 0.0
      %3283 = vmatpush1.msra.mxu0 %v2980
      %3284 = vmatprep.subr.mxu0 0.0
      %3285 = vmatpush1.msra.mxu0 %v2977
      %3286 = vmatprep.subr.mxu0 0.0
      %3287 = vmatpush1.msra.mxu0 %v2974
      %3288 = vmatprep.subr.mxu0 0.0
      %3289 = vmatpush1.msra.mxu0 %v2971
      %3290 = vmatprep.subr.mxu0 0.0
      %3291 = vmatpush1.msra.mxu0 %v2968
      %3292 = vmatprep.subr.mxu0 0.0
      %3293 = vmatpush2.msra.mxu0 0.0
      %3294 = vmatprep.subr.mxu0 0.0
      %3295 = vmatpush2.msra.mxu0 0.0
      %3296 = vmatprep.subr.mxu0 0.0
      %3297 = vmatpush2.msra.mxu0 0.0
      %3298 = vmatprep.subr.mxu0 0.0
      %3299 = vmatpush2.msra.mxu0 0.0
      %3300 = vmatprep.subr.mxu0 0.0
      %3301 = vmatpush2.msra.mxu0 0.0
      %3302 = vmatprep.subr.mxu0 0.0
      %3303 = vmatpush2.msra.mxu0 0.0
      %3304 = vmatprep.subr.mxu0 0.0
      %3305 = vmatpush2.msra.mxu0 0.0
      %3306 = vmatprep.subr.mxu0 0.0
      %3307 = vmatpush2.msra.mxu0 0.0
      %3308 = vmatprep.subr.mxu0 0.0
      %3309 = vmatpush2.msra.mxu0 0.0
      %3310 = vmatprep.subr.mxu0 0.0
      %3311 = vmatpush2.msra.mxu0 0.0
      %3312 = vmatprep.subr.mxu0 0.0
      %3313 = vmatpush2.msra.mxu0 0.0
      %3314 = vmatprep.subr.mxu0 0.0
      %3315 = vmatpush2.msra.mxu0 0.0
      %3316 = vmatprep.subr.mxu0 0.0
      %3317 = vmatpush2.msra.mxu0 0.0
      %3318 = vmatprep.subr.mxu0 0.0
      %3319 = vmatpush2.msra.mxu0 0.0
      %3320 = vmatprep.subr.mxu0 0.0
      %3321 = vmatpush2.msra.mxu0 0.0
      %3322 = vmatprep.subr.mxu0 0.0
      %3323 = vmatpush2.msra.mxu0 0.0
      %3324 = vmatprep.mubr.f32.mxu0 0.0
      %3325 = vmatmul.mubr.f32.gmra.mxu0 %v3027
      %v3326 = vpop.f32.mrf.mxu0
      %v3327 = vadd.f32 %v3252, %v3326
      %v3328 = vpop.f32.mrf.mxu0
      %3329 = vmatprep.mubr.f32.mxu0 0.0
      %3330 = vmatmul.mubr.f32.gmra.mxu0 %v3029
      %v3331 = vpop.f32.mrf.mxu0
      %v3332 = vadd.f32 %v3257, %v3331
      %v3333 = vpop.f32.mrf.mxu0
      %3334 = vdwg.mxu0
      %v3335 = vadd.f32 %v2703, %v3175
      %v3336 = vadd.f32 %v2705, %v3177
      %v3337 = vadd.f32 %v2855, %v3327
      %v3338 = vadd.f32 %v2709, %v3181
      %v3339 = vadd.f32 %v2711, %v3183
      %v3340 = vadd.f32 %v2860, %v3332
      %v3341 = vld [vmem:[%s5] sm:$0x7]
      %v3343 = vlaneseq
      %v3344 = vshrl.u32 %v3343, 7
      %v3345 = vsub.s32 0, %v3344
      %v3346 = vrot.slane %v3341, %v3345
      %v3347 = vlaneseq
      %v3348 = vshrl.u32 %v3347, 7
      %v3349 = vsub.s32 1, %v3348
      %v3350 = vrot.slane %v3341, %v3349
      %v3351 = vlaneseq
      %v3352 = vshrl.u32 %v3351, 7
      %v3353 = vsub.s32 2, %v3352
      %v3354 = vrot.slane %v3341, %v3353
      %v3358 = vadd.f32 %v3335, %v3346
      %v3359 = vadd.f32 %v3336, %v3350
      %v3360 = vadd.f32 %v3337, %v3354
      %v3361 = vadd.f32 %v3338, %v3346
      %v3362 = vadd.f32 %v3339, %v3350
      %v3363 = vadd.f32 %v3340, %v3354
      %v3364 = vmax.f32 %v3358, 0.0
      %v3365 = vmax.f32 %v3359, 0.0
      %v3366 = vmax.f32 %v3360, 0.0
      %v3367 = vmax.f32 %v3361, 0.0
      %v3368 = vmax.f32 %v3362, 0.0
      %v3369 = vmax.f32 %v3363, 0.0
      %3372 = vrot.lane.b32.xlu0 %v3364, 106
      %v3373 = vpop.permute.xlu0 %3372
      %3374 = vrot.lane.b32.xlu0 %v3367, 106
      %v3375 = vpop.permute.xlu0 %3374
      %v3378 = vadd.f32 %v3364, %v3373
      %v3379 = vadd.f32 %v3367, %v3375
      %v3380 = vmax.f32 %v3364, %v3373
      %v3381 = vmax.f32 %v3367, %v3375
      %3382 = vrot.lane.b32.xlu0 %v3364, 84
      %v3383 = vpop.permute.xlu0 %3382
      %3384 = vrot.lane.b32.xlu0 %v3367, 84
      %v3385 = vpop.permute.xlu0 %3384
      %v3388 = vadd.f32 %v3378, %v3383
      %v3389 = vadd.f32 %v3379, %v3385
      %v3390 = vmax.f32 %v3380, %v3383
      %v3391 = vmax.f32 %v3381, %v3385
      %3392 = vrot.lane.b32.xlu0 %v3364, 62
      %v3393 = vpop.permute.xlu0 %3392
      %3394 = vrot.lane.b32.xlu0 %v3367, 62
      %v3395 = vpop.permute.xlu0 %3394
      %v3398 = vadd.f32 %v3388, %v3393
      %v3399 = vadd.f32 %v3389, %v3395
      %v3400 = vmax.f32 %v3390, %v3393
      %v3401 = vmax.f32 %v3391, %v3395
      %3402 = vrot.lane.b32.xlu0 %v3364, 40
      %v3403 = vpop.permute.xlu0 %3402
      %3404 = vrot.lane.b32.xlu0 %v3367, 40
      %v3405 = vpop.permute.xlu0 %3404
      %v3408 = vadd.f32 %v3398, %v3403
      %v3409 = vadd.f32 %v3399, %v3405
      %v3410 = vmax.f32 %v3400, %v3403
      %v3411 = vmax.f32 %v3401, %v3405
      %3414 = vrot.lane.b32.xlu0 %v3364, 18
      %v3415 = vpop.permute.xlu0 %3414
      %3416 = vrot.lane.b32.xlu0 %v3365, 18
      %v3417 = vpop.permute.xlu0 %3416
      %3418 = vrot.lane.b32.xlu0 %v3367, 18
      %v3419 = vpop.permute.xlu0 %3418
      %3420 = vrot.lane.b32.xlu0 %v3368, 18
      %v3421 = vpop.permute.xlu0 %3420
      %vm3422 = vcmask 146432
      %v3423 = vsel %vm3422, %v3415, %v3417
      %v3424 = vsel %vm3422, %v3419, %v3421
      %v3427 = vadd.f32 %v3408, %v3423
      %v3428 = vadd.f32 %v3409, %v3424
      %v3429 = vmax.f32 %v3410, %v3423
      %v3430 = vmax.f32 %v3411, %v3424
      %3431 = vrot.lane.b32.xlu0 %v3365, 124
      %v3432 = vpop.permute.xlu0 %3431
      %3433 = vrot.lane.b32.xlu0 %v3368, 124
      %v3434 = vpop.permute.xlu0 %3433
      %v3437 = vadd.f32 %v3427, %v3432
      %v3438 = vadd.f32 %v3428, %v3434
      %v3439 = vmax.f32 %v3429, %v3432
      %v3440 = vmax.f32 %v3430, %v3434
      %3441 = vrot.lane.b32.xlu0 %v3365, 102
      %v3442 = vpop.permute.xlu0 %3441
      %3443 = vrot.lane.b32.xlu0 %v3368, 102
      %v3444 = vpop.permute.xlu0 %3443
      %v3447 = vadd.f32 %v3437, %v3442
      %v3448 = vadd.f32 %v3438, %v3444
      %v3449 = vmax.f32 %v3439, %v3442
      %v3450 = vmax.f32 %v3440, %v3444
      %3451 = vrot.lane.b32.xlu0 %v3365, 80
      %v3452 = vpop.permute.xlu0 %3451
      %3453 = vrot.lane.b32.xlu0 %v3368, 80
      %v3454 = vpop.permute.xlu0 %3453
      %v3457 = vadd.f32 %v3447, %v3452
      %v3458 = vadd.f32 %v3448, %v3454
      %v3459 = vmax.f32 %v3449, %v3452
      %v3460 = vmax.f32 %v3450, %v3454
      %3461 = vrot.lane.b32.xlu0 %v3365, 58
      %v3462 = vpop.permute.xlu0 %3461
      %3463 = vrot.lane.b32.xlu0 %v3368, 58
      %v3464 = vpop.permute.xlu0 %3463
      %v3467 = vadd.f32 %v3457, %v3462
      %v3468 = vadd.f32 %v3458, %v3464
      %v3469 = vmax.f32 %v3459, %v3462
      %v3470 = vmax.f32 %v3460, %v3464
      %3471 = vrot.lane.b32.xlu0 %v3365, 36
      %v3472 = vpop.permute.xlu0 %3471
      %3473 = vrot.lane.b32.xlu0 %v3368, 36
      %v3474 = vpop.permute.xlu0 %3473
      %v3477 = vadd.f32 %v3467, %v3472
      %v3478 = vadd.f32 %v3468, %v3474
      %v3479 = vmax.f32 %v3469, %v3472
      %v3480 = vmax.f32 %v3470, %v3474
      %3483 = vrot.lane.b32.xlu0 %v3365, 14
      %v3484 = vpop.permute.xlu0 %3483
      %3485 = vrot.lane.b32.xlu0 %v3366, 14
      %v3486 = vpop.permute.xlu0 %3485
      %3487 = vrot.lane.b32.xlu0 %v3368, 14
      %v3488 = vpop.permute.xlu0 %3487
      %3489 = vrot.lane.b32.xlu0 %v3369, 14
      %v3490 = vpop.permute.xlu0 %3489
      %vm3491 = vcmask 113664
      %v3492 = vsel %vm3491, %v3484, %v3486
      %v3493 = vsel %vm3491, %v3488, %v3490
      %v3496 = vadd.f32 %v3477, %v3492
      %v3497 = vadd.f32 %v3478, %v3493
      %v3498 = vmax.f32 %v3479, %v3492
      %v3499 = vmax.f32 %v3480, %v3493
      %3500 = vrot.lane.b32.xlu0 %v3366, 120
      %v3501 = vpop.permute.xlu0 %3500
      %3502 = vrot.lane.b32.xlu0 %v3369, 120
      %v3503 = vpop.permute.xlu0 %3502
      %v3506 = vadd.f32 %v3496, %v3501
      %v3507 = vadd.f32 %v3497, %v3503
      %v3508 = vmax.f32 %v3498, %v3501
      %v3509 = vmax.f32 %v3499, %v3503
      %3510 = vrot.lane.b32.xlu0 %v3366, 98
      %v3511 = vpop.permute.xlu0 %3510
      %3512 = vrot.lane.b32.xlu0 %v3369, 98
      %v3513 = vpop.permute.xlu0 %3512
      %v3516 = vadd.f32 %v3506, %v3511
      %v3517 = vadd.f32 %v3507, %v3513
      %v3518 = vmax.f32 %v3508, %v3511
      %v3519 = vmax.f32 %v3509, %v3513
      %3520 = vrot.lane.b32.xlu0 %v3366, 76
      %v3521 = vpop.permute.xlu0 %3520
      %3522 = vrot.lane.b32.xlu0 %v3369, 76
      %v3523 = vpop.permute.xlu0 %3522
      %v3526 = vadd.f32 %v3516, %v3521
      %v3527 = vadd.f32 %v3517, %v3523
      %v3528 = vmax.f32 %v3518, %v3521
      %v3529 = vmax.f32 %v3519, %v3523
      %3530 = vrot.lane.b32.xlu0 %v3366, 54
      %v3531 = vpop.permute.xlu0 %3530
      %3532 = vrot.lane.b32.xlu0 %v3369, 54
      %v3533 = vpop.permute.xlu0 %3532
      %v3536 = vadd.f32 %v3526, %v3531
      %v3537 = vadd.f32 %v3527, %v3533
      %v3538 = vmax.f32 %v3528, %v3531
      %v3539 = vmax.f32 %v3529, %v3533
      %v3540 = vmul.f32 %v3536, 0.0625
      %v3541 = vmul.f32 %v3537, 0.0625
      %vm3542 = vcmask 354304
      %3543 = vst.msk [vmem:[#allocation3] sm:$0x7] %vm3542, 0.0
      %3544 = vst.msk [vmem:[#allocation3 + $0x13] sm:$0x7] %vm3542, 0.0
      %3547 = vrot.lane.b32.xlu0 %v3538, 22
      %v3548 = vpop.permute.xlu0 %3547
      %3549 = vrot.lane.b32.xlu0 %v3539, 22
      %v3550 = vpop.permute.xlu0 %3549
      %vm3553 = vcmask 179200
      %v3554 = vsel %vm3553, %v3540, %v3548
      %v3555 = vsel %vm3553, %v3541, %v3550
      %vm3556 = vcmask 359424
      %3557 = vst.msk [vmem:[#allocation3 + $0x3] sm:$0xff] %vm3556, %v3554
      %3558 = vst.msk [vmem:[#allocation3 + $0xb] sm:$0xff] %vm3556, %v3555
      %v3559 = vld [vmem:[#allocation3] sm:$0xff]
      %v3560 = vld [vmem:[#allocation3 + $0x8] sm:$0xff]
      %v3561 = vld [vmem:[%s6] sm:$0xff]
      %v3562 = vld [vmem:[%s6 + $0x8] sm:$0xff]
      %v3563 = vld [vmem:[%s6 + $0x10] sm:$0xff]
      %v3564 = vld [vmem:[%s6 + $0x18] sm:$0xff]
      %v3565 = vld [vmem:[%s6 + $0x20] sm:$0xff]
      %v3566 = vld [vmem:[%s6 + $0x28] sm:$0xf]
      %v3567 = vld [vmem:[#allocation3 + $0x1] sm:$0xff]
      %v3568 = vld [vmem:[#allocation3 + $0x9] sm:$0xff]
      %s3569 = scalar_lea.vmem %s6, 48
      %v3570 = vld [vmem:[%s3569] sm:$0xff]
      %v3571 = vld [vmem:[%s3569 + $0x8] sm:$0xff]
      %v3572 = vld [vmem:[%s3569 + $0x10] sm:$0xff]
      %v3573 = vld [vmem:[%s3569 + $0x18] sm:$0xff]
      %v3574 = vld [vmem:[%s3569 + $0x20] sm:$0xff]
      %v3575 = vld [vmem:[%s3569 + $0x28] sm:$0xf]
      %v3577 = vsel %vm3556, %v3567, 0
      %v3580 = vsel %vm3556, %v3568, 0
      %v3583 = vsel %vm1442, %v3575, 0
      %3585 = vmatprep.subr.mxu0 0.0
      %3586 = vmatpush1.msra.mxu0 0.0
      %3587 = vmatprep.subr.mxu0 0.0
      %3588 = vmatpush1.msra.mxu0 0.0
      %3589 = vmatprep.subr.mxu0 0.0
      %3590 = vmatpush1.msra.mxu0 0.0
      %3591 = vmatprep.subr.mxu0 0.0
      %3592 = vmatpush1.msra.mxu0 0.0
      %3593 = vmatprep.subr.mxu0 0.0
      %3594 = vmatpush1.msra.mxu0 0.0
      %3595 = vmatprep.subr.mxu0 0.0
      %3596 = vmatpush1.msra.mxu0 0.0
      %3597 = vmatprep.subr.mxu0 0.0
      %3598 = vmatpush1.msra.mxu0 0.0
      %3599 = vmatprep.subr.mxu0 0.0
      %3600 = vmatpush1.msra.mxu0 0.0
      %3601 = vmatprep.subr.mxu0 0.0
      %3602 = vmatpush1.msra.mxu0 0.0
      %3603 = vmatprep.subr.mxu0 0.0
      %3604 = vmatpush1.msra.mxu0 0.0
      %3605 = vmatprep.subr.mxu0 0.0
      %3606 = vmatpush1.msra.mxu0 %v3583
      %3607 = vmatprep.subr.mxu0 0.0
      %3608 = vmatpush1.msra.mxu0 %v3574
      %3609 = vmatprep.subr.mxu0 0.0
      %3610 = vmatpush1.msra.mxu0 %v3573
      %3611 = vmatprep.subr.mxu0 0.0
      %3612 = vmatpush1.msra.mxu0 %v3572
      %3613 = vmatprep.subr.mxu0 0.0
      %3614 = vmatpush1.msra.mxu0 %v3571
      %3615 = vmatprep.subr.mxu0 0.0
      %3616 = vmatpush1.msra.mxu0 %v3570
      %3617 = vmatprep.subr.mxu0 0.0
      %3618 = vmatpush2.msra.mxu0 0.0
      %3619 = vmatprep.subr.mxu0 0.0
      %3620 = vmatpush2.msra.mxu0 0.0
      %3621 = vmatprep.subr.mxu0 0.0
      %3622 = vmatpush2.msra.mxu0 0.0
      %3623 = vmatprep.subr.mxu0 0.0
      %3624 = vmatpush2.msra.mxu0 0.0
      %3625 = vmatprep.subr.mxu0 0.0
      %3626 = vmatpush2.msra.mxu0 0.0
      %3627 = vmatprep.subr.mxu0 0.0
      %3628 = vmatpush2.msra.mxu0 0.0
      %3629 = vmatprep.subr.mxu0 0.0
      %3630 = vmatpush2.msra.mxu0 0.0
      %3631 = vmatprep.subr.mxu0 0.0
      %3632 = vmatpush2.msra.mxu0 0.0
      %3633 = vmatprep.subr.mxu0 0.0
      %3634 = vmatpush2.msra.mxu0 0.0
      %3635 = vmatprep.subr.mxu0 0.0
      %3636 = vmatpush2.msra.mxu0 0.0
      %3637 = vmatprep.subr.mxu0 0.0
      %3638 = vmatpush2.msra.mxu0 0.0
      %3639 = vmatprep.subr.mxu0 0.0
      %3640 = vmatpush2.msra.mxu0 0.0
      %3641 = vmatprep.subr.mxu0 0.0
      %3642 = vmatpush2.msra.mxu0 0.0
      %3643 = vmatprep.subr.mxu0 0.0
      %3644 = vmatpush2.msra.mxu0 0.0
      %3645 = vmatprep.subr.mxu0 0.0
      %3646 = vmatpush2.msra.mxu0 0.0
      %3647 = vmatprep.subr.mxu0 0.0
      %3648 = vmatpush2.msra.mxu0 0.0
      %3649 = vmatprep.mubr.f32.mxu0 0.0
      %3650 = vmatmul.mubr.f32.gmra.mxu0 %v3577
      %v3651 = vpop.f32.mrf.mxu0
      %v3652 = vadd.f32 0.0, %v3651
      %v3653 = vpop.f32.mrf.mxu0
      %3654 = vmatprep.mubr.f32.mxu0 0.0
      %3655 = vmatmul.mubr.f32.gmra.mxu0 %v3580
      %v3656 = vpop.f32.mrf.mxu0
      %v3657 = vadd.f32 0.0, %v3656
      %v3658 = vpop.f32.mrf.mxu0
      %3659 = vdwg.mxu0
      %v3661 = vsel %vm3556, %v3559, 0
      %v3664 = vsel %vm3556, %v3560, 0
      %v3667 = vsel %vm1442, %v3566, 0
      %3669 = vmatprep.subr.mxu0 0.0
      %3670 = vmatpush1.msra.mxu0 0.0
      %3671 = vmatprep.subr.mxu0 0.0
      %3672 = vmatpush1.msra.mxu0 0.0
      %3673 = vmatprep.subr.mxu0 0.0
      %3674 = vmatpush1.msra.mxu0 0.0
      %3675 = vmatprep.subr.mxu0 0.0
      %3676 = vmatpush1.msra.mxu0 0.0
      %3677 = vmatprep.subr.mxu0 0.0
      %3678 = vmatpush1.msra.mxu0 0.0
      %3679 = vmatprep.subr.mxu0 0.0
      %3680 = vmatpush1.msra.mxu0 0.0
      %3681 = vmatprep.subr.mxu0 0.0
      %3682 = vmatpush1.msra.mxu0 0.0
      %3683 = vmatprep.subr.mxu0 0.0
      %3684 = vmatpush1.msra.mxu0 0.0
      %3685 = vmatprep.subr.mxu0 0.0
      %3686 = vmatpush1.msra.mxu0 0.0
      %3687 = vmatprep.subr.mxu0 0.0
      %3688 = vmatpush1.msra.mxu0 0.0
      %3689 = vmatprep.subr.mxu0 0.0
      %3690 = vmatpush1.msra.mxu0 %v3667
      %3691 = vmatprep.subr.mxu0 0.0
      %3692 = vmatpush1.msra.mxu0 %v3565
      %3693 = vmatprep.subr.mxu0 0.0
      %3694 = vmatpush1.msra.mxu0 %v3564
      %3695 = vmatprep.subr.mxu0 0.0
      %3696 = vmatpush1.msra.mxu0 %v3563
      %3697 = vmatprep.subr.mxu0 0.0
      %3698 = vmatpush1.msra.mxu0 %v3562
      %3699 = vmatprep.subr.mxu0 0.0
      %3700 = vmatpush1.msra.mxu0 %v3561
      %3701 = vmatprep.subr.mxu0 0.0
      %3702 = vmatpush2.msra.mxu0 0.0
      %3703 = vmatprep.subr.mxu0 0.0
      %3704 = vmatpush2.msra.mxu0 0.0
      %3705 = vmatprep.subr.mxu0 0.0
      %3706 = vmatpush2.msra.mxu0 0.0
      %3707 = vmatprep.subr.mxu0 0.0
      %3708 = vmatpush2.msra.mxu0 0.0
      %3709 = vmatprep.subr.mxu0 0.0
      %3710 = vmatpush2.msra.mxu0 0.0
      %3711 = vmatprep.subr.mxu0 0.0
      %3712 = vmatpush2.msra.mxu0 0.0
      %3713 = vmatprep.subr.mxu0 0.0
      %3714 = vmatpush2.msra.mxu0 0.0
      %3715 = vmatprep.subr.mxu0 0.0
      %3716 = vmatpush2.msra.mxu0 0.0
      %3717 = vmatprep.subr.mxu0 0.0
      %3718 = vmatpush2.msra.mxu0 0.0
      %3719 = vmatprep.subr.mxu0 0.0
      %3720 = vmatpush2.msra.mxu0 0.0
      %3721 = vmatprep.subr.mxu0 0.0
      %3722 = vmatpush2.msra.mxu0 0.0
      %3723 = vmatprep.subr.mxu0 0.0
      %3724 = vmatpush2.msra.mxu0 0.0
      %3725 = vmatprep.subr.mxu0 0.0
      %3726 = vmatpush2.msra.mxu0 0.0
      %3727 = vmatprep.subr.mxu0 0.0
      %3728 = vmatpush2.msra.mxu0 0.0
      %3729 = vmatprep.subr.mxu0 0.0
      %3730 = vmatpush2.msra.mxu0 0.0
      %3731 = vmatprep.subr.mxu0 0.0
      %3732 = vmatpush2.msra.mxu0 0.0
      %3733 = vmatprep.mubr.f32.mxu0 0.0
      %3734 = vmatmul.mubr.f32.gmra.mxu0 %v3661
      %v3735 = vpop.f32.mrf.mxu0
      %v3736 = vadd.f32 %v3652, %v3735
      %v3737 = vpop.f32.mrf.mxu0
      %3738 = vmatprep.mubr.f32.mxu0 0.0
      %3739 = vmatmul.mubr.f32.gmra.mxu0 %v3664
      %v3740 = vpop.f32.mrf.mxu0
      %v3741 = vadd.f32 %v3657, %v3740
      %v3742 = vpop.f32.mrf.mxu0
      %3743 = vdwg.mxu0
      %v3744 = vld [vmem:[#allocation3 + $0x2] sm:$0xff]
      %v3745 = vld [vmem:[#allocation3 + $0xa] sm:$0xff]
      %s3746 = scalar_lea.vmem %s6, 96
      %v3747 = vld [vmem:[%s3746] sm:$0xff]
      %v3748 = vld [vmem:[%s3746 + $0x8] sm:$0xff]
      %v3749 = vld [vmem:[%s3746 + $0x10] sm:$0xff]
      %v3750 = vld [vmem:[%s3746 + $0x18] sm:$0xff]
      %v3751 = vld [vmem:[%s3746 + $0x20] sm:$0xff]
      %v3752 = vld [vmem:[%s3746 + $0x28] sm:$0xf]
      %v3754 = vsel %vm3556, %v3744, 0
      %v3757 = vsel %vm3556, %v3745, 0
      %v3760 = vsel %vm1442, %v3752, 0
      %3762 = vmatprep.subr.mxu0 0.0
      %3763 = vmatpush1.msra.mxu0 0.0
      %3764 = vmatprep.subr.mxu0 0.0
      %3765 = vmatpush1.msra.mxu0 0.0
      %3766 = vmatprep.subr.mxu0 0.0
      %3767 = vmatpush1.msra.mxu0 0.0
      %3768 = vmatprep.subr.mxu0 0.0
      %3769 = vmatpush1.msra.mxu0 0.0
      %3770 = vmatprep.subr.mxu0 0.0
      %3771 = vmatpush1.msra.mxu0 0.0
      %3772 = vmatprep.subr.mxu0 0.0
      %3773 = vmatpush1.msra.mxu0 0.0
      %3774 = vmatprep.subr.mxu0 0.0
      %3775 = vmatpush1.msra.mxu0 0.0
      %3776 = vmatprep.subr.mxu0 0.0
      %3777 = vmatpush1.msra.mxu0 0.0
      %3778 = vmatprep.subr.mxu0 0.0
      %3779 = vmatpush1.msra.mxu0 0.0
      %3780 = vmatprep.subr.mxu0 0.0
      %3781 = vmatpush1.msra.mxu0 0.0
      %3782 = vmatprep.subr.mxu0 0.0
      %3783 = vmatpush1.msra.mxu0 %v3760
      %3784 = vmatprep.subr.mxu0 0.0
      %3785 = vmatpush1.msra.mxu0 %v3751
      %3786 = vmatprep.subr.mxu0 0.0
      %3787 = vmatpush1.msra.mxu0 %v3750
      %3788 = vmatprep.subr.mxu0 0.0
      %3789 = vmatpush1.msra.mxu0 %v3749
      %3790 = vmatprep.subr.mxu0 0.0
      %3791 = vmatpush1.msra.mxu0 %v3748
      %3792 = vmatprep.subr.mxu0 0.0
      %3793 = vmatpush1.msra.mxu0 %v3747
      %3794 = vmatprep.subr.mxu0 0.0
      %3795 = vmatpush2.msra.mxu0 0.0
      %3796 = vmatprep.subr.mxu0 0.0
      %3797 = vmatpush2.msra.mxu0 0.0
      %3798 = vmatprep.subr.mxu0 0.0
      %3799 = vmatpush2.msra.mxu0 0.0
      %3800 = vmatprep.subr.mxu0 0.0
      %3801 = vmatpush2.msra.mxu0 0.0
      %3802 = vmatprep.subr.mxu0 0.0
      %3803 = vmatpush2.msra.mxu0 0.0
      %3804 = vmatprep.subr.mxu0 0.0
      %3805 = vmatpush2.msra.mxu0 0.0
      %3806 = vmatprep.subr.mxu0 0.0
      %3807 = vmatpush2.msra.mxu0 0.0
      %3808 = vmatprep.subr.mxu0 0.0
      %3809 = vmatpush2.msra.mxu0 0.0
      %3810 = vmatprep.subr.mxu0 0.0
      %3811 = vmatpush2.msra.mxu0 0.0
      %3812 = vmatprep.subr.mxu0 0.0
      %3813 = vmatpush2.msra.mxu0 0.0
      %3814 = vmatprep.subr.mxu0 0.0
      %3815 = vmatpush2.msra.mxu0 0.0
      %3816 = vmatprep.subr.mxu0 0.0
      %3817 = vmatpush2.msra.mxu0 0.0
      %3818 = vmatprep.subr.mxu0 0.0
      %3819 = vmatpush2.msra.mxu0 0.0
      %3820 = vmatprep.subr.mxu0 0.0
      %3821 = vmatpush2.msra.mxu0 0.0
      %3822 = vmatprep.subr.mxu0 0.0
      %3823 = vmatpush2.msra.mxu0 0.0
      %3824 = vmatprep.subr.mxu0 0.0
      %3825 = vmatpush2.msra.mxu0 0.0
      %3826 = vmatprep.mubr.f32.mxu0 0.0
      %3827 = vmatmul.mubr.f32.gmra.mxu0 %v3754
      %v3828 = vpop.f32.mrf.mxu0
      %v3829 = vadd.f32 0.0, %v3828
      %v3830 = vpop.f32.mrf.mxu0
      %3831 = vmatprep.mubr.f32.mxu0 0.0
      %3832 = vmatmul.mubr.f32.gmra.mxu0 %v3757
      %v3833 = vpop.f32.mrf.mxu0
      %v3834 = vadd.f32 0.0, %v3833
      %v3835 = vpop.f32.mrf.mxu0
      %3836 = vdwg.mxu0
      %v3837 = vadd.f32 %v3736, %v3829
      %v3838 = vadd.f32 %v3741, %v3834
      %v3839 = vld [vmem:[#allocation3 + $0x3] sm:$0xff]
      %v3840 = vld [vmem:[#allocation3 + $0xb] sm:$0xff]
      %s3841 = scalar_lea.vmem %s6, 144
      %v3842 = vld [vmem:[%s3841] sm:$0xff]
      %v3843 = vld [vmem:[%s3841 + $0x8] sm:$0xff]
      %v3844 = vld [vmem:[%s3841 + $0x10] sm:$0xff]
      %v3845 = vld [vmem:[%s3841 + $0x18] sm:$0xff]
      %v3846 = vld [vmem:[%s3841 + $0x20] sm:$0xff]
      %v3847 = vld [vmem:[%s3841 + $0x28] sm:$0xf]
      %v3849 = vsel %vm3556, %v3839, 0
      %v3852 = vsel %vm3556, %v3840, 0
      %v3855 = vsel %vm1442, %v3847, 0
      %3857 = vmatprep.subr.mxu0 0.0
      %3858 = vmatpush1.msra.mxu0 0.0
      %3859 = vmatprep.subr.mxu0 0.0
      %3860 = vmatpush1.msra.mxu0 0.0
      %3861 = vmatprep.subr.mxu0 0.0
      %3862 = vmatpush1.msra.mxu0 0.0
      %3863 = vmatprep.subr.mxu0 0.0
      %3864 = vmatpush1.msra.mxu0 0.0
      %3865 = vmatprep.subr.mxu0 0.0
      %3866 = vmatpush1.msra.mxu0 0.0
      %3867 = vmatprep.subr.mxu0 0.0
      %3868 = vmatpush1.msra.mxu0 0.0
      %3869 = vmatprep.subr.mxu0 0.0
      %3870 = vmatpush1.msra.mxu0 0.0
      %3871 = vmatprep.subr.mxu0 0.0
      %3872 = vmatpush1.msra.mxu0 0.0
      %3873 = vmatprep.subr.mxu0 0.0
      %3874 = vmatpush1.msra.mxu0 0.0
      %3875 = vmatprep.subr.mxu0 0.0
      %3876 = vmatpush1.msra.mxu0 0.0
      %3877 = vmatprep.subr.mxu0 0.0
      %3878 = vmatpush1.msra.mxu0 %v3855
      %3879 = vmatprep.subr.mxu0 0.0
      %3880 = vmatpush1.msra.mxu0 %v3846
      %3881 = vmatprep.subr.mxu0 0.0
      %3882 = vmatpush1.msra.mxu0 %v3845
      %3883 = vmatprep.subr.mxu0 0.0
      %3884 = vmatpush1.msra.mxu0 %v3844
      %3885 = vmatprep.subr.mxu0 0.0
      %3886 = vmatpush1.msra.mxu0 %v3843
      %3887 = vmatprep.subr.mxu0 0.0
      %3888 = vmatpush1.msra.mxu0 %v3842
      %3889 = vmatprep.subr.mxu0 0.0
      %3890 = vmatpush2.msra.mxu0 0.0
      %3891 = vmatprep.subr.mxu0 0.0
      %3892 = vmatpush2.msra.mxu0 0.0
      %3893 = vmatprep.subr.mxu0 0.0
      %3894 = vmatpush2.msra.mxu0 0.0
      %3895 = vmatprep.subr.mxu0 0.0
      %3896 = vmatpush2.msra.mxu0 0.0
      %3897 = vmatprep.subr.mxu0 0.0
      %3898 = vmatpush2.msra.mxu0 0.0
      %3899 = vmatprep.subr.mxu0 0.0
      %3900 = vmatpush2.msra.mxu0 0.0
      %3901 = vmatprep.subr.mxu0 0.0
      %3902 = vmatpush2.msra.mxu0 0.0
      %3903 = vmatprep.subr.mxu0 0.0
      %3904 = vmatpush2.msra.mxu0 0.0
      %3905 = vmatprep.subr.mxu0 0.0
      %3906 = vmatpush2.msra.mxu0 0.0
      %3907 = vmatprep.subr.mxu0 0.0
      %3908 = vmatpush2.msra.mxu0 0.0
      %3909 = vmatprep.subr.mxu0 0.0
      %3910 = vmatpush2.msra.mxu0 0.0
      %3911 = vmatprep.subr.mxu0 0.0
      %3912 = vmatpush2.msra.mxu0 0.0
      %3913 = vmatprep.subr.mxu0 0.0
      %3914 = vmatpush2.msra.mxu0 0.0
      %3915 = vmatprep.subr.mxu0 0.0
      %3916 = vmatpush2.msra.mxu0 0.0
      %3917 = vmatprep.subr.mxu0 0.0
      %3918 = vmatpush2.msra.mxu0 0.0
      %3919 = vmatprep.subr.mxu0 0.0
      %3920 = vmatpush2.msra.mxu0 0.0
      %3921 = vmatprep.mubr.f32.mxu0 0.0
      %3922 = vmatmul.mubr.f32.gmra.mxu0 %v3849
      %v3923 = vpop.f32.mrf.mxu0
      %v3924 = vadd.f32 0.0, %v3923
      %v3925 = vpop.f32.mrf.mxu0
      %3926 = vmatprep.mubr.f32.mxu0 0.0
      %3927 = vmatmul.mubr.f32.gmra.mxu0 %v3852
      %v3928 = vpop.f32.mrf.mxu0
      %v3929 = vadd.f32 0.0, %v3928
      %v3930 = vpop.f32.mrf.mxu0
      %3931 = vdwg.mxu0
      %v3932 = vadd.f32 %v3837, %v3924
      %v3933 = vadd.f32 %v3838, %v3929
      %v3934 = vld [vmem:[#allocation3 + $0x4] sm:$0xff]
      %v3935 = vld [vmem:[#allocation3 + $0xc] sm:$0xff]
      %s3936 = scalar_lea.vmem %s6, 192
      %v3937 = vld [vmem:[%s3936] sm:$0xff]
      %v3938 = vld [vmem:[%s3936 + $0x8] sm:$0xff]
      %v3939 = vld [vmem:[%s3936 + $0x10] sm:$0xff]
      %v3940 = vld [vmem:[%s3936 + $0x18] sm:$0xff]
      %v3941 = vld [vmem:[%s3936 + $0x20] sm:$0xff]
      %v3942 = vld [vmem:[%s3936 + $0x28] sm:$0xf]
      %v3944 = vsel %vm3556, %v3934, 0
      %v3947 = vsel %vm3556, %v3935, 0
      %v3950 = vsel %vm1442, %v3942, 0
      %3952 = vmatprep.subr.mxu0 0.0
      %3953 = vmatpush1.msra.mxu0 0.0
      %3954 = vmatprep.subr.mxu0 0.0
      %3955 = vmatpush1.msra.mxu0 0.0
      %3956 = vmatprep.subr.mxu0 0.0
      %3957 = vmatpush1.msra.mxu0 0.0
      %3958 = vmatprep.subr.mxu0 0.0
      %3959 = vmatpush1.msra.mxu0 0.0
      %3960 = vmatprep.subr.mxu0 0.0
      %3961 = vmatpush1.msra.mxu0 0.0
      %3962 = vmatprep.subr.mxu0 0.0
      %3963 = vmatpush1.msra.mxu0 0.0
      %3964 = vmatprep.subr.mxu0 0.0
      %3965 = vmatpush1.msra.mxu0 0.0
      %3966 = vmatprep.subr.mxu0 0.0
      %3967 = vmatpush1.msra.mxu0 0.0
      %3968 = vmatprep.subr.mxu0 0.0
      %3969 = vmatpush1.msra.mxu0 0.0
      %3970 = vmatprep.subr.mxu0 0.0
      %3971 = vmatpush1.msra.mxu0 0.0
      %3972 = vmatprep.subr.mxu0 0.0
      %3973 = vmatpush1.msra.mxu0 %v3950
      %3974 = vmatprep.subr.mxu0 0.0
      %3975 = vmatpush1.msra.mxu0 %v3941
      %3976 = vmatprep.subr.mxu0 0.0
      %3977 = vmatpush1.msra.mxu0 %v3940
      %3978 = vmatprep.subr.mxu0 0.0
      %3979 = vmatpush1.msra.mxu0 %v3939
      %3980 = vmatprep.subr.mxu0 0.0
      %3981 = vmatpush1.msra.mxu0 %v3938
      %3982 = vmatprep.subr.mxu0 0.0
      %3983 = vmatpush1.msra.mxu0 %v3937
      %3984 = vmatprep.subr.mxu0 0.0
      %3985 = vmatpush2.msra.mxu0 0.0
      %3986 = vmatprep.subr.mxu0 0.0
      %3987 = vmatpush2.msra.mxu0 0.0
      %3988 = vmatprep.subr.mxu0 0.0
      %3989 = vmatpush2.msra.mxu0 0.0
      %3990 = vmatprep.subr.mxu0 0.0
      %3991 = vmatpush2.msra.mxu0 0.0
      %3992 = vmatprep.subr.mxu0 0.0
      %3993 = vmatpush2.msra.mxu0 0.0
      %3994 = vmatprep.subr.mxu0 0.0
      %3995 = vmatpush2.msra.mxu0 0.0
      %3996 = vmatprep.subr.mxu0 0.0
      %3997 = vmatpush2.msra.mxu0 0.0
      %3998 = vmatprep.subr.mxu0 0.0
      %3999 = vmatpush2.msra.mxu0 0.0
      %4000 = vmatprep.subr.mxu0 0.0
      %4001 = vmatpush2.msra.mxu0 0.0
      %4002 = vmatprep.subr.mxu0 0.0
      %4003 = vmatpush2.msra.mxu0 0.0
      %4004 = vmatprep.subr.mxu0 0.0
      %4005 = vmatpush2.msra.mxu0 0.0
      %4006 = vmatprep.subr.mxu0 0.0
      %4007 = vmatpush2.msra.mxu0 0.0
      %4008 = vmatprep.subr.mxu0 0.0
      %4009 = vmatpush2.msra.mxu0 0.0
      %4010 = vmatprep.subr.mxu0 0.0
      %4011 = vmatpush2.msra.mxu0 0.0
      %4012 = vmatprep.subr.mxu0 0.0
      %4013 = vmatpush2.msra.mxu0 0.0
      %4014 = vmatprep.subr.mxu0 0.0
      %4015 = vmatpush2.msra.mxu0 0.0
      %4016 = vmatprep.mubr.f32.mxu0 0.0
      %4017 = vmatmul.mubr.f32.gmra.mxu0 %v3944
      %v4018 = vpop.f32.mrf.mxu0
      %v4019 = vadd.f32 0.0, %v4018
      %v4020 = vpop.f32.mrf.mxu0
      %4021 = vmatprep.mubr.f32.mxu0 0.0
      %4022 = vmatmul.mubr.f32.gmra.mxu0 %v3947
      %v4023 = vpop.f32.mrf.mxu0
      %v4024 = vadd.f32 0.0, %v4023
      %v4025 = vpop.f32.mrf.mxu0
      %4026 = vdwg.mxu0
      %v4027 = vadd.f32 %v3932, %v4019
      %v4028 = vadd.f32 %v3933, %v4024
      %v4029 = vld [vmem:[#allocation3 + $0x5] sm:$0xff]
      %v4030 = vld [vmem:[#allocation3 + $0xd] sm:$0xff]
      %s4031 = scalar_lea.vmem %s6, 240
      %v4032 = vld [vmem:[%s4031] sm:$0xff]
      %v4033 = vld [vmem:[%s4031 + $0x8] sm:$0xff]
      %v4034 = vld [vmem:[%s4031 + $0x10] sm:$0xff]
      %v4035 = vld [vmem:[%s4031 + $0x18] sm:$0xff]
      %v4036 = vld [vmem:[%s4031 + $0x20] sm:$0xff]
      %v4037 = vld [vmem:[%s4031 + $0x28] sm:$0xf]
      %v4039 = vsel %vm3556, %v4029, 0
      %v4042 = vsel %vm3556, %v4030, 0
      %v4045 = vsel %vm1442, %v4037, 0
      %4047 = vmatprep.subr.mxu0 0.0
      %4048 = vmatpush1.msra.mxu0 0.0
      %4049 = vmatprep.subr.mxu0 0.0
      %4050 = vmatpush1.msra.mxu0 0.0
      %4051 = vmatprep.subr.mxu0 0.0
      %4052 = vmatpush1.msra.mxu0 0.0
      %4053 = vmatprep.subr.mxu0 0.0
      %4054 = vmatpush1.msra.mxu0 0.0
      %4055 = vmatprep.subr.mxu0 0.0
      %4056 = vmatpush1.msra.mxu0 0.0
      %4057 = vmatprep.subr.mxu0 0.0
      %4058 = vmatpush1.msra.mxu0 0.0
      %4059 = vmatprep.subr.mxu0 0.0
      %4060 = vmatpush1.msra.mxu0 0.0
      %4061 = vmatprep.subr.mxu0 0.0
      %4062 = vmatpush1.msra.mxu0 0.0
      %4063 = vmatprep.subr.mxu0 0.0
      %4064 = vmatpush1.msra.mxu0 0.0
      %4065 = vmatprep.subr.mxu0 0.0
      %4066 = vmatpush1.msra.mxu0 0.0
      %4067 = vmatprep.subr.mxu0 0.0
      %4068 = vmatpush1.msra.mxu0 %v4045
      %4069 = vmatprep.subr.mxu0 0.0
      %4070 = vmatpush1.msra.mxu0 %v4036
      %4071 = vmatprep.subr.mxu0 0.0
      %4072 = vmatpush1.msra.mxu0 %v4035
      %4073 = vmatprep.subr.mxu0 0.0
      %4074 = vmatpush1.msra.mxu0 %v4034
      %4075 = vmatprep.subr.mxu0 0.0
      %4076 = vmatpush1.msra.mxu0 %v4033
      %4077 = vmatprep.subr.mxu0 0.0
      %4078 = vmatpush1.msra.mxu0 %v4032
      %4079 = vmatprep.subr.mxu0 0.0
      %4080 = vmatpush2.msra.mxu0 0.0
      %4081 = vmatprep.subr.mxu0 0.0
      %4082 = vmatpush2.msra.mxu0 0.0
      %4083 = vmatprep.subr.mxu0 0.0
      %4084 = vmatpush2.msra.mxu0 0.0
      %4085 = vmatprep.subr.mxu0 0.0
      %4086 = vmatpush2.msra.mxu0 0.0
      %4087 = vmatprep.subr.mxu0 0.0
      %4088 = vmatpush2.msra.mxu0 0.0
      %4089 = vmatprep.subr.mxu0 0.0
      %4090 = vmatpush2.msra.mxu0 0.0
      %4091 = vmatprep.subr.mxu0 0.0
      %4092 = vmatpush2.msra.mxu0 0.0
      %4093 = vmatprep.subr.mxu0 0.0
      %4094 = vmatpush2.msra.mxu0 0.0
      %4095 = vmatprep.subr.mxu0 0.0
      %4096 = vmatpush2.msra.mxu0 0.0
      %4097 = vmatprep.subr.mxu0 0.0
      %4098 = vmatpush2.msra.mxu0 0.0
      %4099 = vmatprep.subr.mxu0 0.0
      %4100 = vmatpush2.msra.mxu0 0.0
      %4101 = vmatprep.subr.mxu0 0.0
      %4102 = vmatpush2.msra.mxu0 0.0
      %4103 = vmatprep.subr.mxu0 0.0
      %4104 = vmatpush2.msra.mxu0 0.0
      %4105 = vmatprep.subr.mxu0 0.0
      %4106 = vmatpush2.msra.mxu0 0.0
      %4107 = vmatprep.subr.mxu0 0.0
      %4108 = vmatpush2.msra.mxu0 0.0
      %4109 = vmatprep.subr.mxu0 0.0
      %4110 = vmatpush2.msra.mxu0 0.0
      %4111 = vmatprep.mubr.f32.mxu0 0.0
      %4112 = vmatmul.mubr.f32.gmra.mxu0 %v4039
      %v4113 = vpop.f32.mrf.mxu0
      %v4114 = vadd.f32 0.0, %v4113
      %v4115 = vpop.f32.mrf.mxu0
      %4116 = vmatprep.mubr.f32.mxu0 0.0
      %4117 = vmatmul.mubr.f32.gmra.mxu0 %v4042
      %v4118 = vpop.f32.mrf.mxu0
      %v4119 = vadd.f32 0.0, %v4118
      %v4120 = vpop.f32.mrf.mxu0
      %4121 = vdwg.mxu0
      %v4122 = vadd.f32 %v4027, %v4114
      %v4123 = vadd.f32 %v4028, %v4119
      %v4124 = vld [vmem:[#allocation3 + $0x6] sm:$0xff]
      %v4125 = vld [vmem:[#allocation3 + $0xe] sm:$0xff]
      %s4126 = scalar_lea.vmem %s6, 288
      %v4127 = vld [vmem:[%s4126] sm:$0xff]
      %v4128 = vld [vmem:[%s4126 + $0x8] sm:$0xff]
      %v4129 = vld [vmem:[%s4126 + $0x10] sm:$0xff]
      %v4130 = vld [vmem:[%s4126 + $0x18] sm:$0xff]
      %v4131 = vld [vmem:[%s4126 + $0x20] sm:$0xff]
      %v4132 = vld [vmem:[%s4126 + $0x28] sm:$0xf]
      %v4134 = vsel %vm3556, %v4124, 0
      %v4137 = vsel %vm3556, %v4125, 0
      %v4140 = vsel %vm1442, %v4132, 0
      %4142 = vmatprep.subr.mxu0 0.0
      %4143 = vmatpush1.msra.mxu0 0.0
      %4144 = vmatprep.subr.mxu0 0.0
      %4145 = vmatpush1.msra.mxu0 0.0
      %4146 = vmatprep.subr.mxu0 0.0
      %4147 = vmatpush1.msra.mxu0 0.0
      %4148 = vmatprep.subr.mxu0 0.0
      %4149 = vmatpush1.msra.mxu0 0.0
      %4150 = vmatprep.subr.mxu0 0.0
      %4151 = vmatpush1.msra.mxu0 0.0
      %4152 = vmatprep.subr.mxu0 0.0
      %4153 = vmatpush1.msra.mxu0 0.0
      %4154 = vmatprep.subr.mxu0 0.0
      %4155 = vmatpush1.msra.mxu0 0.0
      %4156 = vmatprep.subr.mxu0 0.0
      %4157 = vmatpush1.msra.mxu0 0.0
      %4158 = vmatprep.subr.mxu0 0.0
      %4159 = vmatpush1.msra.mxu0 0.0
      %4160 = vmatprep.subr.mxu0 0.0
      %4161 = vmatpush1.msra.mxu0 0.0
      %4162 = vmatprep.subr.mxu0 0.0
      %4163 = vmatpush1.msra.mxu0 %v4140
      %4164 = vmatprep.subr.mxu0 0.0
      %4165 = vmatpush1.msra.mxu0 %v4131
      %4166 = vmatprep.subr.mxu0 0.0
      %4167 = vmatpush1.msra.mxu0 %v4130
      %4168 = vmatprep.subr.mxu0 0.0
      %4169 = vmatpush1.msra.mxu0 %v4129
      %4170 = vmatprep.subr.mxu0 0.0
      %4171 = vmatpush1.msra.mxu0 %v4128
      %4172 = vmatprep.subr.mxu0 0.0
      %4173 = vmatpush1.msra.mxu0 %v4127
      %4174 = vmatprep.subr.mxu0 0.0
      %4175 = vmatpush2.msra.mxu0 0.0
      %4176 = vmatprep.subr.mxu0 0.0
      %4177 = vmatpush2.msra.mxu0 0.0
      %4178 = vmatprep.subr.mxu0 0.0
      %4179 = vmatpush2.msra.mxu0 0.0
      %4180 = vmatprep.subr.mxu0 0.0
      %4181 = vmatpush2.msra.mxu0 0.0
      %4182 = vmatprep.subr.mxu0 0.0
      %4183 = vmatpush2.msra.mxu0 0.0
      %4184 = vmatprep.subr.mxu0 0.0
      %4185 = vmatpush2.msra.mxu0 0.0
      %4186 = vmatprep.subr.mxu0 0.0
      %4187 = vmatpush2.msra.mxu0 0.0
      %4188 = vmatprep.subr.mxu0 0.0
      %4189 = vmatpush2.msra.mxu0 0.0
      %4190 = vmatprep.subr.mxu0 0.0
      %4191 = vmatpush2.msra.mxu0 0.0
      %4192 = vmatprep.subr.mxu0 0.0
      %4193 = vmatpush2.msra.mxu0 0.0
      %4194 = vmatprep.subr.mxu0 0.0
      %4195 = vmatpush2.msra.mxu0 0.0
      %4196 = vmatprep.subr.mxu0 0.0
      %4197 = vmatpush2.msra.mxu0 0.0
      %4198 = vmatprep.subr.mxu0 0.0
      %4199 = vmatpush2.msra.mxu0 0.0
      %4200 = vmatprep.subr.mxu0 0.0
      %4201 = vmatpush2.msra.mxu0 0.0
      %4202 = vmatprep.subr.mxu0 0.0
      %4203 = vmatpush2.msra.mxu0 0.0
      %4204 = vmatprep.subr.mxu0 0.0
      %4205 = vmatpush2.msra.mxu0 0.0
      %4206 = vmatprep.mubr.f32.mxu0 0.0
      %4207 = vmatmul.mubr.f32.gmra.mxu0 %v4134
      %v4208 = vpop.f32.mrf.mxu0
      %v4209 = vadd.f32 0.0, %v4208
      %v4210 = vpop.f32.mrf.mxu0
      %4211 = vmatprep.mubr.f32.mxu0 0.0
      %4212 = vmatmul.mubr.f32.gmra.mxu0 %v4137
      %v4213 = vpop.f32.mrf.mxu0
      %v4214 = vadd.f32 0.0, %v4213
      %v4215 = vpop.f32.mrf.mxu0
      %4216 = vdwg.mxu0
      %v4217 = vadd.f32 %v4122, %v4209
      %v4218 = vadd.f32 %v4123, %v4214
      %v4219 = vxor.u32 %v4217, 2147483648
      %v4220 = vxor.u32 %v4218, 2147483648
      %v4221 = vmul.f32 %v4219, 1.442695
      %v4222 = vpow.pop %v4221
      %v4223 = vmul.f32 %v4220, 1.442695
      %v4224 = vpow.pop %v4223
      %v4225 = vadd.f32 %v4222, 1.0
      %v4226 = vadd.f32 %v4224, 1.0
      %v4227 = vrcp.pop %v4225
      %v4228 = vmul.f32 1.0, %v4227
      %v4229 = vrcp.pop %v4226
      %v4230 = vmul.f32 1.0, %v4229
      %4233 = vrot.lane.b32.xlu0 %v4228, 125
      %v4234 = vpop.permute.xlu0 %4233
      %4235 = vrot.lane.b32.xlu0 %v4230, 125
      %v4236 = vpop.permute.xlu0 %4235
      %4239 = vrot.lane.b32.xlu0 %v4228, 13
      %v4240 = vpop.permute.xlu0 %4239
      %4241 = vrot.lane.b32.xlu0 %v4230, 13
      %v4242 = vpop.permute.xlu0 %4241
      %4245 = vrot.lane.b32.xlu0 %v4228, 29
      %v4246 = vpop.permute.xlu0 %4245
      %4247 = vrot.lane.b32.xlu0 %v4230, 29
      %v4248 = vpop.permute.xlu0 %4247
      %4251 = vrot.lane.b32.xlu0 %v4228, 45
      %v4252 = vpop.permute.xlu0 %4251
      %4253 = vrot.lane.b32.xlu0 %v4230, 45
      %v4254 = vpop.permute.xlu0 %4253
      %4257 = vrot.lane.b32.xlu0 %v4228, 61
      %v4258 = vpop.permute.xlu0 %4257
      %4259 = vrot.lane.b32.xlu0 %v4230, 61
      %v4260 = vpop.permute.xlu0 %4259
      %4263 = vrot.lane.b32.xlu0 %v4228, 77
      %v4264 = vpop.permute.xlu0 %4263
      %4265 = vrot.lane.b32.xlu0 %v4230, 77
      %v4266 = vpop.permute.xlu0 %4265
      %4269 = vrot.lane.b32.xlu0 %v4228, 93
      %v4270 = vpop.permute.xlu0 %4269
      %4271 = vrot.lane.b32.xlu0 %v4230, 93
      %v4272 = vpop.permute.xlu0 %4271
      %4275 = vrot.lane.b32.xlu0 %v4228, 109
      %v4276 = vpop.permute.xlu0 %4275
      %4277 = vrot.lane.b32.xlu0 %v4230, 109
      %v4278 = vpop.permute.xlu0 %4277
      %vm4281 = vcmask 130048
      %v4282 = vsel %vm4281, %v4234, %v4240
      %v4283 = vsel %vm4281, %v4236, %v4242
      %vm4284 = vcmask 261120
      %v4285 = vsel %vm4284, %v4282, %v4246
      %v4286 = vsel %vm4284, %v4283, %v4248
      %v4287 = vsel %vm538, %v4285, %v4252
      %v4288 = vsel %vm538, %v4286, %v4254
      %vm4289 = vcmask 523264
      %v4290 = vsel %vm4289, %v4287, %v4258
      %v4291 = vsel %vm4289, %v4288, %v4260
      %vm4292 = vcmask 654336
      %v4293 = vsel %vm4292, %v4290, %v4264
      %v4294 = vsel %vm4292, %v4291, %v4266
      %v4295 = vsel %vm1934, %v4293, %v4270
      %v4296 = vsel %vm1934, %v4294, %v4272
      %vm4297 = vcmask 916480
      %v4298 = vsel %vm4297, %v4295, %v4276
      %v4299 = vsel %vm4297, %v4296, %v4278
      %4300 = vst [vmem:[%s374] sm:$0xff] %v4298
      %4301 = vst [vmem:[%s374 + $0x8] sm:$0xff] %v4299
      %v4302 = vld [vmem:[%s360] sm:$0xf8]
      %v4303 = vld [vmem:[%s360 + $0x10] sm:$0xff]
      %v4304 = vld [vmem:[%s360 + $0x20] sm:$0x7]
      %v4305 = vld [vmem:[%s360 + $0x8] sm:$0xf8]
      %v4306 = vld [vmem:[%s360 + $0x18] sm:$0xff]
      %v4307 = vld [vmem:[%s360 + $0x28] sm:$0x7]
      %4311 = vrot.lane.b32.xlu0 %v4302, 125
      %v4312 = vpop.permute.xlu0 %4311
      %4313 = vrot.lane.b32.xlu0 %v4303, 125
      %v4314 = vpop.permute.xlu0 %4313
      %4315 = vrot.lane.b32.xlu0 %v4304, 125
      %v4316 = vpop.permute.xlu0 %4315
      %4320 = vrot.lane.b32.xlu0 %v4302, 119
      %v4321 = vpop.permute.xlu0 %4320
      %4322 = vrot.lane.b32.xlu0 %v4303, 119
      %v4323 = vpop.permute.xlu0 %4322
      %4324 = vrot.lane.b32.xlu0 %v4304, 119
      %v4325 = vpop.permute.xlu0 %4324
      %4329 = vrot.lane.b32.xlu0 %v4302, 113
      %v4330 = vpop.permute.xlu0 %4329
      %4331 = vrot.lane.b32.xlu0 %v4303, 113
      %v4332 = vpop.permute.xlu0 %4331
      %4333 = vrot.lane.b32.xlu0 %v4304, 113
      %v4334 = vpop.permute.xlu0 %4333
      %4338 = vrot.lane.b32.xlu0 %v4302, 107
      %v4339 = vpop.permute.xlu0 %4338
      %4340 = vrot.lane.b32.xlu0 %v4303, 107
      %v4341 = vpop.permute.xlu0 %4340
      %4342 = vrot.lane.b32.xlu0 %v4304, 107
      %v4343 = vpop.permute.xlu0 %4342
      %4347 = vrot.lane.b32.xlu0 %v4302, 101
      %v4348 = vpop.permute.xlu0 %4347
      %4349 = vrot.lane.b32.xlu0 %v4303, 101
      %v4350 = vpop.permute.xlu0 %4349
      %4351 = vrot.lane.b32.xlu0 %v4304, 101
      %v4352 = vpop.permute.xlu0 %4351
      %4359 = vrot.lane.b32.xlu0 %v4302, 95
      %v4360 = vpop.permute.xlu0 %4359
      %4361 = vrot.lane.b32.xlu0 %v4305, 95
      %v4362 = vpop.permute.xlu0 %4361
      %4363 = vrot.lane.b32.xlu0 %v4303, 95
      %v4364 = vpop.permute.xlu0 %4363
      %4365 = vrot.lane.b32.xlu0 %v4306, 95
      %v4366 = vpop.permute.xlu0 %4365
      %4367 = vrot.lane.b32.xlu0 %v4304, 95
      %v4368 = vpop.permute.xlu0 %4367
      %4369 = vrot.lane.b32.xlu0 %v4307, 95
      %v4370 = vpop.permute.xlu0 %4369
      %vm4371 = vcmask 777216
      %v4372 = vsel %vm4371, %v4360, %v4362
      %v4373 = vsel %vm4371, %v4364, %v4366
      %v4374 = vsel %vm4371, %v4368, %v4370
      %4378 = vrot.lane.b32.xlu0 %v4305, 89
      %v4379 = vpop.permute.xlu0 %4378
      %4380 = vrot.lane.b32.xlu0 %v4306, 89
      %v4381 = vpop.permute.xlu0 %4380
      %4382 = vrot.lane.b32.xlu0 %v4307, 89
      %v4383 = vpop.permute.xlu0 %4382
      %4387 = vrot.lane.b32.xlu0 %v4305, 83
      %v4388 = vpop.permute.xlu0 %4387
      %4389 = vrot.lane.b32.xlu0 %v4306, 83
      %v4390 = vpop.permute.xlu0 %4389
      %4391 = vrot.lane.b32.xlu0 %v4307, 83
      %v4392 = vpop.permute.xlu0 %4391
      %v4396 = vsel %vm4281, %v4312, %v4321
      %v4397 = vsel %vm4281, %v4314, %v4323
      %v4398 = vsel %vm4281, %v4316, %v4325
      %v4399 = vsel %vm4284, %v4396, %v4330
      %v4400 = vsel %vm4284, %v4397, %v4332
      %v4401 = vsel %vm4284, %v4398, %v4334
      %v4402 = vsel %vm538, %v4399, %v4339
      %v4403 = vsel %vm538, %v4400, %v4341
      %v4404 = vsel %vm538, %v4401, %v4343
      %v4405 = vsel %vm4289, %v4402, %v4348
      %v4406 = vsel %vm4289, %v4403, %v4350
      %v4407 = vsel %vm4289, %v4404, %v4352
      %v4408 = vsel %vm4292, %v4405, %v4372
      %v4409 = vsel %vm4292, %v4406, %v4373
      %v4410 = vsel %vm4292, %v4407, %v4374
      %v4411 = vsel %vm1934, %v4408, %v4379
      %v4412 = vsel %vm1934, %v4409, %v4381
      %v4413 = vsel %vm1934, %v4410, %v4383
      %v4414 = vsel %vm4297, %v4411, %v4388
      %v4415 = vsel %vm4297, %v4412, %v4390
      %v4416 = vsel %vm4297, %v4413, %v4392
      %p4417 = scmp.eq.s32.totalorder %s25, 0
      // Predicated region
      $region49: #{q2s_attention.1} parent=47 // pred_check
        %p4418 = pneg %p4417
      $region50: #{q2s_attention.1} parent=47 // pred_check_branch
        %4420 = sbr.rel (%p4418) target = $region52
      $region51: #{q2s_attention.1} parent=47 // pred_region
        %4421 = vst [vmem:[%s365] sm:$0xff] 0.0
        %4422 = vst [vmem:[%s365 + $0x8] sm:$0xff] 0.0
      $region52: #{q2s_attention.1} parent=47 // pred_fallthru
        _
      %v4423 = vld [vmem:[%s365] sm:$0xff]
      %v4424 = vld [vmem:[%s365 + $0x8] sm:$0xff]
      %vm4427 = vcmask 1042432
      %v4428 = vrot.slane %v4298, 5
      %v4429 = vrot.slane %v4299, 5
      %v4430 = vsel %vm4427, %v4428, %v4429
      %v4434 = vmul.f32 %v4414, %v4428
      %v4435 = vmul.f32 %v4415, %v4430
      %v4436 = vmul.f32 %v4416, %v4429
      %v4440 = vrot.slane %v4434, 3
      %v4441 = vrot.slane %v4435, 3
      %v4442 = vsel %vm944, %v4440, %v4441
      %v4443 = vrot.slane %v4436, 3
      %v4444 = vsel %vm944, %v4441, %v4443
      %v4447 = vadd.f32 %v4423, %v4442
      %v4448 = vadd.f32 %v4424, %v4444
      %4449 = vst [vmem:[%s365] sm:$0xff] %v4447
      %4450 = vst [vmem:[%s365 + $0x8] sm:$0xff] %v4448
      %p4451 = scmp.eq.s32.totalorder %s25, 2
      // Predicated region
      $region53: #{q2s_attention.1} parent=47 // pred_check
        %p4452 = pneg %p4451
      $region54: #{q2s_attention.1} parent=47 // pred_check_branch
        %4454 = sbr.rel (%p4452) target = $region56
      $region55: #{q2s_attention.1} parent=47 // pred_region
        %v4455 = vld [vmem:[%s365] sm:$0xff]
        %v4456 = vld [vmem:[%s365 + $0x8] sm:$0xff]
        %v4457 = vmul.f32 %v4455, 0.33333334
        %v4458 = vmul.f32 %v4456, 0.33333334
        %4459 = vst [vmem:[%s365] sm:$0xff] %v4457
        %4460 = vst [vmem:[%s365 + $0x8] sm:$0xff] %v4458
      $region56: #{q2s_attention.1} parent=47 // pred_fallthru
        _
      %p4461 = scmp.lt.s32.totalorder %s24, 1
      %s4462 = scalar_select %p4461, %s24, 1
      %s4463 = smul.addr %s4462, 2
      %s4464 = smul.addr %s4463, 8
      %s4465 = scalar_lea.vmem %s7, %s4464
      %p4466 = scmp.lt.s32.totalorder %s25, 2
      %s4467 = scalar_select %p4466, %s25, 2
      %p4468 = scmp.lt.s32.totalorder %s24, 1
      %s4469 = scalar_select %p4468, %s24, 1
      %s4470 = smul.addr %s4469, 2
      %s4471 = smul.addr %s4467, 4
      %s4472 = sadd.s32 %s4470, %s4471
      %s4473 = smul.addr %s4472, 8
      %s4474 = scalar_lea.vmem %s8, %s4473
      // Predicated region
      $region57: #{q2s_attention.1} parent=47 // pred_check
        %p4475 = pneg %p209
      $region58: #{q2s_attention.1} parent=47 // pred_check_branch
        %4477 = sbr.rel (%p4475) target = $region60
      $region59: #{q2s_attention.1} parent=47 // pred_region
        _
      $region60: #{q2s_attention.1} parent=47 // pred_fallthru
        _
      // Predicated region
      $region61: #{q2s_attention.1} parent=47 // pred_check
        %p4478 = pneg %p237
      $region62: #{q2s_attention.1} parent=47 // pred_check_branch
        %4480 = sbr.rel (%p4478) target = $region64
      $region63: #{q2s_attention.1} parent=47 // pred_region
        _
      $region64: #{q2s_attention.1} parent=47 // pred_fallthru
        _
    $region48: #{q2s_attention.1} parent=5 // pred_fallthru
      _
    %p4481 = scmp.le.s32.totalorder 2, %s15
    // Predicated region
    $region65: #{q2s_attention.1} parent=5 // pred_check
      %p4482 = pneg %p4481
    $region66: #{q2s_attention.1} parent=5 // pred_check_branch
      %4484 = sbr.rel (%p4482) target = $region68
    $region67: #{q2s_attention.1} parent=5 // pred_region
      %s4485 = ssub.s32 %s15, 2
      // Predicated region
      $region69: #{q2s_attention.1} parent=67 // pred_check
        %p4486 = pneg %p215
      $region70: #{q2s_attention.1} parent=67 // pred_check_branch
        %4488 = sbr.rel (%p4486) target = $region72
      $region71: #{q2s_attention.1} parent=67 // pred_region
        %p4489 = scmp.lt.s32.totalorder %s26, 1
        %s4490 = scalar_select %p4489, %s26, 1
        %s4491 = smul.addr %s4490, 2
        %s4492 = smul.addr %s4491, 8
        %s4493 = scalar_lea.vmem %s7, %s4492
      $region72: #{q2s_attention.1} parent=67 // pred_fallthru
        _
      // Predicated region
      $region73: #{q2s_attention.1} parent=67 // pred_check
        %p4494 = pneg %p243
      $region74: #{q2s_attention.1} parent=67 // pred_check_branch
        %4496 = sbr.rel (%p4494) target = $region76
      $region75: #{q2s_attention.1} parent=67 // pred_region
        %p4497 = scmp.lt.s32.totalorder %s27, 2
        %s4498 = scalar_select %p4497, %s27, 2
        %p4499 = scmp.lt.s32.totalorder %s26, 1
        %s4500 = scalar_select %p4499, %s26, 1
        %s4501 = smul.addr %s4500, 2
        %s4502 = smul.addr %s4498, 4
        %s4503 = sadd.s32 %s4501, %s4502
        %s4504 = smul.addr %s4503, 8
        %s4505 = scalar_lea.vmem %s8, %s4504
      $region76: #{q2s_attention.1} parent=67 // pred_fallthru
        _
    $region68: #{q2s_attention.1} parent=5 // pred_fallthru
      _
  $region6: #{q2s_attention.1} parent=0 // loop_footer
    %s19 = sadd.s32 1, %s15
  $region7: #{q2s_attention.1} parent=0 // loop_footer_branch
    %14 = sbr.rel target = $region3
  $region8: #{q2s_attention.1} parent=0 // loop_exit
    _

</llo_original>
